<compile_context>
chip_gen: v5e
topology: v5e:2x2
jax: 0.10.0
libtpu: 0.0.40
codegen_flags: <defaults>
</compile_context>

<pallas_src>
import functools

import jax
import jax.numpy as jnp
from jax import lax
from jax.experimental import pallas as pl
from jax.experimental.pallas import tpu as pltpu


def clam_mb_kernel(h_ref, wfc_ref, bfc_ref, wab_ref, bab_ref, wc_ref, bc_ref,
                   araw_ref, m_ref, l_ref, acc_ref,
                   *, n_patches, tile_n, tiles_per_split, d_dim):
    j = pl.program_id(1)                                  # tile index within this split
    g = pl.program_id(0) * tiles_per_split + j            # global tile index

    @pl.when(j == 0)
    def _init():
        m_ref[...] = jnp.full(m_ref.shape, -jnp.inf, m_ref.dtype)
        l_ref[...] = jnp.zeros_like(l_ref)
        acc_ref[...] = jnp.zeros_like(acc_ref)

    # ---- per-patch feature path: Linear(L,H) + ReLU (bf16 operands, f32 acc) ----
    h1 = jnp.dot(h_ref[...], wfc_ref[...],
                 preferred_element_type=jnp.float32) + bfc_ref[...]       # [tile_n, H] f32
    h1 = jnp.maximum(h1, 0.0)

    # Mask padded rows of ragged / fully-out-of-range tiles (boundary reads are
    # unspecified); zeroing h1 keeps NaN/Inf out of the weighted sum below.
    row_valid = (g * tile_n
                 + lax.broadcasted_iota(jnp.int32, (tile_n, 1), 0)) < n_patches
    h1 = jnp.where(row_valid, h1, 0.0)
    h1_bf = h1.astype(jnp.bfloat16)

    # ---- gated attention: fused [Wa | Wb] matmul, tanh/sigmoid gate in f32 ----
    ab = jnp.dot(h1_bf, wab_ref[...],
                 preferred_element_type=jnp.float32) + bab_ref[...]       # [tile_n, 2D]
    gated = jnp.tanh(ab[:, :d_dim]) * jax.nn.sigmoid(ab[:, d_dim:])       # [tile_n, D]

    # attention_c, produced directly in the lane-dense [C, tile_n] layout
    # (contract the D lanes of both operands).  Kept f32: negligible FLOPs and
    # the softmax is sensitive to score precision.
    a_cn = lax.dot_general(wc_ref[...], gated, (((1,), (1,)), ((), ())),
                           preferred_element_type=jnp.float32) + bc_ref[...]
    araw_ref[...] = a_cn                                                  # raw scores [C, tile_n]

    # ---- online softmax over patches + weighted feature accumulation ----
    col_valid = (g * tile_n
                 + lax.broadcasted_iota(jnp.int32, (1, tile_n), 1)) < n_patches
    s = jnp.where(col_valid, a_cn, -jnp.inf)
    m_old = m_ref[0]                                                      # [C, 1]
    m_new = jnp.maximum(m_old, jnp.max(s, axis=1, keepdims=True))
    # Fully-padded tile (possible for trailing blocks of a split): avoid inf-inf=NaN.
    m_safe = jnp.where(m_new == -jnp.inf, 0.0, m_new)
    alpha = jnp.exp(m_old - m_safe)
    p = jnp.exp(s - m_safe)                                               # [C, tile_n]
    l_ref[0] = alpha * l_ref[0] + jnp.sum(p, axis=1, keepdims=True)
    # TODO(synk): p/h1 could be cast to bf16 here (MXU f32 is multi-pass), but
    # this contraction has only C=2 rows; kept f32 to stay within tolerance.
    acc_ref[0] = alpha * acc_ref[0] + jnp.dot(
        p, h1, preferred_element_type=jnp.float32)                        # [C, H]
    m_ref[0] = m_new


@functools.partial(jax.jit, static_argnames=("tile_n", "num_splits"))
def clam_mb_forward(h, params, tile_n=1024, num_splits=2):
    N, L = h.shape
    H = params["wfc"].shape[1]
    D = params["wa"].shape[1]
    C = params["wc"].shape[1]

    # Stream h in bf16.  If the caller already provides bf16 features this is a
    # no-op; otherwise it is a one-time cast before the kernel.
    h = h.astype(jnp.bfloat16)

    num_valid_blocks = (N + tile_n - 1) // tile_n         # >= 1
    tiles_per_split = (num_valid_blocks + num_splits - 1) // num_splits
    total_blocks = num_splits * tiles_per_split
    n_pad = total_blocks * tile_n
    last_block = num_valid_blocks - 1

    # One-time, tiny dtype/layout preps (plain XLA ops outside the kernel).
    wfc = params["wfc"].astype(jnp.bfloat16)                              # [L, H]
    wab = jnp.concatenate([params["wa"], params["wb"]],
                          axis=1).astype(jnp.bfloat16)                    # [H, 2D]
    bab = jnp.concatenate([params["ba"], params["bb"]], axis=1)           # [1, 2D]
    wc_cd = params["wc"].T                                                # [C, D]
    bc_c1 = params["bc"].T                                                # [C, 1]

    def h_map(c, j):
        # Clamp to the last valid block: fully out-of-range tiles re-read the
        # last block but every row/column is masked inside the kernel.
        return (jnp.minimum(c * tiles_per_split + j, last_block), 0)

    def const_map(c, j):
        return (0, 0)

    def araw_map(c, j):
        return (0, c * tiles_per_split + j)

    def part_map(c, j):
        return (c, 0, 0)

    kernel = functools.partial(clam_mb_kernel, n_patches=N, tile_n=tile_n,
                               tiles_per_split=tiles_per_split, d_dim=D)

    araw_pad, m_part, l_part, acc_part = pl.pallas_call(
        kernel,
        grid=(num_splits, tiles_per_split),
        in_specs=[
            pl.BlockSpec((tile_n, L), h_map),          # streamed h tiles (bf16)
            pl.BlockSpec((L, H), const_map),           # weights: fetched once,
            pl.BlockSpec((1, H), const_map),           # stay VMEM-resident
            pl.BlockSpec((H, 2 * D), const_map),
            pl.BlockSpec((1, 2 * D), const_map),
            pl.BlockSpec((C, D), const_map),
            pl.BlockSpec((C, 1), const_map),
        ],
        out_specs=[
            pl.BlockSpec((C, tile_n), araw_map),       # A_raw, lane-dense [C, n_pad]
            pl.BlockSpec((1, C, 1), part_map),         # per-split running max m
            pl.BlockSpec((1, C, 1), part_map),         # per-split running sum l
            pl.BlockSpec((1, C, H), part_map),         # per-split weighted-feature acc
        ],
        out_shape=[
            jax.ShapeDtypeStruct((C, n_pad), jnp.float32),
            jax.ShapeDtypeStruct((num_splits, C, 1), jnp.float32),
            jax.ShapeDtypeStruct((num_splits, C, 1), jnp.float32),
            jax.ShapeDtypeStruct((num_splits, C, H), jnp.float32),
        ],
        compiler_params=pltpu.CompilerParams(
            # leading split axis shards across TensorCores on v7x; the patch
            # axis is the softmax reduction -> arbitrary.
            dimension_semantics=("parallel", "arbitrary")),
    )(h, wfc, params["bfc"], wab, bab, wc_cd, bc_c1)

    # ---- tiny cross-split online-softmax merge + bag classifiers (plain XLA) ----
    m = jnp.max(m_part, axis=0)                        # [C, 1]
    w = jnp.exp(m_part - m)                            # [S, C, 1]; empty split -> 0
    l = jnp.sum(w * l_part, axis=0)                    # [C, 1]
    acc = jnp.sum(w * acc_part, axis=0)                # [C, H]
    M = acc / l                                        # [C, H]
    logits = (jnp.sum(M * params["wcls"], axis=1, keepdims=True)
              + params["bcls"]).T                      # [1, C]
    Y_prob = jax.nn.softmax(logits, axis=1)
    A_raw = araw_pad[:, :N]                            # [C, N]  (drop tile padding)
    Y_hat = jnp.argmax(logits, axis=1, keepdims=True)  # [1, 1]
    return logits, Y_prob, Y_hat, A_raw, {}


def xavier_normal(key, out_dim, in_dim):
    std = (2.0 / (in_dim + out_dim)) ** 0.5
    # PyTorch weight is [out, in]; store the transpose [in, out] so x @ W == x @ W_pt.T
    return (std * jax.random.normal(key, (out_dim, in_dim), jnp.float32)).T


def make_params(key, L, H, D, C):
    ks = jax.random.split(key, 5)
    return {
        # fc: Linear(L, H)
        "wfc": xavier_normal(ks[0], H, L), "bfc": jnp.zeros((1, H), jnp.float32),
        # attention_a: Linear(H, D)
        "wa": xavier_normal(ks[1], D, H), "ba": jnp.zeros((1, D), jnp.float32),
        # attention_b: Linear(H, D)
        "wb": xavier_normal(ks[2], D, H), "bb": jnp.zeros((1, D), jnp.float32),
        # attention_c: Linear(D, C)
        "wc": xavier_normal(ks[3], C, D), "bc": jnp.zeros((1, C), jnp.float32),
        # C bag classifiers Linear(H, 1), stacked to [C, H]
        "wcls": jnp.stack([xavier_normal(k, 1, H)[:, 0]
                           for k in jax.random.split(ks[4], C)], axis=0),
        "bcls": jnp.zeros((C, 1), jnp.float32),
    }


def reference_forward(h, p):
    # Pure-JAX reference with the same numerics convention as the kernel:
    # bf16 operands / f32 accumulation for the two large matmuls, f32 elsewhere.
    bf = jnp.bfloat16
    h1 = jnp.maximum(jnp.dot(h.astype(bf), p["wfc"].astype(bf),
                             preferred_element_type=jnp.float32) + p["bfc"], 0.0)
    a = jnp.tanh(jnp.dot(h1.astype(bf), p["wa"].astype(bf),
                         preferred_element_type=jnp.float32) + p["ba"])
    b = jax.nn.sigmoid(jnp.dot(h1.astype(bf), p["wb"].astype(bf),
                               preferred_element_type=jnp.float32) + p["bb"])
    A = (jnp.dot(a * b, p["wc"], preferred_element_type=jnp.float32) + p["bc"]).T  # [C, N]
    A_raw = A
    A_sm = jax.nn.softmax(A, axis=1)
    M = jnp.dot(A_sm, h1, preferred_element_type=jnp.float32)                      # [C, H]
    logits = (jnp.sum(M * p["wcls"], axis=1, keepdims=True) + p["bcls"]).T          # [1, C]
    Y_prob = jax.nn.softmax(logits, axis=1)
    Y_hat = jnp.argmax(logits, axis=1, keepdims=True)
    return logits, Y_prob, Y_hat, A_raw


if __name__ == "__main__":
    # 'tiny' size_arg from CLAM_MB.size_dict: [L, H, D] = [192, 128, 128].
    # N chosen so the grid exercises: full tiles, a ragged last tile, and a
    # fully-padded trailing tile on the second split (5 valid blocks of 512,
    # 2 splits x 3 tiles).
    N, L, H, D, C = 2500, 192, 128, 128, 2
    TILE_N = 512

    key = jax.random.PRNGKey(0)
    k_h, k_p = jax.random.split(key)
    h = jax.random.normal(k_h, (N, L), jnp.float32)
    params = make_params(k_p, L, H, D, C)

    logits, Y_prob, Y_hat, A_raw, results = clam_mb_forward(
        h, params, tile_n=TILE_N, num_splits=2)
    jax.block_until_ready((logits, Y_prob, Y_hat, A_raw))

    r_logits, r_prob, r_hat, r_araw = reference_forward(h, params)
    assert logits.shape == (1, C) and Y_prob.shape == (1, C) and A_raw.shape == (C, N)
    assert bool(jnp.all(jnp.isfinite(logits))) and bool(jnp.all(jnp.isfinite(A_raw)))
    assert jnp.allclose(logits, r_logits, atol=2e-3, rtol=2e-3)
    assert jnp.allclose(Y_prob, r_prob, atol=2e-3, rtol=2e-3)
    assert jnp.allclose(A_raw, r_araw, atol=2e-3, rtol=2e-3)
    assert jnp.array_equal(Y_hat, r_hat)

    print("KERNEL_OK")
</pallas_src>

<mosaic_0001>
module attributes {stable_mosaic.version = 11 : i64} {
  func.func @clam_mb_kernel(%arg0: i32, %arg1: i32, %arg2: memref<512x192xbf16, #tpu.memory_space<vmem>>, %arg3: memref<192x128xbf16, #tpu.memory_space<vmem>>, %arg4: memref<1x128xf32, #tpu.memory_space<vmem>>, %arg5: memref<128x256xbf16, #tpu.memory_space<vmem>>, %arg6: memref<1x256xf32, #tpu.memory_space<vmem>>, %arg7: memref<2x128xf32, #tpu.memory_space<vmem>>, %arg8: memref<2x1xf32, #tpu.memory_space<vmem>>, %arg9: memref<2x512xf32, #tpu.memory_space<vmem>>, %arg10: memref<1x2x1xf32, #tpu.memory_space<vmem>>, %arg11: memref<1x2x1xf32, #tpu.memory_space<vmem>>, %arg12: memref<1x2x128xf32, #tpu.memory_space<vmem>>) attributes {dimension_semantics = [#tpu.dimension_semantics<parallel>, #tpu.dimension_semantics<arbitrary>], iteration_bounds = array<i64: 2, 3>, scalar_prefetch = 0 : i64, scratch_operands = 0 : i64, tpu.core_type = #tpu.core_type<tc>, window_params = [{transform_indices = @transform_0, window_bounds = array<i64: 512, 192>}, {pipeline_mode = #tpu.pipeline_mode<synchronous>, transform_indices = @transform_1, window_bounds = array<i64: 192, 128>}, {pipeline_mode = #tpu.pipeline_mode<synchronous>, transform_indices = @transform_2, window_bounds = array<i64: 1, 128>}, {pipeline_mode = #tpu.pipeline_mode<synchronous>, transform_indices = @transform_3, window_bounds = array<i64: 128, 256>}, {pipeline_mode = #tpu.pipeline_mode<synchronous>, transform_indices = @transform_4, window_bounds = array<i64: 1, 256>}, {pipeline_mode = #tpu.pipeline_mode<synchronous>, transform_indices = @transform_5, window_bounds = array<i64: 2, 128>}, {pipeline_mode = #tpu.pipeline_mode<synchronous>, transform_indices = @transform_6, window_bounds = array<i64: 2, 1>}, {transform_indices = @transform_7, window_bounds = array<i64: 2, 512>}, {transform_indices = @transform_8, window_bounds = array<i64: 1, 2, 1>}, {transform_indices = @transform_9, window_bounds = array<i64: 1, 2, 1>}, {transform_indices = @transform_10, window_bounds = array<i64: 1, 2, 128>}]} {
    %c3_i32 = arith.constant 3 : i32
    %0 = arith.muli %arg0, %c3_i32 : i32
    %1 = arith.addi %0, %arg1 : i32
    %c0_i32 = arith.constant 0 : i32
    %2 = arith.cmpi eq, %arg1, %c0_i32 : i32
    %3 = arith.extui %2 : i1 to i32
    %c0_i32_0 = arith.constant 0 : i32
    %4 = arith.cmpi ne, %3, %c0_i32_0 : i32
    scf.if %4 {
      %cst_47 = arith.constant 0xFF800000 : f32
      %89 = vector.broadcast %cst_47 : f32 to vector<1x2x1xf32>
      %c0_48 = arith.constant 0 : index
      %c0_49 = arith.constant 0 : index
      %c0_50 = arith.constant 0 : index
      %90 = vector.load %arg10[%c0_48, %c0_49, %c0_50] : memref<1x2x1xf32, #tpu.memory_space<vmem>>, vector<1x2x1xf32>
      tpu.vector_store %arg10[%c0_48, %c0_49, %c0_50], %89 {strides = array<i32>} : memref<1x2x1xf32, #tpu.memory_space<vmem>>, vector<1x2x1xf32>,
      %cst_51 = arith.constant 0.000000e+00 : f32
      %91 = vector.broadcast %cst_51 : f32 to vector<1x2x1xf32>
      %c0_52 = arith.constant 0 : index
      %c0_53 = arith.constant 0 : index
      %c0_54 = arith.constant 0 : index
      %92 = vector.load %arg11[%c0_52, %c0_53, %c0_54] : memref<1x2x1xf32, #tpu.memory_space<vmem>>, vector<1x2x1xf32>
      tpu.vector_store %arg11[%c0_52, %c0_53, %c0_54], %91 {strides = array<i32>} : memref<1x2x1xf32, #tpu.memory_space<vmem>>, vector<1x2x1xf32>,
      %cst_55 = arith.constant 0.000000e+00 : f32
      %93 = vector.broadcast %cst_55 : f32 to vector<1x2x128xf32>
      %c0_56 = arith.constant 0 : index
      %c0_57 = arith.constant 0 : index
      %c0_58 = arith.constant 0 : index
      %94 = vector.load %arg12[%c0_56, %c0_57, %c0_58] : memref<1x2x128xf32, #tpu.memory_space<vmem>>, vector<1x2x128xf32>
      tpu.vector_store %arg12[%c0_56, %c0_57, %c0_58], %93 {strides = array<i32>} : memref<1x2x128xf32, #tpu.memory_space<vmem>>, vector<1x2x128xf32>,
    } else {
    }
    %c0 = arith.constant 0 : index
    %c0_1 = arith.constant 0 : index
    %5 = vector.load %arg2[%c0, %c0_1] : memref<512x192xbf16, #tpu.memory_space<vmem>>, vector<512x192xbf16>
    %c0_2 = arith.constant 0 : index
    %c0_3 = arith.constant 0 : index
    %6 = vector.load %arg3[%c0_2, %c0_3] : memref<192x128xbf16, #tpu.memory_space<vmem>>, vector<192x128xbf16>
    %cst = arith.constant dense<0.000000e+00> : vector<512x128xf32>
    %7 = tpu.matmul %5, %6, %cst {dimension_numbers = #tpu.dot_dimension_numbers<[1], [0], [0], [1], [0, 0, 1, 1], [], []>} : vector<512x192xbf16>, vector<192x128xbf16>, vector<512x128xf32> -> vector<512x128xf32>
    %c0_4 = arith.constant 0 : index
    %c0_5 = arith.constant 0 : index
    %8 = vector.load %arg4[%c0_4, %c0_5] : memref<1x128xf32, #tpu.memory_space<vmem>>, vector<1x128xf32>
    %9 = vector.broadcast %8 : vector<1x128xf32> to vector<512x128xf32>
    %10 = arith.addf %7, %9 : vector<512x128xf32>
    %cst_6 = arith.constant 0.000000e+00 : f32
    %11 = vector.broadcast %cst_6 : f32 to vector<512x128xf32>
    %12 = arith.maximumf %10, %11 : vector<512x128xf32>
    %c512_i32 = arith.constant 512 : i32
    %13 = arith.muli %1, %c512_i32 : i32
    %14 = tpu.iota {dimensions = array<i32: 0>} : vector<512x1xi32>
    %15 = vector.broadcast %13 : i32 to vector<512x1xi32>
    %16 = arith.addi %15, %14 : vector<512x1xi32>
    %c2500_i32 = arith.constant 2500 : i32
    %17 = vector.broadcast %c2500_i32 : i32 to vector<512x1xi32>
    %18 = arith.cmpi slt, %16, %17 : vector<512x1xi32>
    %cst_7 = arith.constant 0.000000e+00 : f32
    %19 = vector.shape_cast %18 : vector<512x1xi1> to vector<512x1xi1>
    %20 = vector.broadcast %19 : vector<512x1xi1> to vector<512x128xi1>
    %21 = vector.broadcast %cst_7 : f32 to vector<512x128xf32>
    %22 = arith.select %20, %12, %21 : vector<512x128xi1>, vector<512x128xf32>
    %23 = arith.truncf %22 : vector<512x128xf32> to vector<512x128xbf16>
    %c0_8 = arith.constant 0 : index
    %c0_9 = arith.constant 0 : index
    %24 = vector.load %arg5[%c0_8, %c0_9] : memref<128x256xbf16, #tpu.memory_space<vmem>>, vector<128x256xbf16>
    %cst_10 = arith.constant dense<0.000000e+00> : vector<512x256xf32>
    %25 = tpu.matmul %23, %24, %cst_10 {dimension_numbers = #tpu.dot_dimension_numbers<[1], [0], [0], [1], [0, 0, 1, 1], [], []>} : vector<512x128xbf16>, vector<128x256xbf16>, vector<512x256xf32> -> vector<512x256xf32>
    %c0_11 = arith.constant 0 : index
    %c0_12 = arith.constant 0 : index
    %26 = vector.load %arg6[%c0_11, %c0_12] : memref<1x256xf32, #tpu.memory_space<vmem>>, vector<1x256xf32>
    %27 = vector.broadcast %26 : vector<1x256xf32> to vector<512x256xf32>
    %28 = arith.addf %25, %27 : vector<512x256xf32>
    %29 = vector.extract_strided_slice %28 {offsets = [0, 0], sizes = [512, 128], strides = [1, 1]} : vector<512x256xf32> to vector<512x128xf32>
    %30 = math.tanh %29 : vector<512x128xf32>
    %31 = vector.extract_strided_slice %28 {offsets = [0, 128], sizes = [512, 128], strides = [1, 1]} : vector<512x256xf32> to vector<512x128xf32>
    %32 = arith.negf %31 : vector<512x128xf32>
    %33 = math.exp %32 : vector<512x128xf32>
    %cst_13 = arith.constant 1.000000e+00 : f32
    %34 = vector.broadcast %cst_13 : f32 to vector<512x128xf32>
    %35 = arith.addf %34, %33 : vector<512x128xf32>
    %36 = arith.divf %34, %35 : vector<512x128xf32>
    %37 = arith.mulf %30, %36 : vector<512x128xf32>
    %c0_14 = arith.constant 0 : index
    %c0_15 = arith.constant 0 : index
    %38 = vector.load %arg7[%c0_14, %c0_15] : memref<2x128xf32, #tpu.memory_space<vmem>>, vector<2x128xf32>
    %cst_16 = arith.constant dense<0.000000e+00> : vector<2x512xf32>
    %39 = tpu.matmul %38, %37, %cst_16 {dimension_numbers = #tpu.dot_dimension_numbers<[1], [1], [0], [0], [0, 0, 1, 0], [], []>} : vector<2x128xf32>, vector<512x128xf32>, vector<2x512xf32> -> vector<2x512xf32>
    %c0_17 = arith.constant 0 : index
    %c0_18 = arith.constant 0 : index
    %40 = vector.load %arg8[%c0_17, %c0_18] : memref<2x1xf32, #tpu.memory_space<vmem>>, vector<2x1xf32>
    %41 = vector.broadcast %40 : vector<2x1xf32> to vector<2x512xf32>
    %42 = arith.addf %39, %41 : vector<2x512xf32>
    %c0_19 = arith.constant 0 : index
    %c0_20 = arith.constant 0 : index
    %43 = vector.load %arg9[%c0_19, %c0_20] : memref<2x512xf32, #tpu.memory_space<vmem>>, vector<2x512xf32>
    tpu.vector_store %arg9[%c0_19, %c0_20], %42 {strides = array<i32>} : memref<2x512xf32, #tpu.memory_space<vmem>>, vector<2x512xf32>,
    %c512_i32_21 = arith.constant 512 : i32
    %44 = arith.muli %1, %c512_i32_21 : i32
    %45 = tpu.iota {dimensions = array<i32: 1>} : vector<1x512xi32>
    %46 = vector.broadcast %44 : i32 to vector<1x512xi32>
    %47 = arith.addi %46, %45 : vector<1x512xi32>
    %c2500_i32_22 = arith.constant 2500 : i32
    %48 = vector.broadcast %c2500_i32_22 : i32 to vector<1x512xi32>
    %49 = arith.cmpi slt, %47, %48 : vector<1x512xi32>
    %cst_23 = arith.constant 0xFF800000 : f32
    %50 = vector.shape_cast %49 : vector<1x512xi1> to vector<1x512xi1>
    %51 = vector.broadcast %50 : vector<1x512xi1> to vector<2x512xi1>
    %52 = vector.broadcast %cst_23 : f32 to vector<2x512xf32>
    %53 = arith.select %51, %42, %52 : vector<2x512xi1>, vector<2x512xf32>
    %c0_24 = arith.constant 0 : index
    %c0_25 = arith.constant 0 : index
    %c0_26 = arith.constant 0 : index
    %54 = vector.load %arg10[%c0_24, %c0_25, %c0_26] : memref<1x2x1xf32, #tpu.memory_space<vmem>>, vector<1x2x1xf32>
    %55 = vector.shape_cast %54 : vector<1x2x1xf32> to vector<2x1xf32>
    %cst_27 = arith.constant dense<0xFF800000> : vector<2xf32>
    %56 = vector.multi_reduction <maximumf>, %53, %cst_27 [1] : vector<2x512xf32> to vector<2xf32>
    %57 = vector.shape_cast %56 : vector<2xf32> to vector<2x1xf32>
    %58 = arith.maximumf %55, %57 : vector<2x1xf32>
    %cst_28 = arith.constant 0xFF800000 : f32
    %59 = vector.broadcast %cst_28 : f32 to vector<2x1xf32>
    %60 = arith.cmpf oeq, %58, %59 : vector<2x1xf32>
    %cst_29 = arith.constant 0.000000e+00 : f32
    %61 = vector.broadcast %cst_29 : f32 to vector<2x1xf32>
    %62 = arith.select %60, %61, %58 : vector<2x1xi1>, vector<2x1xf32>
    %63 = arith.subf %55, %62 : vector<2x1xf32>
    %64 = math.exp %63 : vector<2x1xf32>
    %65 = vector.broadcast %62 : vector<2x1xf32> to vector<2x512xf32>
    %66 = arith.subf %53, %65 : vector<2x512xf32>
    %67 = math.exp %66 : vector<2x512xf32>
    %c0_30 = arith.constant 0 : index
    %c0_31 = arith.constant 0 : index
    %c0_32 = arith.constant 0 : index
    %68 = vector.load %arg11[%c0_30, %c0_31, %c0_32] : memref<1x2x1xf32, #tpu.memory_space<vmem>>, vector<1x2x1xf32>
    %69 = vector.shape_cast %68 : vector<1x2x1xf32> to vector<2x1xf32>
    %70 = arith.mulf %64, %69 : vector<2x1xf32>
    %cst_33 = arith.constant dense<0.000000e+00> : vector<2xf32>
    %71 = vector.multi_reduction <add>, %67, %cst_33 [1] : vector<2x512xf32> to vector<2xf32>
    %72 = vector.shape_cast %71 : vector<2xf32> to vector<2x1xf32>
    %73 = arith.addf %70, %72 : vector<2x1xf32>
    %c0_34 = arith.constant 0 : index
    %c0_35 = arith.constant 0 : index
    %c0_36 = arith.constant 0 : index
    %74 = vector.load %arg11[%c0_34, %c0_35, %c0_36] : memref<1x2x1xf32, #tpu.memory_space<vmem>>, vector<1x2x1xf32>
    %75 = vector.shape_cast %74 : vector<1x2x1xf32> to vector<2x1xf32>
    %76 = vector.shape_cast %73 : vector<2x1xf32> to vector<1x2x1xf32>
    tpu.vector_store %arg11[%c0_34, %c0_35, %c0_36], %76 {strides = array<i32>} : memref<1x2x1xf32, #tpu.memory_space<vmem>>, vector<1x2x1xf32>,
    %c0_37 = arith.constant 0 : index
    %c0_38 = arith.constant 0 : index
    %c0_39 = arith.constant 0 : index
    %77 = vector.load %arg12[%c0_37, %c0_38, %c0_39] : memref<1x2x128xf32, #tpu.memory_space<vmem>>, vector<1x2x128xf32>
    %78 = vector.shape_cast %77 : vector<1x2x128xf32> to vector<2x128xf32>
    %79 = vector.broadcast %64 : vector<2x1xf32> to vector<2x128xf32>
    %80 = arith.mulf %79, %78 : vector<2x128xf32>
    %cst_40 = arith.constant dense<0.000000e+00> : vector<2x128xf32>
    %81 = tpu.matmul %67, %22, %cst_40 {dimension_numbers = #tpu.dot_dimension_numbers<[1], [0], [0], [1], [0, 0, 1, 1], [], []>} : vector<2x512xf32>, vector<512x128xf32>, vector<2x128xf32> -> vector<2x128xf32>
    %82 = arith.addf %80, %81 : vector<2x128xf32>
    %c0_41 = arith.constant 0 : index
    %c0_42 = arith.constant 0 : index
    %c0_43 = arith.constant 0 : index
    %83 = vector.load %arg12[%c0_41, %c0_42, %c0_43] : memref<1x2x128xf32, #tpu.memory_space<vmem>>, vector<1x2x128xf32>
    %84 = vector.shape_cast %83 : vector<1x2x128xf32> to vector<2x128xf32>
    %85 = vector.shape_cast %82 : vector<2x128xf32> to vector<1x2x128xf32>
    tpu.vector_store %arg12[%c0_41, %c0_42, %c0_43], %85 {strides = array<i32>} : memref<1x2x128xf32, #tpu.memory_space<vmem>>, vector<1x2x128xf32>,
    %c0_44 = arith.constant 0 : index
    %c0_45 = arith.constant 0 : index
    %c0_46 = arith.constant 0 : index
    %86 = vector.load %arg10[%c0_44, %c0_45, %c0_46] : memref<1x2x1xf32, #tpu.memory_space<vmem>>, vector<1x2x1xf32>
    %87 = vector.shape_cast %86 : vector<1x2x1xf32> to vector<2x1xf32>
    %88 = vector.shape_cast %58 : vector<2x1xf32> to vector<1x2x1xf32>
    tpu.vector_store %arg10[%c0_44, %c0_45, %c0_46], %88 {strides = array<i32>} : memref<1x2x1xf32, #tpu.memory_space<vmem>>, vector<1x2x1xf32>,
    return
  }
  func.func @transform_0(%arg0: i32, %arg1: i32) -> (i32, i32) {
    %c3_i32 = arith.constant 3 : i32
    %0 = arith.muli %arg0, %c3_i32 : i32
    %1 = arith.addi %0, %arg1 : i32
    %c4_i32 = arith.constant 4 : i32
    %2 = arith.minsi %1, %c4_i32 : i32
    %c0_i32 = arith.constant 0 : i32
    %c0_i32_0 = arith.constant 0 : i32
    return %2, %c0_i32 : i32, i32
  }
  func.func @transform_1(%arg0: i32, %arg1: i32) -> (i32, i32) {
    %c0_i32 = arith.constant 0 : i32
    %c0_i32_0 = arith.constant 0 : i32
    %c0_i32_1 = arith.constant 0 : i32
    return %c0_i32, %c0_i32_0 : i32, i32
  }
  func.func @transform_2(%arg0: i32, %arg1: i32) -> (i32, i32) {
    %c0_i32 = arith.constant 0 : i32
    %c0_i32_0 = arith.constant 0 : i32
    %c0_i32_1 = arith.constant 0 : i32
    return %c0_i32, %c0_i32_0 : i32, i32
  }
  func.func @transform_3(%arg0: i32, %arg1: i32) -> (i32, i32) {
    %c0_i32 = arith.constant 0 : i32
    %c0_i32_0 = arith.constant 0 : i32
    %c0_i32_1 = arith.constant 0 : i32
    return %c0_i32, %c0_i32_0 : i32, i32
  }
  func.func @transform_4(%arg0: i32, %arg1: i32) -> (i32, i32) {
    %c0_i32 = arith.constant 0 : i32
    %c0_i32_0 = arith.constant 0 : i32
    %c0_i32_1 = arith.constant 0 : i32
    return %c0_i32, %c0_i32_0 : i32, i32
  }
  func.func @transform_5(%arg0: i32, %arg1: i32) -> (i32, i32) {
    %c0_i32 = arith.constant 0 : i32
    %c0_i32_0 = arith.constant 0 : i32
    %c0_i32_1 = arith.constant 0 : i32
    return %c0_i32, %c0_i32_0 : i32, i32
  }
  func.func @transform_6(%arg0: i32, %arg1: i32) -> (i32, i32) {
    %c0_i32 = arith.constant 0 : i32
    %c0_i32_0 = arith.constant 0 : i32
    %c0_i32_1 = arith.constant 0 : i32
    return %c0_i32, %c0_i32_0 : i32, i32
  }
  func.func @transform_7(%arg0: i32, %arg1: i32) -> (i32, i32) {
    %c3_i32 = arith.constant 3 : i32
    %0 = arith.muli %arg0, %c3_i32 : i32
    %1 = arith.addi %0, %arg1 : i32
    %c0_i32 = arith.constant 0 : i32
    %c0_i32_0 = arith.constant 0 : i32
    return %c0_i32, %1 : i32, i32
  }
  func.func @transform_8(%arg0: i32, %arg1: i32) -> (i32, i32, i32) {
    %c0_i32 = arith.constant 0 : i32
    %c0_i32_0 = arith.constant 0 : i32
    %c0_i32_1 = arith.constant 0 : i32
    return %arg0, %c0_i32, %c0_i32_0 : i32, i32, i32
  }
  func.func @transform_9(%arg0: i32, %arg1: i32) -> (i32, i32, i32) {
    %c0_i32 = arith.constant 0 : i32
    %c0_i32_0 = arith.constant 0 : i32
    %c0_i32_1 = arith.constant 0 : i32
    return %arg0, %c0_i32, %c0_i32_0 : i32, i32, i32
  }
  func.func @transform_10(%arg0: i32, %arg1: i32) -> (i32, i32, i32) {
    %c0_i32 = arith.constant 0 : i32
    %c0_i32_0 = arith.constant 0 : i32
    %c0_i32_1 = arith.constant 0 : i32
    return %arg0, %c0_i32, %c0_i32_0 : i32, i32, i32
  }
}

</mosaic_0001>

<llo_original>
// kernel: clam_mb_forward.1
$region0: #{clam_mb_forward.1}
  #allocation0 [shape = 'u32[]', space=smem, size = 0x4, offset = 0x4, fixed_abs, tag = 'smem constant byte address 0x4 - core index']
  #allocation1 [shape = 'u32[72,128]{1,0:T(1,128)}', space=vmem, size = 0x9000, scoped, tag = 'internal scratch']
  %s0 = inlined_call_operand.vmem [shape: bf16[2500,192], index: 0, kind: input, shape index: {}]
  %s1 = inlined_call_operand.vmem [shape: bf16[192,128], index: 1, kind: input, shape index: {}]
  %s2 = inlined_call_operand.vmem [shape: f32[1,128], index: 2, kind: input, shape index: {}]
  %s3 = inlined_call_operand.vmem [shape: bf16[128,256], index: 3, kind: input, shape index: {}]
  %s4 = inlined_call_operand.vmem [shape: f32[1,256], index: 4, kind: input, shape index: {}]
  %s5 = inlined_call_operand.vmem [shape: f32[2,128], index: 5, kind: input, shape index: {}]
  %s6 = inlined_call_operand.vmem [shape: f32[2,1], index: 6, kind: input, shape index: {}]
  %s7 = inlined_call_operand.vmem [shape: f32[2,3072], index: 7, kind: output, shape index: {0}]
  %s8 = inlined_call_operand.vmem [shape: f32[2,2,1], index: 8, kind: output, shape index: {1}]
  %s9 = inlined_call_operand.vmem [shape: f32[2,2,1], index: 9, kind: output, shape index: {2}]
  %s10 = inlined_call_operand.vmem [shape: f32[2,2,128], index: 10, kind: output, shape index: {3}]
  %11 = xla_tuple %s7, %s8, %s9, %s10
  %s12 = sld [smem:[#allocation0]]
  $region89: #{clam_mb_forward.1} parent=0
    _
  %s14 = ssub.s32 1, %s12
  %s15 = scalar_select 0, %s14, %s12
  loop: start=0, step=1, limit=8
  $region2: #{clam_mb_forward.1} parent=0 // loop_pre_header
    _
  $region3: #{clam_mb_forward.1} parent=0 // loop_header
    %s17 = sphi 0, %s21
    %p18 = scmp.ge.s32.totalorder %s17, 8
    %s24 = sphi 0, %s36
    %s25 = sphi 0, %s32
    %s26 = sphi 0, %s24
    %s27 = sphi 0, %s25
    %s28 = sphi 0, %s26
    %s29 = sphi 0, %s27
    %s47 = sphi 0, %s49
    %s50 = sphi 0, %s47
    %s51 = sphi 0, %s50
    %s67 = sphi 0, %s51
    %s71 = sphi 0, %s71
    %s73 = sphi 0, %s71
    %s74 = sphi 0, %s73
    %s88 = sphi 0, %s74
    %s92 = sphi 0, %s92
    %s94 = sphi 0, %s92
    %s95 = sphi 0, %s94
    %s109 = sphi 0, %s95
    %s113 = sphi 0, %s113
    %s115 = sphi 0, %s113
    %s116 = sphi 0, %s115
    %s130 = sphi 0, %s116
    %s134 = sphi 0, %s134
    %s136 = sphi 0, %s134
    %s137 = sphi 0, %s136
    %s151 = sphi 0, %s137
    %s155 = sphi 0, %s155
    %s157 = sphi 0, %s155
    %s158 = sphi 0, %s157
    %s172 = sphi 0, %s158
    %s176 = sphi 0, %s176
    %s178 = sphi 0, %s176
    %s179 = sphi 0, %s178
    %s193 = sphi 0, %s179
    %s203 = sphi 0, %s205
    %s206 = sphi 0, %s203
    %s207 = sphi 0, %s206
    %s223 = sphi 0, %s207
    %s229 = sphi 0, %s231
    %s232 = sphi 0, %s229
    %s233 = sphi 0, %s232
    %s249 = sphi 0, %s233
    %s255 = sphi 0, %s257
    %s258 = sphi 0, %s255
    %s259 = sphi 0, %s258
    %s275 = sphi 0, %s259
    %s281 = sphi 0, %s283
    %s284 = sphi 0, %s281
    %s285 = sphi 0, %s284
    %s301 = sphi 0, %s285
  $region4: #{clam_mb_forward.1} parent=0 // loop_header_branch
    %20 = sbr.rel (%p18) target = $region8
  $region5: #{clam_mb_forward.1} parent=0 // loop_body
    %s22 = ssub.s32 %s17, 1
    %s23 = ssub.s32 %s17, 2
    %s30 = sadd.s32 1, %s25
    %p31 = scmp.ge.s32.totalorder %s30, 3
    %s32 = scalar_select %p31, 0, %s30
    %s33 = sadd.s32 1, %s24
    %s34 = scalar_select %p31, %s33, %s24
    %p35 = scmp.ge.s32.totalorder %s34, 2
    %s36 = scalar_select %p35, 0, %s34
    %s37 = smul.u32 %s24, 3
    %s38 = sadd.s32 %s37, %s25
    %p39 = scmp.lt.s32.totalorder %s38, 4
    %s40 = scalar_select %p39, %s38, 4
    %s41 = smul.u32 %s36, 3
    %s42 = sadd.s32 %s41, %s32
    %p43 = scmp.lt.s32.totalorder %s42, 4
    %s44 = scalar_select %p43, %s42, 4
    %s45 = ssub.s32 %s40, %s44
    %p46 = scmp.eq.s32.totalorder %s45, 0
    %s48 = sadd.s32 %s47, 1
    %s49 = scalar_select %p46, %s47, %s48
    %p52 = pneg %p46
    %p53 = scmp.eq.s32.totalorder %s17, 5
    %p54 = por %p52, %p53
    %p55 = scmp.ne.s32.totalorder %s47, %s50
    %p56 = scmp.eq.s32.totalorder %s17, 0
    %p57 = por %p55, %p56
    %p58 = scmp.ne.s32.totalorder %s47, %s50
    %p59 = scmp.eq.s32.totalorder %s22, 5
    %p60 = por %p58, %p59
    %p61 = scmp.ne.s32.totalorder %s50, %s51
    %p62 = scmp.eq.s32.totalorder %s22, 0
    %p63 = por %p61, %p62
    %p64 = scmp.ne.s32.totalorder %s50, %s51
    %p65 = scmp.eq.s32.totalorder %s23, 5
    %p66 = por %p64, %p65
    %p68 = scmp.ne.s32.totalorder %s51, %s67
    %p69 = scmp.eq.s32.totalorder %s23, 0
    %p70 = por %p68, %p69
    %s72 = sadd.s32 %s71, 1
    %p75 = scmp.eq.s32.totalorder %s17, 5
    %p76 = scmp.ne.s32.totalorder %s71, %s73
    %p77 = scmp.eq.s32.totalorder %s17, 0
    %p78 = por %p76, %p77
    %p79 = scmp.ne.s32.totalorder %s71, %s73
    %p80 = scmp.eq.s32.totalorder %s22, 5
    %p81 = por %p79, %p80
    %p82 = scmp.ne.s32.totalorder %s73, %s74
    %p83 = scmp.eq.s32.totalorder %s22, 0
    %p84 = por %p82, %p83
    %p85 = scmp.ne.s32.totalorder %s73, %s74
    %p86 = scmp.eq.s32.totalorder %s23, 5
    %p87 = por %p85, %p86
    %p89 = scmp.ne.s32.totalorder %s74, %s88
    %p90 = scmp.eq.s32.totalorder %s23, 0
    %p91 = por %p89, %p90
    %s93 = sadd.s32 %s92, 1
    %p96 = scmp.eq.s32.totalorder %s17, 5
    %p97 = scmp.ne.s32.totalorder %s92, %s94
    %p98 = scmp.eq.s32.totalorder %s17, 0
    %p99 = por %p97, %p98
    %p100 = scmp.ne.s32.totalorder %s92, %s94
    %p101 = scmp.eq.s32.totalorder %s22, 5
    %p102 = por %p100, %p101
    %p103 = scmp.ne.s32.totalorder %s94, %s95
    %p104 = scmp.eq.s32.totalorder %s22, 0
    %p105 = por %p103, %p104
    %p106 = scmp.ne.s32.totalorder %s94, %s95
    %p107 = scmp.eq.s32.totalorder %s23, 5
    %p108 = por %p106, %p107
    %p110 = scmp.ne.s32.totalorder %s95, %s109
    %p111 = scmp.eq.s32.totalorder %s23, 0
    %p112 = por %p110, %p111
    %s114 = sadd.s32 %s113, 1
    %p117 = scmp.eq.s32.totalorder %s17, 5
    %p118 = scmp.ne.s32.totalorder %s113, %s115
    %p119 = scmp.eq.s32.totalorder %s17, 0
    %p120 = por %p118, %p119
    %p121 = scmp.ne.s32.totalorder %s113, %s115
    %p122 = scmp.eq.s32.totalorder %s22, 5
    %p123 = por %p121, %p122
    %p124 = scmp.ne.s32.totalorder %s115, %s116
    %p125 = scmp.eq.s32.totalorder %s22, 0
    %p126 = por %p124, %p125
    %p127 = scmp.ne.s32.totalorder %s115, %s116
    %p128 = scmp.eq.s32.totalorder %s23, 5
    %p129 = por %p127, %p128
    %p131 = scmp.ne.s32.totalorder %s116, %s130
    %p132 = scmp.eq.s32.totalorder %s23, 0
    %p133 = por %p131, %p132
    %s135 = sadd.s32 %s134, 1
    %p138 = scmp.eq.s32.totalorder %s17, 5
    %p139 = scmp.ne.s32.totalorder %s134, %s136
    %p140 = scmp.eq.s32.totalorder %s17, 0
    %p141 = por %p139, %p140
    %p142 = scmp.ne.s32.totalorder %s134, %s136
    %p143 = scmp.eq.s32.totalorder %s22, 5
    %p144 = por %p142, %p143
    %p145 = scmp.ne.s32.totalorder %s136, %s137
    %p146 = scmp.eq.s32.totalorder %s22, 0
    %p147 = por %p145, %p146
    %p148 = scmp.ne.s32.totalorder %s136, %s137
    %p149 = scmp.eq.s32.totalorder %s23, 5
    %p150 = por %p148, %p149
    %p152 = scmp.ne.s32.totalorder %s137, %s151
    %p153 = scmp.eq.s32.totalorder %s23, 0
    %p154 = por %p152, %p153
    %s156 = sadd.s32 %s155, 1
    %p159 = scmp.eq.s32.totalorder %s17, 5
    %p160 = scmp.ne.s32.totalorder %s155, %s157
    %p161 = scmp.eq.s32.totalorder %s17, 0
    %p162 = por %p160, %p161
    %p163 = scmp.ne.s32.totalorder %s155, %s157
    %p164 = scmp.eq.s32.totalorder %s22, 5
    %p165 = por %p163, %p164
    %p166 = scmp.ne.s32.totalorder %s157, %s158
    %p167 = scmp.eq.s32.totalorder %s22, 0
    %p168 = por %p166, %p167
    %p169 = scmp.ne.s32.totalorder %s157, %s158
    %p170 = scmp.eq.s32.totalorder %s23, 5
    %p171 = por %p169, %p170
    %p173 = scmp.ne.s32.totalorder %s158, %s172
    %p174 = scmp.eq.s32.totalorder %s23, 0
    %p175 = por %p173, %p174
    %s177 = sadd.s32 %s176, 1
    %p180 = scmp.eq.s32.totalorder %s17, 5
    %p181 = scmp.ne.s32.totalorder %s176, %s178
    %p182 = scmp.eq.s32.totalorder %s17, 0
    %p183 = por %p181, %p182
    %p184 = scmp.ne.s32.totalorder %s176, %s178
    %p185 = scmp.eq.s32.totalorder %s22, 5
    %p186 = por %p184, %p185
    %p187 = scmp.ne.s32.totalorder %s178, %s179
    %p188 = scmp.eq.s32.totalorder %s22, 0
    %p189 = por %p187, %p188
    %p190 = scmp.ne.s32.totalorder %s178, %s179
    %p191 = scmp.eq.s32.totalorder %s23, 5
    %p192 = por %p190, %p191
    %p194 = scmp.ne.s32.totalorder %s179, %s193
    %p195 = scmp.eq.s32.totalorder %s23, 0
    %p196 = por %p194, %p195
    %s197 = smul.u32 %s24, 3
    %s198 = sadd.s32 %s197, %s25
    %s199 = smul.u32 %s36, 3
    %s200 = sadd.s32 %s199, %s32
    %s201 = ssub.s32 %s198, %s200
    %p202 = scmp.eq.s32.totalorder %s201, 0
    %s204 = sadd.s32 %s203, 1
    %s205 = scalar_select %p202, %s203, %s204
    %p208 = pneg %p202
    %p209 = scmp.eq.s32.totalorder %s17, 5
    %p210 = por %p208, %p209
    %p211 = scmp.ne.s32.totalorder %s203, %s206
    %p212 = scmp.eq.s32.totalorder %s17, 0
    %p213 = por %p211, %p212
    %p214 = scmp.ne.s32.totalorder %s203, %s206
    %p215 = scmp.eq.s32.totalorder %s22, 5
    %p216 = por %p214, %p215
    %p217 = scmp.ne.s32.totalorder %s206, %s207
    %p218 = scmp.eq.s32.totalorder %s22, 0
    %p219 = por %p217, %p218
    %p220 = scmp.ne.s32.totalorder %s206, %s207
    %p221 = scmp.eq.s32.totalorder %s23, 5
    %p222 = por %p220, %p221
    %p224 = scmp.ne.s32.totalorder %s207, %s223
    %p225 = scmp.eq.s32.totalorder %s23, 0
    %p226 = por %p224, %p225
    %s227 = ssub.s32 %s24, %s36
    %p228 = scmp.eq.s32.totalorder %s227, 0
    %s230 = sadd.s32 %s229, 1
    %s231 = scalar_select %p228, %s229, %s230
    %p234 = pneg %p228
    %p235 = scmp.eq.s32.totalorder %s17, 5
    %p236 = por %p234, %p235
    %p237 = scmp.ne.s32.totalorder %s229, %s232
    %p238 = scmp.eq.s32.totalorder %s17, 0
    %p239 = por %p237, %p238
    %p240 = scmp.ne.s32.totalorder %s229, %s232
    %p241 = scmp.eq.s32.totalorder %s22, 5
    %p242 = por %p240, %p241
    %p243 = scmp.ne.s32.totalorder %s232, %s233
    %p244 = scmp.eq.s32.totalorder %s22, 0
    %p245 = por %p243, %p244
    %p246 = scmp.ne.s32.totalorder %s232, %s233
    %p247 = scmp.eq.s32.totalorder %s23, 5
    %p248 = por %p246, %p247
    %p250 = scmp.ne.s32.totalorder %s233, %s249
    %p251 = scmp.eq.s32.totalorder %s23, 0
    %p252 = por %p250, %p251
    %s253 = ssub.s32 %s24, %s36
    %p254 = scmp.eq.s32.totalorder %s253, 0
    %s256 = sadd.s32 %s255, 1
    %s257 = scalar_select %p254, %s255, %s256
    %p260 = pneg %p254
    %p261 = scmp.eq.s32.totalorder %s17, 5
    %p262 = por %p260, %p261
    %p263 = scmp.ne.s32.totalorder %s255, %s258
    %p264 = scmp.eq.s32.totalorder %s17, 0
    %p265 = por %p263, %p264
    %p266 = scmp.ne.s32.totalorder %s255, %s258
    %p267 = scmp.eq.s32.totalorder %s22, 5
    %p268 = por %p266, %p267
    %p269 = scmp.ne.s32.totalorder %s258, %s259
    %p270 = scmp.eq.s32.totalorder %s22, 0
    %p271 = por %p269, %p270
    %p272 = scmp.ne.s32.totalorder %s258, %s259
    %p273 = scmp.eq.s32.totalorder %s23, 5
    %p274 = por %p272, %p273
    %p276 = scmp.ne.s32.totalorder %s259, %s275
    %p277 = scmp.eq.s32.totalorder %s23, 0
    %p278 = por %p276, %p277
    %s279 = ssub.s32 %s24, %s36
    %p280 = scmp.eq.s32.totalorder %s279, 0
    %s282 = sadd.s32 %s281, 1
    %s283 = scalar_select %p280, %s281, %s282
    %p286 = pneg %p280
    %p287 = scmp.eq.s32.totalorder %s17, 5
    %p288 = por %p286, %p287
    %p289 = scmp.ne.s32.totalorder %s281, %s284
    %p290 = scmp.eq.s32.totalorder %s17, 0
    %p291 = por %p289, %p290
    %p292 = scmp.ne.s32.totalorder %s281, %s284
    %p293 = scmp.eq.s32.totalorder %s22, 5
    %p294 = por %p292, %p293
    %p295 = scmp.ne.s32.totalorder %s284, %s285
    %p296 = scmp.eq.s32.totalorder %s22, 0
    %p297 = por %p295, %p296
    %p298 = scmp.ne.s32.totalorder %s284, %s285
    %p299 = scmp.eq.s32.totalorder %s23, 5
    %p300 = por %p298, %p299
    %p302 = scmp.ne.s32.totalorder %s285, %s301
    %p303 = scmp.eq.s32.totalorder %s23, 0
    %p304 = por %p302, %p303
    %p305 = scmp.le.s32.totalorder 1, %s17
    %p306 = scmp.lt.s32.totalorder %s17, 7
    %p307 = pnand %p305, %p306
    %p308 = pneg %p307
    // Predicated region
    $region9: #{clam_mb_forward.1} parent=5 // pred_check
      _
    $region10: #{clam_mb_forward.1} parent=5 // pred_check_branch
      %310 = sbr.rel (%p307) target = $region12
    $region11: #{clam_mb_forward.1} parent=5 // pred_region
      %s311 = ssub.s32 %s17, 1
      // Predicated region
      $region13: #{clam_mb_forward.1} parent=11 // pred_check
        %p312 = pneg %p84
      $region14: #{clam_mb_forward.1} parent=11 // pred_check_branch
        %314 = sbr.rel (%p312) target = $region16
      $region15: #{clam_mb_forward.1} parent=11 // pred_region
        _
      $region16: #{clam_mb_forward.1} parent=11 // pred_fallthru
        _
      // Predicated region
      $region17: #{clam_mb_forward.1} parent=11 // pred_check
        %p315 = pneg %p105
      $region18: #{clam_mb_forward.1} parent=11 // pred_check_branch
        %317 = sbr.rel (%p315) target = $region20
      $region19: #{clam_mb_forward.1} parent=11 // pred_region
        _
      $region20: #{clam_mb_forward.1} parent=11 // pred_fallthru
        _
      // Predicated region
      $region21: #{clam_mb_forward.1} parent=11 // pred_check
        %p318 = pneg %p126
      $region22: #{clam_mb_forward.1} parent=11 // pred_check_branch
        %320 = sbr.rel (%p318) target = $region24
      $region23: #{clam_mb_forward.1} parent=11 // pred_region
        _
      $region24: #{clam_mb_forward.1} parent=11 // pred_fallthru
        _
      // Predicated region
      $region25: #{clam_mb_forward.1} parent=11 // pred_check
        %p321 = pneg %p147
      $region26: #{clam_mb_forward.1} parent=11 // pred_check_branch
        %323 = sbr.rel (%p321) target = $region28
      $region27: #{clam_mb_forward.1} parent=11 // pred_region
        _
      $region28: #{clam_mb_forward.1} parent=11 // pred_fallthru
        _
      // Predicated region
      $region29: #{clam_mb_forward.1} parent=11 // pred_check
        %p324 = pneg %p168
      $region30: #{clam_mb_forward.1} parent=11 // pred_check_branch
        %326 = sbr.rel (%p324) target = $region32
      $region31: #{clam_mb_forward.1} parent=11 // pred_region
        _
      $region32: #{clam_mb_forward.1} parent=11 // pred_fallthru
        _
      // Predicated region
      $region33: #{clam_mb_forward.1} parent=11 // pred_check
        %p327 = pneg %p189
      $region34: #{clam_mb_forward.1} parent=11 // pred_check_branch
        %329 = sbr.rel (%p327) target = $region36
      $region35: #{clam_mb_forward.1} parent=11 // pred_region
        _
      $region36: #{clam_mb_forward.1} parent=11 // pred_fallthru
        _
    $region12: #{clam_mb_forward.1} parent=5 // pred_fallthru
      _
    %p330 = scmp.lt.s32.totalorder %s17, 6
    // Predicated region
    $region37: #{clam_mb_forward.1} parent=5 // pred_check
      %p331 = pneg %p330
    $region38: #{clam_mb_forward.1} parent=5 // pred_check_branch
      %333 = sbr.rel (%p331) target = $region40
    $region39: #{clam_mb_forward.1} parent=5 // pred_region
      // Predicated region
      $region41: #{clam_mb_forward.1} parent=39 // pred_check
        %p334 = pneg %p57
      $region42: #{clam_mb_forward.1} parent=39 // pred_check_branch
        %336 = sbr.rel (%p334) target = $region44
      $region43: #{clam_mb_forward.1} parent=39 // pred_region
        %s337 = smul.u32 %s24, 3
        %s338 = sadd.s32 %s337, %s25
        %p339 = scmp.lt.s32.totalorder %s338, 4
        %s340 = scalar_select %p339, %s338, 4
        %s341 = smul.u32 64, %s340
        %s342 = ssub.s32 313, %s341
        %p343 = scmp.lt.s32.totalorder %s342, 64
        %s344 = scalar_select %p343, %s342, 64
        %s345 = smul.u32 4, %s344
        %s346 = smul.u32 %s345, 2
        %p347 = scmp.lt.s32.totalorder %s341, 312
        %s348 = scalar_select %p347, %s341, 312
        %s349 = smul.addr %s348, 2
        %s350 = smul.addr %s349, 4
        %s351 = scalar_lea.vmem %s0, %s350
        %s352 = smul.u32 %s24, 3
        %s353 = sadd.s32 %s352, %s25
        %p354 = scmp.lt.s32.totalorder %s353, 4
        %s355 = scalar_select %p354, %s353, 4
        %s356 = smul.u32 64, %s355
        %s357 = ssub.s32 313, %s356
        %p358 = scmp.lt.s32.totalorder %s357, 64
        %s359 = scalar_select %p358, %s357, 64
        %s360 = smul.u32 4, %s359
        %s361 = smul.u32 %s360, 2
      $region44: #{clam_mb_forward.1} parent=39 // pred_fallthru
        _
    $region40: #{clam_mb_forward.1} parent=5 // pred_fallthru
      _
    %p362 = scmp.le.s32.totalorder 1, %s17
    %p363 = scmp.lt.s32.totalorder %s17, 7
    %p364 = pnand %p362, %p363
    %p365 = pneg %p364
    // Predicated region
    $region45: #{clam_mb_forward.1} parent=5 // pred_check
      _
    $region46: #{clam_mb_forward.1} parent=5 // pred_check_branch
      %367 = sbr.rel (%p364) target = $region48
    $region47: #{clam_mb_forward.1} parent=5 // pred_region
      %s368 = ssub.s32 %s17, 1
      %s369 = smul.u32 %s26, 3
      %s370 = sadd.s32 %s369, %s27
      %p371 = scmp.lt.s32.totalorder %s370, 4
      %s372 = scalar_select %p371, %s370, 4
      %s373 = smul.u32 64, %s372
      %s374 = ssub.s32 313, %s373
      %p375 = scmp.lt.s32.totalorder %s374, 64
      %s376 = scalar_select %p375, %s374, 64
      %s377 = smul.u32 4, %s376
      %s378 = smul.u32 %s377, 2
      %p379 = scmp.lt.s32.totalorder %s373, 312
      %s380 = scalar_select %p379, %s373, 312
      %s381 = smul.addr %s380, 2
      %s382 = smul.addr %s381, 4
      %s383 = scalar_lea.vmem %s0, %s382
      %p384 = pneg %p63
      %p385 = pneg %p60
      %p386 = pneg %p84
      %p387 = pneg %p81
      %p388 = pneg %p105
      %p389 = pneg %p102
      %p390 = pneg %p126
      %p391 = pneg %p123
      %p392 = pneg %p147
      %p393 = pneg %p144
      %p394 = pneg %p168
      %p395 = pneg %p165
      %p396 = pneg %p189
      %p397 = pneg %p186
      %p398 = pneg %p219
      %p399 = pneg %p216
      %s400 = smul.u32 %s26, 3
      %s401 = sadd.s32 %s400, %s27
      %s402 = smul.u32 4, %s401
      %p403 = scmp.lt.s32.totalorder %s402, 23
      %s404 = scalar_select %p403, %s402, 23
      %s405 = smul.addr %s404, 2
      %s406 = scalar_lea.vmem %s7, %s405
      %p407 = pneg %p245
      %p408 = pneg %p242
      %p409 = scmp.lt.s32.totalorder %s26, 1
      %s410 = scalar_select %p409, %s26, 1
      %s411 = smul.addr %s410, 2
      %s412 = scalar_lea.vmem %s8, %s411
      %p413 = pneg %p271
      %p414 = pneg %p268
      %p415 = scmp.lt.s32.totalorder %s26, 1
      %s416 = scalar_select %p415, %s26, 1
      %s417 = smul.addr %s416, 2
      %s418 = scalar_lea.vmem %s9, %s417
      %p419 = pneg %p297
      %p420 = pneg %p294
      %p421 = scmp.lt.s32.totalorder %s26, 1
      %s422 = scalar_select %p421, %s26, 1
      %s423 = smul.addr %s422, 2
      %s424 = scalar_lea.vmem %s10, %s423
      %s425 = smul.u32 %s26, 3
      %s426 = sadd.s32 %s425, %s27
      %p427 = scmp.lt.s32.totalorder %s426, 4
      %s428 = scalar_select %p427, %s426, 4
      %s429 = smul.u32 64, %s428
      %s430 = ssub.s32 313, %s429
      %p431 = scmp.lt.s32.totalorder %s430, 64
      %s432 = scalar_select %p431, %s430, 64
      %s433 = smul.u32 4, %s432
      %s434 = smul.u32 %s433, 2
      %p435 = scmp.lt.s32.totalorder %s429, 312
      %s436 = scalar_select %p435, %s429, 312
      %s437 = smul.addr %s436, 2
      %s438 = smul.addr %s437, 4
      %s439 = scalar_lea.vmem %s0, %s438
      %s440 = smul.u32 %s26, 3
      %s441 = sadd.s32 %s440, %s27
      %p442 = scmp.lt.s32.totalorder %s441, 4
      %s443 = scalar_select %p442, %s441, 4
      %s444 = smul.u32 64, %s443
      %s445 = ssub.s32 313, %s444
      %p446 = scmp.lt.s32.totalorder %s445, 64
      %s447 = scalar_select %p446, %s445, 64
      %s448 = smul.u32 4, %s447
      %s449 = smul.u32 %s448, 2
      %s450 = smul.u32 %s26, 3
      %s451 = sadd.s32 %s450, %s27
      %s452 = smul.u32 4, %s451
      %p453 = scmp.lt.s32.totalorder %s452, 23
      %s454 = scalar_select %p453, %s452, 23
      %s455 = smul.addr %s454, 2
      %s456 = scalar_lea.vmem %s7, %s455
      %s457 = smul.u32 %s26, 3
      %s458 = sadd.s32 %s457, %s27
      %s459 = smul.u32 4, %s458
      %p460 = scmp.lt.s32.totalorder %s26, 1
      %s461 = scalar_select %p460, %s26, 1
      %s462 = smul.addr %s461, 2
      %s463 = scalar_lea.vmem %s8, %s462
      %p464 = scmp.lt.s32.totalorder %s26, 1
      %s465 = scalar_select %p464, %s26, 1
      %s466 = smul.addr %s465, 2
      %s467 = scalar_lea.vmem %s9, %s466
      %p468 = scmp.lt.s32.totalorder %s26, 1
      %s469 = scalar_select %p468, %s26, 1
      %s470 = smul.addr %s469, 2
      %s471 = scalar_lea.vmem %s10, %s470
      %s473 = smul.u32 %s26, 3
      %s474 = sadd.s32 %s473, %s27
      %p475 = scmp.eq.s32.totalorder %s27, 0
      // Predicated region
      $region49: #{clam_mb_forward.1} parent=47 // pred_check
        %p476 = pneg %p475
      $region50: #{clam_mb_forward.1} parent=47 // pred_check_branch
        %478 = sbr.rel (%p476) target = $region52
      $region51: #{clam_mb_forward.1} parent=47 // pred_region
        %vm479 = vcmask 1024
        %480 = vst.msk [vmem:[%s463] sm:$0x3] %vm479, -inf
        %481 = vst.msk [vmem:[%s467] sm:$0x3] %vm479, 0.0
        %482 = vst [vmem:[%s471] sm:$0x3] 0.0
      $region52: #{clam_mb_forward.1} parent=47 // pred_fallthru
        _
      %v483 = vld [vmem:[%s439] sm:$0xff]
      %v484 = vld [vmem:[%s439 + $0x8] sm:$0xff]
      %v485 = vld [vmem:[%s439 + $0x10] sm:$0xff]
      %v486 = vld [vmem:[%s439 + $0x18] sm:$0xff]
      %v487 = vld [vmem:[%s439 + $0x20] sm:$0xff]
      %v488 = vld [vmem:[%s439 + $0x28] sm:$0xff]
      %v489 = vld [vmem:[%s439 + $0x30] sm:$0xff]
      %v490 = vld [vmem:[%s439 + $0x38] sm:$0xff]
      %v491 = vld [vmem:[%s439 + $0x40] sm:$0xff]
      %v492 = vld [vmem:[%s439 + $0x48] sm:$0xff]
      %v493 = vld [vmem:[%s439 + $0x50] sm:$0xff]
      %v494 = vld [vmem:[%s439 + $0x58] sm:$0xff]
      %v495 = vld [vmem:[%s439 + $0x60] sm:$0xff]
      %v496 = vld [vmem:[%s439 + $0x68] sm:$0xff]
      %v497 = vld [vmem:[%s439 + $0x70] sm:$0xff]
      %v498 = vld [vmem:[%s439 + $0x78] sm:$0xff]
      %v499 = vld [vmem:[%s439 + $0x80] sm:$0xff]
      %v500 = vld [vmem:[%s439 + $0x88] sm:$0xff]
      %v501 = vld [vmem:[%s439 + $0x90] sm:$0xff]
      %v502 = vld [vmem:[%s439 + $0x98] sm:$0xff]
      %v503 = vld [vmem:[%s439 + $0xa0] sm:$0xff]
      %v504 = vld [vmem:[%s439 + $0xa8] sm:$0xff]
      %v505 = vld [vmem:[%s439 + $0xb0] sm:$0xff]
      %v506 = vld [vmem:[%s439 + $0xb8] sm:$0xff]
      %v507 = vld [vmem:[%s439 + $0xc0] sm:$0xff]
      %v508 = vld [vmem:[%s439 + $0xc8] sm:$0xff]
      %v509 = vld [vmem:[%s439 + $0xd0] sm:$0xff]
      %v510 = vld [vmem:[%s439 + $0xd8] sm:$0xff]
      %v511 = vld [vmem:[%s439 + $0xe0] sm:$0xff]
      %v512 = vld [vmem:[%s439 + $0xe8] sm:$0xff]
      %v513 = vld [vmem:[%s439 + $0xf0] sm:$0xff]
      %v514 = vld [vmem:[%s439 + $0xf8] sm:$0xff]
      %v515 = vld [vmem:[%s439 + $0x100] sm:$0xff]
      %v516 = vld [vmem:[%s439 + $0x108] sm:$0xff]
      %v517 = vld [vmem:[%s439 + $0x110] sm:$0xff]
      %v518 = vld [vmem:[%s439 + $0x118] sm:$0xff]
      %v519 = vld [vmem:[%s439 + $0x120] sm:$0xff]
      %v520 = vld [vmem:[%s439 + $0x128] sm:$0xff]
      %v521 = vld [vmem:[%s439 + $0x130] sm:$0xff]
      %v522 = vld [vmem:[%s439 + $0x138] sm:$0xff]
      %v523 = vld [vmem:[%s439 + $0x140] sm:$0xff]
      %v524 = vld [vmem:[%s439 + $0x148] sm:$0xff]
      %v525 = vld [vmem:[%s439 + $0x150] sm:$0xff]
      %v526 = vld [vmem:[%s439 + $0x158] sm:$0xff]
      %v527 = vld [vmem:[%s439 + $0x160] sm:$0xff]
      %v528 = vld [vmem:[%s439 + $0x168] sm:$0xff]
      %v529 = vld [vmem:[%s439 + $0x170] sm:$0xff]
      %v530 = vld [vmem:[%s439 + $0x178] sm:$0xff]
      %v531 = vld [vmem:[%s439 + $0x180] sm:$0xff]
      %v532 = vld [vmem:[%s439 + $0x188] sm:$0xff]
      %v533 = vld [vmem:[%s439 + $0x190] sm:$0xff]
      %v534 = vld [vmem:[%s439 + $0x198] sm:$0xff]
      %v535 = vld [vmem:[%s439 + $0x1a0] sm:$0xff]
      %v536 = vld [vmem:[%s439 + $0x1a8] sm:$0xff]
      %v537 = vld [vmem:[%s439 + $0x1b0] sm:$0xff]
      %v538 = vld [vmem:[%s439 + $0x1b8] sm:$0xff]
      %v539 = vld [vmem:[%s439 + $0x1c0] sm:$0xff]
      %v540 = vld [vmem:[%s439 + $0x1c8] sm:$0xff]
      %v541 = vld [vmem:[%s439 + $0x1d0] sm:$0xff]
      %v542 = vld [vmem:[%s439 + $0x1d8] sm:$0xff]
      %v543 = vld [vmem:[%s439 + $0x1e0] sm:$0xff]
      %v544 = vld [vmem:[%s439 + $0x1e8] sm:$0xff]
      %v545 = vld [vmem:[%s439 + $0x1f0] sm:$0xff]
      %v546 = vld [vmem:[%s439 + $0x1f8] sm:$0xff]
      %v547 = vld [vmem:[%s1] sm:$0xf]
      %v548 = vld [vmem:[%s1 + $0x4] sm:$0xf]
      %v549 = vld [vmem:[%s1 + $0x8] sm:$0xf]
      %v550 = vld [vmem:[%s1 + $0xc] sm:$0xf]
      %v551 = vld [vmem:[%s1 + $0x10] sm:$0xf]
      %v552 = vld [vmem:[%s1 + $0x14] sm:$0xf]
      %v553 = vld [vmem:[%s1 + $0x18] sm:$0xf]
      %v554 = vld [vmem:[%s1 + $0x1c] sm:$0xf]
      %v555 = vld [vmem:[%s1 + $0x20] sm:$0xf]
      %v556 = vld [vmem:[%s1 + $0x24] sm:$0xf]
      %v557 = vld [vmem:[%s1 + $0x28] sm:$0xf]
      %v558 = vld [vmem:[%s1 + $0x2c] sm:$0xf]
      %v559 = vld [vmem:[%s1 + $0x30] sm:$0xf]
      %v560 = vld [vmem:[%s1 + $0x34] sm:$0xf]
      %v561 = vld [vmem:[%s1 + $0x38] sm:$0xf]
      %v562 = vld [vmem:[%s1 + $0x3c] sm:$0xf]
      %v563 = vld [vmem:[%s1 + $0x40] sm:$0xf]
      %v564 = vld [vmem:[%s1 + $0x44] sm:$0xf]
      %v565 = vld [vmem:[%s1 + $0x48] sm:$0xf]
      %v566 = vld [vmem:[%s1 + $0x4c] sm:$0xf]
      %v567 = vld [vmem:[%s1 + $0x50] sm:$0xf]
      %v568 = vld [vmem:[%s1 + $0x54] sm:$0xf]
      %v569 = vld [vmem:[%s1 + $0x58] sm:$0xf]
      %v570 = vld [vmem:[%s1 + $0x5c] sm:$0xf]
      %v571 = vld [vmem:[%s2] sm:$0x1]
      %v573 = vperm.slane %v571, 0
      %v639 = vunpack.c.l.b16 %v483
      %v640 = vunpack.c.h.b16 %v483
      %v641 = vunpack.c.l.b16 %v484
      %v642 = vunpack.c.h.b16 %v484
      %v643 = vunpack.c.l.b16 %v485
      %v644 = vunpack.c.h.b16 %v485
      %v645 = vunpack.c.l.b16 %v486
      %v646 = vunpack.c.h.b16 %v486
      %v647 = vunpack.c.l.b16 %v487
      %v648 = vunpack.c.h.b16 %v487
      %v649 = vunpack.c.l.b16 %v488
      %v650 = vunpack.c.h.b16 %v488
      %v651 = vunpack.c.l.b16 %v489
      %v652 = vunpack.c.h.b16 %v489
      %v653 = vunpack.c.l.b16 %v490
      %v654 = vunpack.c.h.b16 %v490
      %v655 = vunpack.c.l.b16 %v491
      %v656 = vunpack.c.h.b16 %v491
      %v657 = vunpack.c.l.b16 %v492
      %v658 = vunpack.c.h.b16 %v492
      %v659 = vunpack.c.l.b16 %v493
      %v660 = vunpack.c.h.b16 %v493
      %v661 = vunpack.c.l.b16 %v494
      %v662 = vunpack.c.h.b16 %v494
      %v663 = vunpack.c.l.b16 %v495
      %v664 = vunpack.c.h.b16 %v495
      %v665 = vunpack.c.l.b16 %v496
      %v666 = vunpack.c.h.b16 %v496
      %v667 = vunpack.c.l.b16 %v497
      %v668 = vunpack.c.h.b16 %v497
      %v669 = vunpack.c.l.b16 %v498
      %v670 = vunpack.c.h.b16 %v498
      %v671 = vunpack.c.l.b16 %v499
      %v672 = vunpack.c.h.b16 %v499
      %v673 = vunpack.c.l.b16 %v500
      %v674 = vunpack.c.h.b16 %v500
      %v675 = vunpack.c.l.b16 %v501
      %v676 = vunpack.c.h.b16 %v501
      %v677 = vunpack.c.l.b16 %v502
      %v678 = vunpack.c.h.b16 %v502
      %v679 = vunpack.c.l.b16 %v503
      %v680 = vunpack.c.h.b16 %v503
      %v681 = vunpack.c.l.b16 %v504
      %v682 = vunpack.c.h.b16 %v504
      %v683 = vunpack.c.l.b16 %v505
      %v684 = vunpack.c.h.b16 %v505
      %v685 = vunpack.c.l.b16 %v506
      %v686 = vunpack.c.h.b16 %v506
      %v687 = vunpack.c.l.b16 %v507
      %v688 = vunpack.c.h.b16 %v507
      %v689 = vunpack.c.l.b16 %v508
      %v690 = vunpack.c.h.b16 %v508
      %v691 = vunpack.c.l.b16 %v509
      %v692 = vunpack.c.h.b16 %v509
      %v693 = vunpack.c.l.b16 %v510
      %v694 = vunpack.c.h.b16 %v510
      %v695 = vunpack.c.l.b16 %v511
      %v696 = vunpack.c.h.b16 %v511
      %v697 = vunpack.c.l.b16 %v512
      %v698 = vunpack.c.h.b16 %v512
      %v699 = vunpack.c.l.b16 %v513
      %v700 = vunpack.c.h.b16 %v513
      %v701 = vunpack.c.l.b16 %v514
      %v702 = vunpack.c.h.b16 %v514
      %v703 = vunpack.c.l.b16 %v515
      %v704 = vunpack.c.h.b16 %v515
      %v705 = vunpack.c.l.b16 %v516
      %v706 = vunpack.c.h.b16 %v516
      %v707 = vunpack.c.l.b16 %v517
      %v708 = vunpack.c.h.b16 %v517
      %v709 = vunpack.c.l.b16 %v518
      %v710 = vunpack.c.h.b16 %v518
      %v711 = vunpack.c.l.b16 %v519
      %v712 = vunpack.c.h.b16 %v519
      %v713 = vunpack.c.l.b16 %v520
      %v714 = vunpack.c.h.b16 %v520
      %v715 = vunpack.c.l.b16 %v521
      %v716 = vunpack.c.h.b16 %v521
      %v717 = vunpack.c.l.b16 %v522
      %v718 = vunpack.c.h.b16 %v522
      %v719 = vunpack.c.l.b16 %v523
      %v720 = vunpack.c.h.b16 %v523
      %v721 = vunpack.c.l.b16 %v524
      %v722 = vunpack.c.h.b16 %v524
      %v723 = vunpack.c.l.b16 %v525
      %v724 = vunpack.c.h.b16 %v525
      %v725 = vunpack.c.l.b16 %v526
      %v726 = vunpack.c.h.b16 %v526
      %v727 = vunpack.c.l.b16 %v527
      %v728 = vunpack.c.h.b16 %v527
      %v729 = vunpack.c.l.b16 %v528
      %v730 = vunpack.c.h.b16 %v528
      %v731 = vunpack.c.l.b16 %v529
      %v732 = vunpack.c.h.b16 %v529
      %v733 = vunpack.c.l.b16 %v530
      %v734 = vunpack.c.h.b16 %v530
      %v735 = vunpack.c.l.b16 %v531
      %v736 = vunpack.c.h.b16 %v531
      %v737 = vunpack.c.l.b16 %v532
      %v738 = vunpack.c.h.b16 %v532
      %v739 = vunpack.c.l.b16 %v533
      %v740 = vunpack.c.h.b16 %v533
      %v741 = vunpack.c.l.b16 %v534
      %v742 = vunpack.c.h.b16 %v534
      %v743 = vunpack.c.l.b16 %v535
      %v744 = vunpack.c.h.b16 %v535
      %v745 = vunpack.c.l.b16 %v536
      %v746 = vunpack.c.h.b16 %v536
      %v747 = vunpack.c.l.b16 %v537
      %v748 = vunpack.c.h.b16 %v537
      %v749 = vunpack.c.l.b16 %v538
      %v750 = vunpack.c.h.b16 %v538
      %v751 = vunpack.c.l.b16 %v539
      %v752 = vunpack.c.h.b16 %v539
      %v753 = vunpack.c.l.b16 %v540
      %v754 = vunpack.c.h.b16 %v540
      %v755 = vunpack.c.l.b16 %v541
      %v756 = vunpack.c.h.b16 %v541
      %v757 = vunpack.c.l.b16 %v542
      %v758 = vunpack.c.h.b16 %v542
      %v759 = vunpack.c.l.b16 %v543
      %v760 = vunpack.c.h.b16 %v543
      %v761 = vunpack.c.l.b16 %v544
      %v762 = vunpack.c.h.b16 %v544
      %v763 = vunpack.c.l.b16 %v545
      %v764 = vunpack.c.h.b16 %v545
      %v765 = vunpack.c.l.b16 %v546
      %v766 = vunpack.c.h.b16 %v546
      %v767 = vpack.c.b16 %v641, %v639
      %v768 = vpack.c.b16 %v642, %v640
      %v769 = vpack.c.b16 %v645, %v643
      %v770 = vpack.c.b16 %v646, %v644
      %v771 = vpack.c.b16 %v649, %v647
      %v772 = vpack.c.b16 %v650, %v648
      %v773 = vpack.c.b16 %v653, %v651
      %v774 = vpack.c.b16 %v654, %v652
      %v775 = vpack.c.b16 %v657, %v655
      %v776 = vpack.c.b16 %v658, %v656
      %v777 = vpack.c.b16 %v661, %v659
      %v778 = vpack.c.b16 %v662, %v660
      %v779 = vpack.c.b16 %v665, %v663
      %v780 = vpack.c.b16 %v666, %v664
      %v781 = vpack.c.b16 %v669, %v667
      %v782 = vpack.c.b16 %v670, %v668
      %v783 = vpack.c.b16 %v673, %v671
      %v784 = vpack.c.b16 %v674, %v672
      %v785 = vpack.c.b16 %v677, %v675
      %v786 = vpack.c.b16 %v678, %v676
      %v787 = vpack.c.b16 %v681, %v679
      %v788 = vpack.c.b16 %v682, %v680
      %v789 = vpack.c.b16 %v685, %v683
      %v790 = vpack.c.b16 %v686, %v684
      %v791 = vpack.c.b16 %v689, %v687
      %v792 = vpack.c.b16 %v690, %v688
      %v793 = vpack.c.b16 %v693, %v691
      %v794 = vpack.c.b16 %v694, %v692
      %v795 = vpack.c.b16 %v697, %v695
      %v796 = vpack.c.b16 %v698, %v696
      %v797 = vpack.c.b16 %v701, %v699
      %v798 = vpack.c.b16 %v702, %v700
      %v799 = vpack.c.b16 %v705, %v703
      %v800 = vpack.c.b16 %v706, %v704
      %v801 = vpack.c.b16 %v709, %v707
      %v802 = vpack.c.b16 %v710, %v708
      %v803 = vpack.c.b16 %v713, %v711
      %v804 = vpack.c.b16 %v714, %v712
      %v805 = vpack.c.b16 %v717, %v715
      %v806 = vpack.c.b16 %v718, %v716
      %v807 = vpack.c.b16 %v721, %v719
      %v808 = vpack.c.b16 %v722, %v720
      %v809 = vpack.c.b16 %v725, %v723
      %v810 = vpack.c.b16 %v726, %v724
      %v811 = vpack.c.b16 %v729, %v727
      %v812 = vpack.c.b16 %v730, %v728
      %v813 = vpack.c.b16 %v733, %v731
      %v814 = vpack.c.b16 %v734, %v732
      %v815 = vpack.c.b16 %v737, %v735
      %v816 = vpack.c.b16 %v738, %v736
      %v817 = vpack.c.b16 %v741, %v739
      %v818 = vpack.c.b16 %v742, %v740
      %v819 = vpack.c.b16 %v745, %v743
      %v820 = vpack.c.b16 %v746, %v744
      %v821 = vpack.c.b16 %v749, %v747
      %v822 = vpack.c.b16 %v750, %v748
      %v823 = vpack.c.b16 %v753, %v751
      %v824 = vpack.c.b16 %v754, %v752
      %v825 = vpack.c.b16 %v757, %v755
      %v826 = vpack.c.b16 %v758, %v756
      %v827 = vpack.c.b16 %v761, %v759
      %v828 = vpack.c.b16 %v762, %v760
      %v829 = vpack.c.b16 %v765, %v763
      %v830 = vpack.c.b16 %v766, %v764
      %v887 = vunpack.c.l.b16 %v547
      %v888 = vunpack.c.l.b16 %v548
      %v889 = vunpack.c.l.b16 %v549
      %v890 = vunpack.c.l.b16 %v550
      %v891 = vunpack.c.l.b16 %v551
      %v892 = vunpack.c.l.b16 %v552
      %v893 = vunpack.c.l.b16 %v553
      %v894 = vunpack.c.l.b16 %v554
      %v895 = vunpack.c.l.b16 %v555
      %v896 = vunpack.c.l.b16 %v556
      %v897 = vunpack.c.l.b16 %v557
      %v898 = vunpack.c.l.b16 %v558
      %v899 = vunpack.c.l.b16 %v559
      %v900 = vunpack.c.l.b16 %v560
      %v901 = vunpack.c.l.b16 %v561
      %v902 = vunpack.c.l.b16 %v562
      %v903 = vunpack.c.l.b16 %v563
      %v904 = vunpack.c.l.b16 %v564
      %v905 = vunpack.c.l.b16 %v565
      %v906 = vunpack.c.l.b16 %v566
      %v907 = vunpack.c.l.b16 %v567
      %v908 = vunpack.c.l.b16 %v568
      %v909 = vunpack.c.l.b16 %v569
      %v910 = vunpack.c.l.b16 %v570
      %v911 = vpack.c.b16 %v888, %v887
      %v912 = vpack.c.b16 %v890, %v889
      %v913 = vpack.c.b16 %v892, %v891
      %v914 = vpack.c.b16 %v894, %v893
      %v915 = vpack.c.b16 %v896, %v895
      %v916 = vpack.c.b16 %v898, %v897
      %v917 = vpack.c.b16 %v900, %v899
      %v918 = vpack.c.b16 %v902, %v901
      %v919 = vpack.c.b16 %v904, %v903
      %v920 = vpack.c.b16 %v906, %v905
      %v921 = vpack.c.b16 %v908, %v907
      %v922 = vpack.c.b16 %v910, %v909
      %vm935 = vcmask 523264
      %v937 = vsel %vm935, %v768, 0
      %v940 = vsel %vm935, %v770, 0
      %v943 = vsel %vm935, %v772, 0
      %v946 = vsel %vm935, %v774, 0
      %v949 = vsel %vm935, %v776, 0
      %v952 = vsel %vm935, %v778, 0
      %v955 = vsel %vm935, %v780, 0
      %v958 = vsel %vm935, %v782, 0
      %v961 = vsel %vm935, %v784, 0
      %v964 = vsel %vm935, %v786, 0
      %v967 = vsel %vm935, %v788, 0
      %v970 = vsel %vm935, %v790, 0
      %v973 = vsel %vm935, %v792, 0
      %v976 = vsel %vm935, %v794, 0
      %v979 = vsel %vm935, %v796, 0
      %v982 = vsel %vm935, %v798, 0
      %v985 = vsel %vm935, %v800, 0
      %v988 = vsel %vm935, %v802, 0
      %v991 = vsel %vm935, %v804, 0
      %v994 = vsel %vm935, %v806, 0
      %v997 = vsel %vm935, %v808, 0
      %v1000 = vsel %vm935, %v810, 0
      %v1003 = vsel %vm935, %v812, 0
      %v1006 = vsel %vm935, %v814, 0
      %v1009 = vsel %vm935, %v816, 0
      %v1012 = vsel %vm935, %v818, 0
      %v1015 = vsel %vm935, %v820, 0
      %v1018 = vsel %vm935, %v822, 0
      %v1021 = vsel %vm935, %v824, 0
      %v1024 = vsel %vm935, %v826, 0
      %v1027 = vsel %vm935, %v828, 0
      %v1030 = vsel %vm935, %v830, 0
      %1032 = vmatpush.bf16.msra.mxu0 %v918
      %1033 = vmatpush.bf16.msra.mxu0 %v917
      %1034 = vmatpush.bf16.msra.mxu0 %v916
      %1035 = vmatpush.bf16.msra.mxu0 %v915
      %1036 = vmatpush.bf16.msra.mxu0 %v914
      %1037 = vmatpush.bf16.msra.mxu0 %v913
      %1038 = vmatpush.bf16.msra.mxu0 %v912
      %1039 = vmatpush.bf16.msra.mxu0 %v911
      %1040 = vmatmul.bf16.gmra.mxu0 %v767
      %v1041 = vpop.f32.mrf.mxu0
      %v1042 = vadd.f32 %v573, %v1041
      %v1043 = vpop.f32.mrf.mxu0
      %v1044 = vadd.f32 %v573, %v1043
      %1045 = vmatmul.bf16.gmra.mxu0 %v769
      %v1046 = vpop.f32.mrf.mxu0
      %v1047 = vadd.f32 %v573, %v1046
      %v1048 = vpop.f32.mrf.mxu0
      %v1049 = vadd.f32 %v573, %v1048
      %1050 = vmatmul.bf16.gmra.mxu0 %v771
      %v1051 = vpop.f32.mrf.mxu0
      %v1052 = vadd.f32 %v573, %v1051
      %v1053 = vpop.f32.mrf.mxu0
      %v1054 = vadd.f32 %v573, %v1053
      %1055 = vmatmul.bf16.gmra.mxu0 %v773
      %v1056 = vpop.f32.mrf.mxu0
      %v1057 = vadd.f32 %v573, %v1056
      %v1058 = vpop.f32.mrf.mxu0
      %v1059 = vadd.f32 %v573, %v1058
      %1060 = vmatmul.bf16.gmra.mxu0 %v775
      %v1061 = vpop.f32.mrf.mxu0
      %v1062 = vadd.f32 %v573, %v1061
      %v1063 = vpop.f32.mrf.mxu0
      %v1064 = vadd.f32 %v573, %v1063
      %1065 = vmatmul.bf16.gmra.mxu0 %v777
      %v1066 = vpop.f32.mrf.mxu0
      %v1067 = vadd.f32 %v573, %v1066
      %v1068 = vpop.f32.mrf.mxu0
      %v1069 = vadd.f32 %v573, %v1068
      %1070 = vmatmul.bf16.gmra.mxu0 %v779
      %v1071 = vpop.f32.mrf.mxu0
      %v1072 = vadd.f32 %v573, %v1071
      %v1073 = vpop.f32.mrf.mxu0
      %v1074 = vadd.f32 %v573, %v1073
      %1075 = vmatmul.bf16.gmra.mxu0 %v781
      %v1076 = vpop.f32.mrf.mxu0
      %v1077 = vadd.f32 %v573, %v1076
      %v1078 = vpop.f32.mrf.mxu0
      %v1079 = vadd.f32 %v573, %v1078
      %1080 = vmatmul.bf16.gmra.mxu0 %v783
      %v1081 = vpop.f32.mrf.mxu0
      %v1082 = vadd.f32 %v573, %v1081
      %v1083 = vpop.f32.mrf.mxu0
      %v1084 = vadd.f32 %v573, %v1083
      %1085 = vmatmul.bf16.gmra.mxu0 %v785
      %v1086 = vpop.f32.mrf.mxu0
      %v1087 = vadd.f32 %v573, %v1086
      %v1088 = vpop.f32.mrf.mxu0
      %v1089 = vadd.f32 %v573, %v1088
      %1090 = vmatmul.bf16.gmra.mxu0 %v787
      %v1091 = vpop.f32.mrf.mxu0
      %v1092 = vadd.f32 %v573, %v1091
      %v1093 = vpop.f32.mrf.mxu0
      %v1094 = vadd.f32 %v573, %v1093
      %1095 = vmatmul.bf16.gmra.mxu0 %v789
      %v1096 = vpop.f32.mrf.mxu0
      %v1097 = vadd.f32 %v573, %v1096
      %v1098 = vpop.f32.mrf.mxu0
      %v1099 = vadd.f32 %v573, %v1098
      %1100 = vmatmul.bf16.gmra.mxu0 %v791
      %v1101 = vpop.f32.mrf.mxu0
      %v1102 = vadd.f32 %v573, %v1101
      %v1103 = vpop.f32.mrf.mxu0
      %v1104 = vadd.f32 %v573, %v1103
      %1105 = vmatmul.bf16.gmra.mxu0 %v793
      %v1106 = vpop.f32.mrf.mxu0
      %v1107 = vadd.f32 %v573, %v1106
      %v1108 = vpop.f32.mrf.mxu0
      %v1109 = vadd.f32 %v573, %v1108
      %1110 = vmatmul.bf16.gmra.mxu0 %v795
      %v1111 = vpop.f32.mrf.mxu0
      %v1112 = vadd.f32 %v573, %v1111
      %v1113 = vpop.f32.mrf.mxu0
      %v1114 = vadd.f32 %v573, %v1113
      %1115 = vmatmul.bf16.gmra.mxu0 %v797
      %v1116 = vpop.f32.mrf.mxu0
      %v1117 = vadd.f32 %v573, %v1116
      %v1118 = vpop.f32.mrf.mxu0
      %v1119 = vadd.f32 %v573, %v1118
      %1120 = vmatmul.bf16.gmra.mxu0 %v799
      %v1121 = vpop.f32.mrf.mxu0
      %v1122 = vadd.f32 %v573, %v1121
      %v1123 = vpop.f32.mrf.mxu0
      %v1124 = vadd.f32 %v573, %v1123
      %1125 = vmatmul.bf16.gmra.mxu0 %v801
      %v1126 = vpop.f32.mrf.mxu0
      %v1127 = vadd.f32 %v573, %v1126
      %v1128 = vpop.f32.mrf.mxu0
      %v1129 = vadd.f32 %v573, %v1128
      %1130 = vmatmul.bf16.gmra.mxu0 %v803
      %v1131 = vpop.f32.mrf.mxu0
      %v1132 = vadd.f32 %v573, %v1131
      %v1133 = vpop.f32.mrf.mxu0
      %v1134 = vadd.f32 %v573, %v1133
      %1135 = vmatmul.bf16.gmra.mxu0 %v805
      %v1136 = vpop.f32.mrf.mxu0
      %v1137 = vadd.f32 %v573, %v1136
      %v1138 = vpop.f32.mrf.mxu0
      %v1139 = vadd.f32 %v573, %v1138
      %1140 = vmatmul.bf16.gmra.mxu0 %v807
      %v1141 = vpop.f32.mrf.mxu0
      %v1142 = vadd.f32 %v573, %v1141
      %v1143 = vpop.f32.mrf.mxu0
      %v1144 = vadd.f32 %v573, %v1143
      %1145 = vmatmul.bf16.gmra.mxu0 %v809
      %v1146 = vpop.f32.mrf.mxu0
      %v1147 = vadd.f32 %v573, %v1146
      %v1148 = vpop.f32.mrf.mxu0
      %v1149 = vadd.f32 %v573, %v1148
      %1150 = vmatmul.bf16.gmra.mxu0 %v811
      %v1151 = vpop.f32.mrf.mxu0
      %v1152 = vadd.f32 %v573, %v1151
      %v1153 = vpop.f32.mrf.mxu0
      %v1154 = vadd.f32 %v573, %v1153
      %1155 = vmatmul.bf16.gmra.mxu0 %v813
      %v1156 = vpop.f32.mrf.mxu0
      %v1157 = vadd.f32 %v573, %v1156
      %v1158 = vpop.f32.mrf.mxu0
      %v1159 = vadd.f32 %v573, %v1158
      %1160 = vmatmul.bf16.gmra.mxu0 %v815
      %v1161 = vpop.f32.mrf.mxu0
      %v1162 = vadd.f32 %v573, %v1161
      %v1163 = vpop.f32.mrf.mxu0
      %v1164 = vadd.f32 %v573, %v1163
      %1165 = vmatmul.bf16.gmra.mxu0 %v817
      %v1166 = vpop.f32.mrf.mxu0
      %v1167 = vadd.f32 %v573, %v1166
      %v1168 = vpop.f32.mrf.mxu0
      %v1169 = vadd.f32 %v573, %v1168
      %1170 = vmatmul.bf16.gmra.mxu0 %v819
      %v1171 = vpop.f32.mrf.mxu0
      %v1172 = vadd.f32 %v573, %v1171
      %v1173 = vpop.f32.mrf.mxu0
      %v1174 = vadd.f32 %v573, %v1173
      %1175 = vmatmul.bf16.gmra.mxu0 %v821
      %v1176 = vpop.f32.mrf.mxu0
      %v1177 = vadd.f32 %v573, %v1176
      %v1178 = vpop.f32.mrf.mxu0
      %v1179 = vadd.f32 %v573, %v1178
      %1180 = vmatmul.bf16.gmra.mxu0 %v823
      %v1181 = vpop.f32.mrf.mxu0
      %v1182 = vadd.f32 %v573, %v1181
      %v1183 = vpop.f32.mrf.mxu0
      %v1184 = vadd.f32 %v573, %v1183
      %1185 = vmatmul.bf16.gmra.mxu0 %v825
      %v1186 = vpop.f32.mrf.mxu0
      %v1187 = vadd.f32 %v573, %v1186
      %v1188 = vpop.f32.mrf.mxu0
      %v1189 = vadd.f32 %v573, %v1188
      %1190 = vmatmul.bf16.gmra.mxu0 %v827
      %v1191 = vpop.f32.mrf.mxu0
      %v1192 = vadd.f32 %v573, %v1191
      %v1193 = vpop.f32.mrf.mxu0
      %v1194 = vadd.f32 %v573, %v1193
      %1195 = vmatmul.bf16.gmra.mxu0 %v829
      %v1196 = vpop.f32.mrf.mxu0
      %v1197 = vadd.f32 %v573, %v1196
      %v1198 = vpop.f32.mrf.mxu0
      %v1199 = vadd.f32 %v573, %v1198
      %1200 = vdwg.mxu0
      %1201 = vmatpush.bf16.msra.mxu0 0
      %1202 = vmatpush.bf16.msra.mxu0 0
      %1203 = vmatpush.bf16.msra.mxu0 0
      %1204 = vmatpush.bf16.msra.mxu0 0
      %1205 = vmatpush.bf16.msra.mxu0 %v922
      %1206 = vmatpush.bf16.msra.mxu0 %v921
      %1207 = vmatpush.bf16.msra.mxu0 %v920
      %1208 = vmatpush.bf16.msra.mxu0 %v919
      %1209 = vmatmul.bf16.gmra.mxu0 %v937
      %v1210 = vpop.f32.mrf.mxu0
      %v1211 = vadd.f32 %v1042, %v1210
      %v1212 = vpop.f32.mrf.mxu0
      %v1213 = vadd.f32 %v1044, %v1212
      %1214 = vmatmul.bf16.gmra.mxu0 %v940
      %v1215 = vpop.f32.mrf.mxu0
      %v1216 = vadd.f32 %v1047, %v1215
      %v1217 = vpop.f32.mrf.mxu0
      %v1218 = vadd.f32 %v1049, %v1217
      %1219 = vmatmul.bf16.gmra.mxu0 %v943
      %v1220 = vpop.f32.mrf.mxu0
      %v1221 = vadd.f32 %v1052, %v1220
      %v1222 = vpop.f32.mrf.mxu0
      %v1223 = vadd.f32 %v1054, %v1222
      %1224 = vmatmul.bf16.gmra.mxu0 %v946
      %v1225 = vpop.f32.mrf.mxu0
      %v1226 = vadd.f32 %v1057, %v1225
      %v1227 = vpop.f32.mrf.mxu0
      %v1228 = vadd.f32 %v1059, %v1227
      %1229 = vmatmul.bf16.gmra.mxu0 %v949
      %v1230 = vpop.f32.mrf.mxu0
      %v1231 = vadd.f32 %v1062, %v1230
      %v1232 = vpop.f32.mrf.mxu0
      %v1233 = vadd.f32 %v1064, %v1232
      %1234 = vmatmul.bf16.gmra.mxu0 %v952
      %v1235 = vpop.f32.mrf.mxu0
      %v1236 = vadd.f32 %v1067, %v1235
      %v1237 = vpop.f32.mrf.mxu0
      %v1238 = vadd.f32 %v1069, %v1237
      %1239 = vmatmul.bf16.gmra.mxu0 %v955
      %v1240 = vpop.f32.mrf.mxu0
      %v1241 = vadd.f32 %v1072, %v1240
      %v1242 = vpop.f32.mrf.mxu0
      %v1243 = vadd.f32 %v1074, %v1242
      %1244 = vmatmul.bf16.gmra.mxu0 %v958
      %v1245 = vpop.f32.mrf.mxu0
      %v1246 = vadd.f32 %v1077, %v1245
      %v1247 = vpop.f32.mrf.mxu0
      %v1248 = vadd.f32 %v1079, %v1247
      %1249 = vmatmul.bf16.gmra.mxu0 %v961
      %v1250 = vpop.f32.mrf.mxu0
      %v1251 = vadd.f32 %v1082, %v1250
      %v1252 = vpop.f32.mrf.mxu0
      %v1253 = vadd.f32 %v1084, %v1252
      %1254 = vmatmul.bf16.gmra.mxu0 %v964
      %v1255 = vpop.f32.mrf.mxu0
      %v1256 = vadd.f32 %v1087, %v1255
      %v1257 = vpop.f32.mrf.mxu0
      %v1258 = vadd.f32 %v1089, %v1257
      %1259 = vmatmul.bf16.gmra.mxu0 %v967
      %v1260 = vpop.f32.mrf.mxu0
      %v1261 = vadd.f32 %v1092, %v1260
      %v1262 = vpop.f32.mrf.mxu0
      %v1263 = vadd.f32 %v1094, %v1262
      %1264 = vmatmul.bf16.gmra.mxu0 %v970
      %v1265 = vpop.f32.mrf.mxu0
      %v1266 = vadd.f32 %v1097, %v1265
      %v1267 = vpop.f32.mrf.mxu0
      %v1268 = vadd.f32 %v1099, %v1267
      %1269 = vmatmul.bf16.gmra.mxu0 %v973
      %v1270 = vpop.f32.mrf.mxu0
      %v1271 = vadd.f32 %v1102, %v1270
      %v1272 = vpop.f32.mrf.mxu0
      %v1273 = vadd.f32 %v1104, %v1272
      %1274 = vmatmul.bf16.gmra.mxu0 %v976
      %v1275 = vpop.f32.mrf.mxu0
      %v1276 = vadd.f32 %v1107, %v1275
      %v1277 = vpop.f32.mrf.mxu0
      %v1278 = vadd.f32 %v1109, %v1277
      %1279 = vmatmul.bf16.gmra.mxu0 %v979
      %v1280 = vpop.f32.mrf.mxu0
      %v1281 = vadd.f32 %v1112, %v1280
      %v1282 = vpop.f32.mrf.mxu0
      %v1283 = vadd.f32 %v1114, %v1282
      %1284 = vmatmul.bf16.gmra.mxu0 %v982
      %v1285 = vpop.f32.mrf.mxu0
      %v1286 = vadd.f32 %v1117, %v1285
      %v1287 = vpop.f32.mrf.mxu0
      %v1288 = vadd.f32 %v1119, %v1287
      %1289 = vmatmul.bf16.gmra.mxu0 %v985
      %v1290 = vpop.f32.mrf.mxu0
      %v1291 = vadd.f32 %v1122, %v1290
      %v1292 = vpop.f32.mrf.mxu0
      %v1293 = vadd.f32 %v1124, %v1292
      %1294 = vmatmul.bf16.gmra.mxu0 %v988
      %v1295 = vpop.f32.mrf.mxu0
      %v1296 = vadd.f32 %v1127, %v1295
      %v1297 = vpop.f32.mrf.mxu0
      %v1298 = vadd.f32 %v1129, %v1297
      %1299 = vmatmul.bf16.gmra.mxu0 %v991
      %v1300 = vpop.f32.mrf.mxu0
      %v1301 = vadd.f32 %v1132, %v1300
      %v1302 = vpop.f32.mrf.mxu0
      %v1303 = vadd.f32 %v1134, %v1302
      %1304 = vmatmul.bf16.gmra.mxu0 %v994
      %v1305 = vpop.f32.mrf.mxu0
      %v1306 = vadd.f32 %v1137, %v1305
      %v1307 = vpop.f32.mrf.mxu0
      %v1308 = vadd.f32 %v1139, %v1307
      %1309 = vmatmul.bf16.gmra.mxu0 %v997
      %v1310 = vpop.f32.mrf.mxu0
      %v1311 = vadd.f32 %v1142, %v1310
      %v1312 = vpop.f32.mrf.mxu0
      %v1313 = vadd.f32 %v1144, %v1312
      %1314 = vmatmul.bf16.gmra.mxu0 %v1000
      %v1315 = vpop.f32.mrf.mxu0
      %v1316 = vadd.f32 %v1147, %v1315
      %v1317 = vpop.f32.mrf.mxu0
      %v1318 = vadd.f32 %v1149, %v1317
      %1319 = vmatmul.bf16.gmra.mxu0 %v1003
      %v1320 = vpop.f32.mrf.mxu0
      %v1321 = vadd.f32 %v1152, %v1320
      %v1322 = vpop.f32.mrf.mxu0
      %v1323 = vadd.f32 %v1154, %v1322
      %1324 = vmatmul.bf16.gmra.mxu0 %v1006
      %v1325 = vpop.f32.mrf.mxu0
      %v1326 = vadd.f32 %v1157, %v1325
      %v1327 = vpop.f32.mrf.mxu0
      %v1328 = vadd.f32 %v1159, %v1327
      %1329 = vmatmul.bf16.gmra.mxu0 %v1009
      %v1330 = vpop.f32.mrf.mxu0
      %v1331 = vadd.f32 %v1162, %v1330
      %v1332 = vpop.f32.mrf.mxu0
      %v1333 = vadd.f32 %v1164, %v1332
      %1334 = vmatmul.bf16.gmra.mxu0 %v1012
      %v1335 = vpop.f32.mrf.mxu0
      %v1336 = vadd.f32 %v1167, %v1335
      %v1337 = vpop.f32.mrf.mxu0
      %v1338 = vadd.f32 %v1169, %v1337
      %1339 = vmatmul.bf16.gmra.mxu0 %v1015
      %v1340 = vpop.f32.mrf.mxu0
      %v1341 = vadd.f32 %v1172, %v1340
      %v1342 = vpop.f32.mrf.mxu0
      %v1343 = vadd.f32 %v1174, %v1342
      %1344 = vmatmul.bf16.gmra.mxu0 %v1018
      %v1345 = vpop.f32.mrf.mxu0
      %v1346 = vadd.f32 %v1177, %v1345
      %v1347 = vpop.f32.mrf.mxu0
      %v1348 = vadd.f32 %v1179, %v1347
      %1349 = vmatmul.bf16.gmra.mxu0 %v1021
      %v1350 = vpop.f32.mrf.mxu0
      %v1351 = vadd.f32 %v1182, %v1350
      %v1352 = vpop.f32.mrf.mxu0
      %v1353 = vadd.f32 %v1184, %v1352
      %1354 = vmatmul.bf16.gmra.mxu0 %v1024
      %v1355 = vpop.f32.mrf.mxu0
      %v1356 = vadd.f32 %v1187, %v1355
      %v1357 = vpop.f32.mrf.mxu0
      %v1358 = vadd.f32 %v1189, %v1357
      %1359 = vmatmul.bf16.gmra.mxu0 %v1027
      %v1360 = vpop.f32.mrf.mxu0
      %v1361 = vadd.f32 %v1192, %v1360
      %v1362 = vpop.f32.mrf.mxu0
      %v1363 = vadd.f32 %v1194, %v1362
      %1364 = vmatmul.bf16.gmra.mxu0 %v1030
      %v1365 = vpop.f32.mrf.mxu0
      %v1366 = vadd.f32 %v1197, %v1365
      %v1367 = vpop.f32.mrf.mxu0
      %v1368 = vadd.f32 %v1199, %v1367
      %1369 = vdwg.mxu0
      %v1370 = vmax.f32 %v1211, 0.0
      %v1371 = vmax.f32 %v1213, 0.0
      %v1372 = vmax.f32 %v1216, 0.0
      %v1373 = vmax.f32 %v1218, 0.0
      %v1374 = vmax.f32 %v1221, 0.0
      %v1375 = vmax.f32 %v1223, 0.0
      %v1376 = vmax.f32 %v1226, 0.0
      %v1377 = vmax.f32 %v1228, 0.0
      %v1378 = vmax.f32 %v1231, 0.0
      %v1379 = vmax.f32 %v1233, 0.0
      %v1380 = vmax.f32 %v1236, 0.0
      %v1381 = vmax.f32 %v1238, 0.0
      %v1382 = vmax.f32 %v1241, 0.0
      %v1383 = vmax.f32 %v1243, 0.0
      %v1384 = vmax.f32 %v1246, 0.0
      %v1385 = vmax.f32 %v1248, 0.0
      %v1386 = vmax.f32 %v1251, 0.0
      %v1387 = vmax.f32 %v1253, 0.0
      %v1388 = vmax.f32 %v1256, 0.0
      %v1389 = vmax.f32 %v1258, 0.0
      %v1390 = vmax.f32 %v1261, 0.0
      %v1391 = vmax.f32 %v1263, 0.0
      %v1392 = vmax.f32 %v1266, 0.0
      %v1393 = vmax.f32 %v1268, 0.0
      %v1394 = vmax.f32 %v1271, 0.0
      %v1395 = vmax.f32 %v1273, 0.0
      %v1396 = vmax.f32 %v1276, 0.0
      %v1397 = vmax.f32 %v1278, 0.0
      %v1398 = vmax.f32 %v1281, 0.0
      %v1399 = vmax.f32 %v1283, 0.0
      %v1400 = vmax.f32 %v1286, 0.0
      %v1401 = vmax.f32 %v1288, 0.0
      %v1402 = vmax.f32 %v1291, 0.0
      %v1403 = vmax.f32 %v1293, 0.0
      %v1404 = vmax.f32 %v1296, 0.0
      %v1405 = vmax.f32 %v1298, 0.0
      %v1406 = vmax.f32 %v1301, 0.0
      %v1407 = vmax.f32 %v1303, 0.0
      %v1408 = vmax.f32 %v1306, 0.0
      %v1409 = vmax.f32 %v1308, 0.0
      %v1410 = vmax.f32 %v1311, 0.0
      %v1411 = vmax.f32 %v1313, 0.0
      %v1412 = vmax.f32 %v1316, 0.0
      %v1413 = vmax.f32 %v1318, 0.0
      %v1414 = vmax.f32 %v1321, 0.0
      %v1415 = vmax.f32 %v1323, 0.0
      %v1416 = vmax.f32 %v1326, 0.0
      %v1417 = vmax.f32 %v1328, 0.0
      %v1418 = vmax.f32 %v1331, 0.0
      %v1419 = vmax.f32 %v1333, 0.0
      %v1420 = vmax.f32 %v1336, 0.0
      %v1421 = vmax.f32 %v1338, 0.0
      %v1422 = vmax.f32 %v1341, 0.0
      %v1423 = vmax.f32 %v1343, 0.0
      %v1424 = vmax.f32 %v1346, 0.0
      %v1425 = vmax.f32 %v1348, 0.0
      %v1426 = vmax.f32 %v1351, 0.0
      %v1427 = vmax.f32 %v1353, 0.0
      %v1428 = vmax.f32 %v1356, 0.0
      %v1429 = vmax.f32 %v1358, 0.0
      %v1430 = vmax.f32 %v1361, 0.0
      %v1431 = vmax.f32 %v1363, 0.0
      %v1432 = vmax.f32 %v1366, 0.0
      %v1433 = vmax.f32 %v1368, 0.0
      %s1434 = smul.u32 %s474, 512
      %v1435 = vlaneseq
      %v1436 = vshrl.u32 %v1435, 7
      %v1437 = vadd.s32 %v1436, 8
      %v1438 = vadd.s32 %v1436, 16
      %v1439 = vadd.s32 %v1436, 24
      %v1440 = vadd.s32 %v1436, 32
      %v1441 = vadd.s32 %v1436, 40
      %v1442 = vadd.s32 %v1436, 48
      %v1443 = vadd.s32 %v1436, 56
      %v1444 = vadd.s32 %v1436, 64
      %v1445 = vadd.s32 %v1436, 72
      %v1446 = vadd.s32 %v1436, 80
      %v1447 = vadd.s32 %v1436, 88
      %v1448 = vadd.s32 %v1436, 96
      %v1449 = vadd.s32 %v1436, 104
      %v1450 = vadd.s32 %v1436, 112
      %v1451 = vadd.s32 %v1436, 120
      %v1452 = vadd.s32 %v1436, 128
      %v1453 = vadd.s32 %v1436, 136
      %v1454 = vadd.s32 %v1436, 144
      %v1455 = vadd.s32 %v1436, 152
      %v1456 = vadd.s32 %v1436, 160
      %v1457 = vadd.s32 %v1436, 168
      %v1458 = vadd.s32 %v1436, 176
      %v1459 = vadd.s32 %v1436, 184
      %v1460 = vadd.s32 %v1436, 192
      %v1461 = vadd.s32 %v1436, 200
      %v1462 = vadd.s32 %v1436, 208
      %v1463 = vadd.s32 %v1436, 216
      %v1464 = vadd.s32 %v1436, 224
      %v1465 = vadd.s32 %v1436, 232
      %v1466 = vadd.s32 %v1436, 240
      %v1467 = vadd.s32 %v1436, 248
      %v1468 = vadd.s32 %v1436, 256
      %v1469 = vadd.s32 %v1436, 264
      %v1470 = vadd.s32 %v1436, 272
      %v1471 = vadd.s32 %v1436, 280
      %v1472 = vadd.s32 %v1436, 288
      %v1473 = vadd.s32 %v1436, 296
      %v1474 = vadd.s32 %v1436, 304
      %v1475 = vadd.s32 %v1436, 312
      %v1476 = vadd.s32 %v1436, 320
      %v1477 = vadd.s32 %v1436, 328
      %v1478 = vadd.s32 %v1436, 336
      %v1479 = vadd.s32 %v1436, 344
      %v1480 = vadd.s32 %v1436, 352
      %v1481 = vadd.s32 %v1436, 360
      %v1482 = vadd.s32 %v1436, 368
      %v1483 = vadd.s32 %v1436, 376
      %v1484 = vadd.s32 %v1436, 384
      %v1485 = vadd.s32 %v1436, 392
      %v1486 = vadd.s32 %v1436, 400
      %v1487 = vadd.s32 %v1436, 408
      %v1488 = vadd.s32 %v1436, 416
      %v1489 = vadd.s32 %v1436, 424
      %v1490 = vadd.s32 %v1436, 432
      %v1491 = vadd.s32 %v1436, 440
      %v1492 = vadd.s32 %v1436, 448
      %v1493 = vadd.s32 %v1436, 456
      %v1494 = vadd.s32 %v1436, 464
      %v1495 = vadd.s32 %v1436, 472
      %v1496 = vadd.s32 %v1436, 480
      %v1497 = vadd.s32 %v1436, 488
      %v1498 = vadd.s32 %v1436, 496
      %v1499 = vadd.s32 %v1436, 504
      %v1500 = vstv %s1434
      %v1501 = vadd.s32 %v1500, %v1436
      %v1502 = vadd.s32 %v1500, %v1437
      %v1503 = vadd.s32 %v1500, %v1438
      %v1504 = vadd.s32 %v1500, %v1439
      %v1505 = vadd.s32 %v1500, %v1440
      %v1506 = vadd.s32 %v1500, %v1441
      %v1507 = vadd.s32 %v1500, %v1442
      %v1508 = vadd.s32 %v1500, %v1443
      %v1509 = vadd.s32 %v1500, %v1444
      %v1510 = vadd.s32 %v1500, %v1445
      %v1511 = vadd.s32 %v1500, %v1446
      %v1512 = vadd.s32 %v1500, %v1447
      %v1513 = vadd.s32 %v1500, %v1448
      %v1514 = vadd.s32 %v1500, %v1449
      %v1515 = vadd.s32 %v1500, %v1450
      %v1516 = vadd.s32 %v1500, %v1451
      %v1517 = vadd.s32 %v1500, %v1452
      %v1518 = vadd.s32 %v1500, %v1453
      %v1519 = vadd.s32 %v1500, %v1454
      %v1520 = vadd.s32 %v1500, %v1455
      %v1521 = vadd.s32 %v1500, %v1456
      %v1522 = vadd.s32 %v1500, %v1457
      %v1523 = vadd.s32 %v1500, %v1458
      %v1524 = vadd.s32 %v1500, %v1459
      %v1525 = vadd.s32 %v1500, %v1460
      %v1526 = vadd.s32 %v1500, %v1461
      %v1527 = vadd.s32 %v1500, %v1462
      %v1528 = vadd.s32 %v1500, %v1463
      %v1529 = vadd.s32 %v1500, %v1464
      %v1530 = vadd.s32 %v1500, %v1465
      %v1531 = vadd.s32 %v1500, %v1466
      %v1532 = vadd.s32 %v1500, %v1467
      %v1533 = vadd.s32 %v1500, %v1468
      %v1534 = vadd.s32 %v1500, %v1469
      %v1535 = vadd.s32 %v1500, %v1470
      %v1536 = vadd.s32 %v1500, %v1471
      %v1537 = vadd.s32 %v1500, %v1472
      %v1538 = vadd.s32 %v1500, %v1473
      %v1539 = vadd.s32 %v1500, %v1474
      %v1540 = vadd.s32 %v1500, %v1475
      %v1541 = vadd.s32 %v1500, %v1476
      %v1542 = vadd.s32 %v1500, %v1477
      %v1543 = vadd.s32 %v1500, %v1478
      %v1544 = vadd.s32 %v1500, %v1479
      %v1545 = vadd.s32 %v1500, %v1480
      %v1546 = vadd.s32 %v1500, %v1481
      %v1547 = vadd.s32 %v1500, %v1482
      %v1548 = vadd.s32 %v1500, %v1483
      %v1549 = vadd.s32 %v1500, %v1484
      %v1550 = vadd.s32 %v1500, %v1485
      %v1551 = vadd.s32 %v1500, %v1486
      %v1552 = vadd.s32 %v1500, %v1487
      %v1553 = vadd.s32 %v1500, %v1488
      %v1554 = vadd.s32 %v1500, %v1489
      %v1555 = vadd.s32 %v1500, %v1490
      %v1556 = vadd.s32 %v1500, %v1491
      %v1557 = vadd.s32 %v1500, %v1492
      %v1558 = vadd.s32 %v1500, %v1493
      %v1559 = vadd.s32 %v1500, %v1494
      %v1560 = vadd.s32 %v1500, %v1495
      %v1561 = vadd.s32 %v1500, %v1496
      %v1562 = vadd.s32 %v1500, %v1497
      %v1563 = vadd.s32 %v1500, %v1498
      %v1564 = vadd.s32 %v1500, %v1499
      %vm1565 = vcmp.lt.s32.totalorder %v1501, 2500
      %vm1566 = vcmp.lt.s32.totalorder %v1502, 2500
      %vm1567 = vcmp.lt.s32.totalorder %v1503, 2500
      %vm1568 = vcmp.lt.s32.totalorder %v1504, 2500
      %vm1569 = vcmp.lt.s32.totalorder %v1505, 2500
      %vm1570 = vcmp.lt.s32.totalorder %v1506, 2500
      %vm1571 = vcmp.lt.s32.totalorder %v1507, 2500
      %vm1572 = vcmp.lt.s32.totalorder %v1508, 2500
      %vm1573 = vcmp.lt.s32.totalorder %v1509, 2500
      %vm1574 = vcmp.lt.s32.totalorder %v1510, 2500
      %vm1575 = vcmp.lt.s32.totalorder %v1511, 2500
      %vm1576 = vcmp.lt.s32.totalorder %v1512, 2500
      %vm1577 = vcmp.lt.s32.totalorder %v1513, 2500
      %vm1578 = vcmp.lt.s32.totalorder %v1514, 2500
      %vm1579 = vcmp.lt.s32.totalorder %v1515, 2500
      %vm1580 = vcmp.lt.s32.totalorder %v1516, 2500
      %vm1581 = vcmp.lt.s32.totalorder %v1517, 2500
      %vm1582 = vcmp.lt.s32.totalorder %v1518, 2500
      %vm1583 = vcmp.lt.s32.totalorder %v1519, 2500
      %vm1584 = vcmp.lt.s32.totalorder %v1520, 2500
      %vm1585 = vcmp.lt.s32.totalorder %v1521, 2500
      %vm1586 = vcmp.lt.s32.totalorder %v1522, 2500
      %vm1587 = vcmp.lt.s32.totalorder %v1523, 2500
      %vm1588 = vcmp.lt.s32.totalorder %v1524, 2500
      %vm1589 = vcmp.lt.s32.totalorder %v1525, 2500
      %vm1590 = vcmp.lt.s32.totalorder %v1526, 2500
      %vm1591 = vcmp.lt.s32.totalorder %v1527, 2500
      %vm1592 = vcmp.lt.s32.totalorder %v1528, 2500
      %vm1593 = vcmp.lt.s32.totalorder %v1529, 2500
      %vm1594 = vcmp.lt.s32.totalorder %v1530, 2500
      %vm1595 = vcmp.lt.s32.totalorder %v1531, 2500
      %vm1596 = vcmp.lt.s32.totalorder %v1532, 2500
      %vm1597 = vcmp.lt.s32.totalorder %v1533, 2500
      %vm1598 = vcmp.lt.s32.totalorder %v1534, 2500
      %vm1599 = vcmp.lt.s32.totalorder %v1535, 2500
      %vm1600 = vcmp.lt.s32.totalorder %v1536, 2500
      %vm1601 = vcmp.lt.s32.totalorder %v1537, 2500
      %vm1602 = vcmp.lt.s32.totalorder %v1538, 2500
      %vm1603 = vcmp.lt.s32.totalorder %v1539, 2500
      %vm1604 = vcmp.lt.s32.totalorder %v1540, 2500
      %vm1605 = vcmp.lt.s32.totalorder %v1541, 2500
      %vm1606 = vcmp.lt.s32.totalorder %v1542, 2500
      %vm1607 = vcmp.lt.s32.totalorder %v1543, 2500
      %vm1608 = vcmp.lt.s32.totalorder %v1544, 2500
      %vm1609 = vcmp.lt.s32.totalorder %v1545, 2500
      %vm1610 = vcmp.lt.s32.totalorder %v1546, 2500
      %vm1611 = vcmp.lt.s32.totalorder %v1547, 2500
      %vm1612 = vcmp.lt.s32.totalorder %v1548, 2500
      %vm1613 = vcmp.lt.s32.totalorder %v1549, 2500
      %vm1614 = vcmp.lt.s32.totalorder %v1550, 2500
      %vm1615 = vcmp.lt.s32.totalorder %v1551, 2500
      %vm1616 = vcmp.lt.s32.totalorder %v1552, 2500
      %vm1617 = vcmp.lt.s32.totalorder %v1553, 2500
      %vm1618 = vcmp.lt.s32.totalorder %v1554, 2500
      %vm1619 = vcmp.lt.s32.totalorder %v1555, 2500
      %vm1620 = vcmp.lt.s32.totalorder %v1556, 2500
      %vm1621 = vcmp.lt.s32.totalorder %v1557, 2500
      %vm1622 = vcmp.lt.s32.totalorder %v1558, 2500
      %vm1623 = vcmp.lt.s32.totalorder %v1559, 2500
      %vm1624 = vcmp.lt.s32.totalorder %v1560, 2500
      %vm1625 = vcmp.lt.s32.totalorder %v1561, 2500
      %vm1626 = vcmp.lt.s32.totalorder %v1562, 2500
      %vm1627 = vcmp.lt.s32.totalorder %v1563, 2500
      %vm1628 = vcmp.lt.s32.totalorder %v1564, 2500
      %v1629 = vsel %vm1565, 1, 0
      %v1630 = vsel %vm1566, 1, 0
      %v1631 = vsel %vm1567, 1, 0
      %v1632 = vsel %vm1568, 1, 0
      %v1633 = vsel %vm1569, 1, 0
      %v1634 = vsel %vm1570, 1, 0
      %v1635 = vsel %vm1571, 1, 0
      %v1636 = vsel %vm1572, 1, 0
      %v1637 = vsel %vm1573, 1, 0
      %v1638 = vsel %vm1574, 1, 0
      %v1639 = vsel %vm1575, 1, 0
      %v1640 = vsel %vm1576, 1, 0
      %v1641 = vsel %vm1577, 1, 0
      %v1642 = vsel %vm1578, 1, 0
      %v1643 = vsel %vm1579, 1, 0
      %v1644 = vsel %vm1580, 1, 0
      %v1645 = vsel %vm1581, 1, 0
      %v1646 = vsel %vm1582, 1, 0
      %v1647 = vsel %vm1583, 1, 0
      %v1648 = vsel %vm1584, 1, 0
      %v1649 = vsel %vm1585, 1, 0
      %v1650 = vsel %vm1586, 1, 0
      %v1651 = vsel %vm1587, 1, 0
      %v1652 = vsel %vm1588, 1, 0
      %v1653 = vsel %vm1589, 1, 0
      %v1654 = vsel %vm1590, 1, 0
      %v1655 = vsel %vm1591, 1, 0
      %v1656 = vsel %vm1592, 1, 0
      %v1657 = vsel %vm1593, 1, 0
      %v1658 = vsel %vm1594, 1, 0
      %v1659 = vsel %vm1595, 1, 0
      %v1660 = vsel %vm1596, 1, 0
      %v1661 = vsel %vm1597, 1, 0
      %v1662 = vsel %vm1598, 1, 0
      %v1663 = vsel %vm1599, 1, 0
      %v1664 = vsel %vm1600, 1, 0
      %v1665 = vsel %vm1601, 1, 0
      %v1666 = vsel %vm1602, 1, 0
      %v1667 = vsel %vm1603, 1, 0
      %v1668 = vsel %vm1604, 1, 0
      %v1669 = vsel %vm1605, 1, 0
      %v1670 = vsel %vm1606, 1, 0
      %v1671 = vsel %vm1607, 1, 0
      %v1672 = vsel %vm1608, 1, 0
      %v1673 = vsel %vm1609, 1, 0
      %v1674 = vsel %vm1610, 1, 0
      %v1675 = vsel %vm1611, 1, 0
      %v1676 = vsel %vm1612, 1, 0
      %v1677 = vsel %vm1613, 1, 0
      %v1678 = vsel %vm1614, 1, 0
      %v1679 = vsel %vm1615, 1, 0
      %v1680 = vsel %vm1616, 1, 0
      %v1681 = vsel %vm1617, 1, 0
      %v1682 = vsel %vm1618, 1, 0
      %v1683 = vsel %vm1619, 1, 0
      %v1684 = vsel %vm1620, 1, 0
      %v1685 = vsel %vm1621, 1, 0
      %v1686 = vsel %vm1622, 1, 0
      %v1687 = vsel %vm1623, 1, 0
      %v1688 = vsel %vm1624, 1, 0
      %v1689 = vsel %vm1625, 1, 0
      %v1690 = vsel %vm1626, 1, 0
      %v1691 = vsel %vm1627, 1, 0
      %v1692 = vsel %vm1628, 1, 0
      %vm1693 = vcmp.eq.s32.totalorder %v1629, 1
      %vm1694 = vcmp.eq.s32.totalorder %v1630, 1
      %vm1695 = vcmp.eq.s32.totalorder %v1631, 1
      %vm1696 = vcmp.eq.s32.totalorder %v1632, 1
      %vm1697 = vcmp.eq.s32.totalorder %v1633, 1
      %vm1698 = vcmp.eq.s32.totalorder %v1634, 1
      %vm1699 = vcmp.eq.s32.totalorder %v1635, 1
      %vm1700 = vcmp.eq.s32.totalorder %v1636, 1
      %vm1701 = vcmp.eq.s32.totalorder %v1637, 1
      %vm1702 = vcmp.eq.s32.totalorder %v1638, 1
      %vm1703 = vcmp.eq.s32.totalorder %v1639, 1
      %vm1704 = vcmp.eq.s32.totalorder %v1640, 1
      %vm1705 = vcmp.eq.s32.totalorder %v1641, 1
      %vm1706 = vcmp.eq.s32.totalorder %v1642, 1
      %vm1707 = vcmp.eq.s32.totalorder %v1643, 1
      %vm1708 = vcmp.eq.s32.totalorder %v1644, 1
      %vm1709 = vcmp.eq.s32.totalorder %v1645, 1
      %vm1710 = vcmp.eq.s32.totalorder %v1646, 1
      %vm1711 = vcmp.eq.s32.totalorder %v1647, 1
      %vm1712 = vcmp.eq.s32.totalorder %v1648, 1
      %vm1713 = vcmp.eq.s32.totalorder %v1649, 1
      %vm1714 = vcmp.eq.s32.totalorder %v1650, 1
      %vm1715 = vcmp.eq.s32.totalorder %v1651, 1
      %vm1716 = vcmp.eq.s32.totalorder %v1652, 1
      %vm1717 = vcmp.eq.s32.totalorder %v1653, 1
      %vm1718 = vcmp.eq.s32.totalorder %v1654, 1
      %vm1719 = vcmp.eq.s32.totalorder %v1655, 1
      %vm1720 = vcmp.eq.s32.totalorder %v1656, 1
      %vm1721 = vcmp.eq.s32.totalorder %v1657, 1
      %vm1722 = vcmp.eq.s32.totalorder %v1658, 1
      %vm1723 = vcmp.eq.s32.totalorder %v1659, 1
      %vm1724 = vcmp.eq.s32.totalorder %v1660, 1
      %vm1725 = vcmp.eq.s32.totalorder %v1661, 1
      %vm1726 = vcmp.eq.s32.totalorder %v1662, 1
      %vm1727 = vcmp.eq.s32.totalorder %v1663, 1
      %vm1728 = vcmp.eq.s32.totalorder %v1664, 1
      %vm1729 = vcmp.eq.s32.totalorder %v1665, 1
      %vm1730 = vcmp.eq.s32.totalorder %v1666, 1
      %vm1731 = vcmp.eq.s32.totalorder %v1667, 1
      %vm1732 = vcmp.eq.s32.totalorder %v1668, 1
      %vm1733 = vcmp.eq.s32.totalorder %v1669, 1
      %vm1734 = vcmp.eq.s32.totalorder %v1670, 1
      %vm1735 = vcmp.eq.s32.totalorder %v1671, 1
      %vm1736 = vcmp.eq.s32.totalorder %v1672, 1
      %vm1737 = vcmp.eq.s32.totalorder %v1673, 1
      %vm1738 = vcmp.eq.s32.totalorder %v1674, 1
      %vm1739 = vcmp.eq.s32.totalorder %v1675, 1
      %vm1740 = vcmp.eq.s32.totalorder %v1676, 1
      %vm1741 = vcmp.eq.s32.totalorder %v1677, 1
      %vm1742 = vcmp.eq.s32.totalorder %v1678, 1
      %vm1743 = vcmp.eq.s32.totalorder %v1679, 1
      %vm1744 = vcmp.eq.s32.totalorder %v1680, 1
      %vm1745 = vcmp.eq.s32.totalorder %v1681, 1
      %vm1746 = vcmp.eq.s32.totalorder %v1682, 1
      %vm1747 = vcmp.eq.s32.totalorder %v1683, 1
      %vm1748 = vcmp.eq.s32.totalorder %v1684, 1
      %vm1749 = vcmp.eq.s32.totalorder %v1685, 1
      %vm1750 = vcmp.eq.s32.totalorder %v1686, 1
      %vm1751 = vcmp.eq.s32.totalorder %v1687, 1
      %vm1752 = vcmp.eq.s32.totalorder %v1688, 1
      %vm1753 = vcmp.eq.s32.totalorder %v1689, 1
      %vm1754 = vcmp.eq.s32.totalorder %v1690, 1
      %vm1755 = vcmp.eq.s32.totalorder %v1691, 1
      %vm1756 = vcmp.eq.s32.totalorder %v1692, 1
      %v1757 = vsel %vm1693, %v1370, 0.0
      %v1758 = vsel %vm1694, %v1371, 0.0
      %v1759 = vsel %vm1695, %v1372, 0.0
      %v1760 = vsel %vm1696, %v1373, 0.0
      %v1761 = vsel %vm1697, %v1374, 0.0
      %v1762 = vsel %vm1698, %v1375, 0.0
      %v1763 = vsel %vm1699, %v1376, 0.0
      %v1764 = vsel %vm1700, %v1377, 0.0
      %v1765 = vsel %vm1701, %v1378, 0.0
      %v1766 = vsel %vm1702, %v1379, 0.0
      %v1767 = vsel %vm1703, %v1380, 0.0
      %v1768 = vsel %vm1704, %v1381, 0.0
      %v1769 = vsel %vm1705, %v1382, 0.0
      %v1770 = vsel %vm1706, %v1383, 0.0
      %v1771 = vsel %vm1707, %v1384, 0.0
      %v1772 = vsel %vm1708, %v1385, 0.0
      %v1773 = vsel %vm1709, %v1386, 0.0
      %v1774 = vsel %vm1710, %v1387, 0.0
      %v1775 = vsel %vm1711, %v1388, 0.0
      %v1776 = vsel %vm1712, %v1389, 0.0
      %v1777 = vsel %vm1713, %v1390, 0.0
      %v1778 = vsel %vm1714, %v1391, 0.0
      %v1779 = vsel %vm1715, %v1392, 0.0
      %v1780 = vsel %vm1716, %v1393, 0.0
      %v1781 = vsel %vm1717, %v1394, 0.0
      %v1782 = vsel %vm1718, %v1395, 0.0
      %v1783 = vsel %vm1719, %v1396, 0.0
      %v1784 = vsel %vm1720, %v1397, 0.0
      %v1785 = vsel %vm1721, %v1398, 0.0
      %v1786 = vsel %vm1722, %v1399, 0.0
      %v1787 = vsel %vm1723, %v1400, 0.0
      %v1788 = vsel %vm1724, %v1401, 0.0
      %v1789 = vsel %vm1725, %v1402, 0.0
      %v1790 = vsel %vm1726, %v1403, 0.0
      %v1791 = vsel %vm1727, %v1404, 0.0
      %v1792 = vsel %vm1728, %v1405, 0.0
      %v1793 = vsel %vm1729, %v1406, 0.0
      %v1794 = vsel %vm1730, %v1407, 0.0
      %v1795 = vsel %vm1731, %v1408, 0.0
      %v1796 = vsel %vm1732, %v1409, 0.0
      %v1797 = vsel %vm1733, %v1410, 0.0
      %v1798 = vsel %vm1734, %v1411, 0.0
      %v1799 = vsel %vm1735, %v1412, 0.0
      %v1800 = vsel %vm1736, %v1413, 0.0
      %v1801 = vsel %vm1737, %v1414, 0.0
      %v1802 = vsel %vm1738, %v1415, 0.0
      %v1803 = vsel %vm1739, %v1416, 0.0
      %v1804 = vsel %vm1740, %v1417, 0.0
      %v1805 = vsel %vm1741, %v1418, 0.0
      %v1806 = vsel %vm1742, %v1419, 0.0
      %v1807 = vsel %vm1743, %v1420, 0.0
      %v1808 = vsel %vm1744, %v1421, 0.0
      %v1809 = vsel %vm1745, %v1422, 0.0
      %v1810 = vsel %vm1746, %v1423, 0.0
      %v1811 = vsel %vm1747, %v1424, 0.0
      %v1812 = vsel %vm1748, %v1425, 0.0
      %v1813 = vsel %vm1749, %v1426, 0.0
      %v1814 = vsel %vm1750, %v1427, 0.0
      %v1815 = vsel %vm1751, %v1428, 0.0
      %v1816 = vsel %vm1752, %v1429, 0.0
      %v1817 = vsel %vm1753, %v1430, 0.0
      %v1818 = vsel %vm1754, %v1431, 0.0
      %v1819 = vsel %vm1755, %v1432, 0.0
      %v1820 = vsel %vm1756, %v1433, 0.0
      %v1821 = vpack.c.bf16 %v1758, %v1757
      %v1822 = vpack.c.bf16 %v1760, %v1759
      %v1823 = vpack.c.bf16 %v1762, %v1761
      %v1824 = vpack.c.bf16 %v1764, %v1763
      %v1825 = vpack.c.bf16 %v1766, %v1765
      %v1826 = vpack.c.bf16 %v1768, %v1767
      %v1827 = vpack.c.bf16 %v1770, %v1769
      %v1828 = vpack.c.bf16 %v1772, %v1771
      %v1829 = vpack.c.bf16 %v1774, %v1773
      %v1830 = vpack.c.bf16 %v1776, %v1775
      %v1831 = vpack.c.bf16 %v1778, %v1777
      %v1832 = vpack.c.bf16 %v1780, %v1779
      %v1833 = vpack.c.bf16 %v1782, %v1781
      %v1834 = vpack.c.bf16 %v1784, %v1783
      %v1835 = vpack.c.bf16 %v1786, %v1785
      %v1836 = vpack.c.bf16 %v1788, %v1787
      %v1837 = vpack.c.bf16 %v1790, %v1789
      %v1838 = vpack.c.bf16 %v1792, %v1791
      %v1839 = vpack.c.bf16 %v1794, %v1793
      %v1840 = vpack.c.bf16 %v1796, %v1795
      %v1841 = vpack.c.bf16 %v1798, %v1797
      %v1842 = vpack.c.bf16 %v1800, %v1799
      %v1843 = vpack.c.bf16 %v1802, %v1801
      %v1844 = vpack.c.bf16 %v1804, %v1803
      %v1845 = vpack.c.bf16 %v1806, %v1805
      %v1846 = vpack.c.bf16 %v1808, %v1807
      %v1847 = vpack.c.bf16 %v1810, %v1809
      %v1848 = vpack.c.bf16 %v1812, %v1811
      %v1849 = vpack.c.bf16 %v1814, %v1813
      %v1850 = vpack.c.bf16 %v1816, %v1815
      %v1851 = vpack.c.bf16 %v1818, %v1817
      %v1852 = vpack.c.bf16 %v1820, %v1819
      %v1853 = vld [vmem:[%s3] sm:$0xff]
      %v1854 = vld [vmem:[%s3 + $0x8] sm:$0xff]
      %v1855 = vld [vmem:[%s3 + $0x10] sm:$0xff]
      %v1856 = vld [vmem:[%s3 + $0x18] sm:$0xff]
      %v1857 = vld [vmem:[%s3 + $0x20] sm:$0xff]
      %v1858 = vld [vmem:[%s3 + $0x28] sm:$0xff]
      %v1859 = vld [vmem:[%s3 + $0x30] sm:$0xff]
      %v1860 = vld [vmem:[%s3 + $0x38] sm:$0xff]
      %v1861 = vld [vmem:[%s3 + $0x40] sm:$0xff]
      %v1862 = vld [vmem:[%s3 + $0x48] sm:$0xff]
      %v1863 = vld [vmem:[%s3 + $0x50] sm:$0xff]
      %v1864 = vld [vmem:[%s3 + $0x58] sm:$0xff]
      %v1865 = vld [vmem:[%s3 + $0x60] sm:$0xff]
      %v1866 = vld [vmem:[%s3 + $0x68] sm:$0xff]
      %v1867 = vld [vmem:[%s3 + $0x70] sm:$0xff]
      %v1868 = vld [vmem:[%s3 + $0x78] sm:$0xff]
      %v1869 = vld [vmem:[%s4] sm:$0x3]
      %v1871 = vperm.slane %v1869, 0
      %v1872 = vperm.slane %v1869, 1
      %v1891 = vunpack.c.l.b16 %v1853
      %v1892 = vunpack.c.h.b16 %v1853
      %v1893 = vunpack.c.l.b16 %v1854
      %v1894 = vunpack.c.h.b16 %v1854
      %v1895 = vunpack.c.l.b16 %v1855
      %v1896 = vunpack.c.h.b16 %v1855
      %v1897 = vunpack.c.l.b16 %v1856
      %v1898 = vunpack.c.h.b16 %v1856
      %v1899 = vunpack.c.l.b16 %v1857
      %v1900 = vunpack.c.h.b16 %v1857
      %v1901 = vunpack.c.l.b16 %v1858
      %v1902 = vunpack.c.h.b16 %v1858
      %v1903 = vunpack.c.l.b16 %v1859
      %v1904 = vunpack.c.h.b16 %v1859
      %v1905 = vunpack.c.l.b16 %v1860
      %v1906 = vunpack.c.h.b16 %v1860
      %v1907 = vunpack.c.l.b16 %v1861
      %v1908 = vunpack.c.h.b16 %v1861
      %v1909 = vunpack.c.l.b16 %v1862
      %v1910 = vunpack.c.h.b16 %v1862
      %v1911 = vunpack.c.l.b16 %v1863
      %v1912 = vunpack.c.h.b16 %v1863
      %v1913 = vunpack.c.l.b16 %v1864
      %v1914 = vunpack.c.h.b16 %v1864
      %v1915 = vunpack.c.l.b16 %v1865
      %v1916 = vunpack.c.h.b16 %v1865
      %v1917 = vunpack.c.l.b16 %v1866
      %v1918 = vunpack.c.h.b16 %v1866
      %v1919 = vunpack.c.l.b16 %v1867
      %v1920 = vunpack.c.h.b16 %v1867
      %v1921 = vunpack.c.l.b16 %v1868
      %v1922 = vunpack.c.h.b16 %v1868
      %v1923 = vpack.c.b16 %v1893, %v1891
      %v1924 = vpack.c.b16 %v1894, %v1892
      %v1925 = vpack.c.b16 %v1897, %v1895
      %v1926 = vpack.c.b16 %v1898, %v1896
      %v1927 = vpack.c.b16 %v1901, %v1899
      %v1928 = vpack.c.b16 %v1902, %v1900
      %v1929 = vpack.c.b16 %v1905, %v1903
      %v1930 = vpack.c.b16 %v1906, %v1904
      %v1931 = vpack.c.b16 %v1909, %v1907
      %v1932 = vpack.c.b16 %v1910, %v1908
      %v1933 = vpack.c.b16 %v1913, %v1911
      %v1934 = vpack.c.b16 %v1914, %v1912
      %v1935 = vpack.c.b16 %v1917, %v1915
      %v1936 = vpack.c.b16 %v1918, %v1916
      %v1937 = vpack.c.b16 %v1921, %v1919
      %v1938 = vpack.c.b16 %v1922, %v1920
      %1955 = vmatpush.bf16.msra.mxu0 %v1937
      %1956 = vmatpush.bf16.msra.mxu0 %v1935
      %1957 = vmatpush.bf16.msra.mxu0 %v1933
      %1958 = vmatpush.bf16.msra.mxu0 %v1931
      %1959 = vmatpush.bf16.msra.mxu0 %v1929
      %1960 = vmatpush.bf16.msra.mxu0 %v1927
      %1961 = vmatpush.bf16.msra.mxu0 %v1925
      %1962 = vmatpush.bf16.msra.mxu0 %v1923
      %1963 = vmatmul.bf16.gmra.mxu0 %v1821
      %v1964 = vpop.f32.mrf.mxu0
      %v1965 = vadd.f32 %v1871, %v1964
      %v1966 = vpop.f32.mrf.mxu0
      %v1967 = vadd.f32 %v1871, %v1966
      %1968 = vmatmul.bf16.gmra.mxu0 %v1822
      %v1969 = vpop.f32.mrf.mxu0
      %v1970 = vadd.f32 %v1871, %v1969
      %v1971 = vpop.f32.mrf.mxu0
      %v1972 = vadd.f32 %v1871, %v1971
      %1973 = vmatmul.bf16.gmra.mxu0 %v1823
      %v1974 = vpop.f32.mrf.mxu0
      %v1975 = vadd.f32 %v1871, %v1974
      %v1976 = vpop.f32.mrf.mxu0
      %v1977 = vadd.f32 %v1871, %v1976
      %1978 = vmatmul.bf16.gmra.mxu0 %v1824
      %v1979 = vpop.f32.mrf.mxu0
      %v1980 = vadd.f32 %v1871, %v1979
      %v1981 = vpop.f32.mrf.mxu0
      %v1982 = vadd.f32 %v1871, %v1981
      %1983 = vmatmul.bf16.gmra.mxu0 %v1825
      %v1984 = vpop.f32.mrf.mxu0
      %v1985 = vadd.f32 %v1871, %v1984
      %v1986 = vpop.f32.mrf.mxu0
      %v1987 = vadd.f32 %v1871, %v1986
      %1988 = vmatmul.bf16.gmra.mxu0 %v1826
      %v1989 = vpop.f32.mrf.mxu0
      %v1990 = vadd.f32 %v1871, %v1989
      %v1991 = vpop.f32.mrf.mxu0
      %v1992 = vadd.f32 %v1871, %v1991
      %1993 = vmatmul.bf16.gmra.mxu0 %v1827
      %v1994 = vpop.f32.mrf.mxu0
      %v1995 = vadd.f32 %v1871, %v1994
      %v1996 = vpop.f32.mrf.mxu0
      %v1997 = vadd.f32 %v1871, %v1996
      %1998 = vmatmul.bf16.gmra.mxu0 %v1828
      %v1999 = vpop.f32.mrf.mxu0
      %v2000 = vadd.f32 %v1871, %v1999
      %v2001 = vpop.f32.mrf.mxu0
      %v2002 = vadd.f32 %v1871, %v2001
      %2003 = vmatmul.bf16.gmra.mxu0 %v1829
      %v2004 = vpop.f32.mrf.mxu0
      %v2005 = vadd.f32 %v1871, %v2004
      %v2006 = vpop.f32.mrf.mxu0
      %v2007 = vadd.f32 %v1871, %v2006
      %2008 = vmatmul.bf16.gmra.mxu0 %v1830
      %v2009 = vpop.f32.mrf.mxu0
      %v2010 = vadd.f32 %v1871, %v2009
      %v2011 = vpop.f32.mrf.mxu0
      %v2012 = vadd.f32 %v1871, %v2011
      %2013 = vmatmul.bf16.gmra.mxu0 %v1831
      %v2014 = vpop.f32.mrf.mxu0
      %v2015 = vadd.f32 %v1871, %v2014
      %v2016 = vpop.f32.mrf.mxu0
      %v2017 = vadd.f32 %v1871, %v2016
      %2018 = vmatmul.bf16.gmra.mxu0 %v1832
      %v2019 = vpop.f32.mrf.mxu0
      %v2020 = vadd.f32 %v1871, %v2019
      %v2021 = vpop.f32.mrf.mxu0
      %v2022 = vadd.f32 %v1871, %v2021
      %2023 = vmatmul.bf16.gmra.mxu0 %v1833
      %v2024 = vpop.f32.mrf.mxu0
      %v2025 = vadd.f32 %v1871, %v2024
      %v2026 = vpop.f32.mrf.mxu0
      %v2027 = vadd.f32 %v1871, %v2026
      %2028 = vmatmul.bf16.gmra.mxu0 %v1834
      %v2029 = vpop.f32.mrf.mxu0
      %v2030 = vadd.f32 %v1871, %v2029
      %v2031 = vpop.f32.mrf.mxu0
      %v2032 = vadd.f32 %v1871, %v2031
      %2033 = vmatmul.bf16.gmra.mxu0 %v1835
      %v2034 = vpop.f32.mrf.mxu0
      %v2035 = vadd.f32 %v1871, %v2034
      %v2036 = vpop.f32.mrf.mxu0
      %v2037 = vadd.f32 %v1871, %v2036
      %2038 = vmatmul.bf16.gmra.mxu0 %v1836
      %v2039 = vpop.f32.mrf.mxu0
      %v2040 = vadd.f32 %v1871, %v2039
      %v2041 = vpop.f32.mrf.mxu0
      %v2042 = vadd.f32 %v1871, %v2041
      %2043 = vmatmul.bf16.gmra.mxu0 %v1837
      %v2044 = vpop.f32.mrf.mxu0
      %v2045 = vadd.f32 %v1871, %v2044
      %v2046 = vpop.f32.mrf.mxu0
      %v2047 = vadd.f32 %v1871, %v2046
      %2048 = vmatmul.bf16.gmra.mxu0 %v1838
      %v2049 = vpop.f32.mrf.mxu0
      %v2050 = vadd.f32 %v1871, %v2049
      %v2051 = vpop.f32.mrf.mxu0
      %v2052 = vadd.f32 %v1871, %v2051
      %2053 = vmatmul.bf16.gmra.mxu0 %v1839
      %v2054 = vpop.f32.mrf.mxu0
      %v2055 = vadd.f32 %v1871, %v2054
      %v2056 = vpop.f32.mrf.mxu0
      %v2057 = vadd.f32 %v1871, %v2056
      %2058 = vmatmul.bf16.gmra.mxu0 %v1840
      %v2059 = vpop.f32.mrf.mxu0
      %v2060 = vadd.f32 %v1871, %v2059
      %v2061 = vpop.f32.mrf.mxu0
      %v2062 = vadd.f32 %v1871, %v2061
      %2063 = vmatmul.bf16.gmra.mxu0 %v1841
      %v2064 = vpop.f32.mrf.mxu0
      %v2065 = vadd.f32 %v1871, %v2064
      %v2066 = vpop.f32.mrf.mxu0
      %v2067 = vadd.f32 %v1871, %v2066
      %2068 = vmatmul.bf16.gmra.mxu0 %v1842
      %v2069 = vpop.f32.mrf.mxu0
      %v2070 = vadd.f32 %v1871, %v2069
      %v2071 = vpop.f32.mrf.mxu0
      %v2072 = vadd.f32 %v1871, %v2071
      %2073 = vmatmul.bf16.gmra.mxu0 %v1843
      %v2074 = vpop.f32.mrf.mxu0
      %v2075 = vadd.f32 %v1871, %v2074
      %v2076 = vpop.f32.mrf.mxu0
      %v2077 = vadd.f32 %v1871, %v2076
      %2078 = vmatmul.bf16.gmra.mxu0 %v1844
      %v2079 = vpop.f32.mrf.mxu0
      %v2080 = vadd.f32 %v1871, %v2079
      %v2081 = vpop.f32.mrf.mxu0
      %v2082 = vadd.f32 %v1871, %v2081
      %2083 = vmatmul.bf16.gmra.mxu0 %v1845
      %v2084 = vpop.f32.mrf.mxu0
      %v2085 = vadd.f32 %v1871, %v2084
      %v2086 = vpop.f32.mrf.mxu0
      %v2087 = vadd.f32 %v1871, %v2086
      %2088 = vmatmul.bf16.gmra.mxu0 %v1846
      %v2089 = vpop.f32.mrf.mxu0
      %v2090 = vadd.f32 %v1871, %v2089
      %v2091 = vpop.f32.mrf.mxu0
      %v2092 = vadd.f32 %v1871, %v2091
      %2093 = vmatmul.bf16.gmra.mxu0 %v1847
      %v2094 = vpop.f32.mrf.mxu0
      %v2095 = vadd.f32 %v1871, %v2094
      %v2096 = vpop.f32.mrf.mxu0
      %v2097 = vadd.f32 %v1871, %v2096
      %2098 = vmatmul.bf16.gmra.mxu0 %v1848
      %v2099 = vpop.f32.mrf.mxu0
      %v2100 = vadd.f32 %v1871, %v2099
      %v2101 = vpop.f32.mrf.mxu0
      %v2102 = vadd.f32 %v1871, %v2101
      %2103 = vmatmul.bf16.gmra.mxu0 %v1849
      %v2104 = vpop.f32.mrf.mxu0
      %v2105 = vadd.f32 %v1871, %v2104
      %v2106 = vpop.f32.mrf.mxu0
      %v2107 = vadd.f32 %v1871, %v2106
      %2108 = vmatmul.bf16.gmra.mxu0 %v1850
      %v2109 = vpop.f32.mrf.mxu0
      %v2110 = vadd.f32 %v1871, %v2109
      %v2111 = vpop.f32.mrf.mxu0
      %v2112 = vadd.f32 %v1871, %v2111
      %2113 = vmatmul.bf16.gmra.mxu0 %v1851
      %v2114 = vpop.f32.mrf.mxu0
      %v2115 = vadd.f32 %v1871, %v2114
      %v2116 = vpop.f32.mrf.mxu0
      %v2117 = vadd.f32 %v1871, %v2116
      %2118 = vmatmul.bf16.gmra.mxu0 %v1852
      %v2119 = vpop.f32.mrf.mxu0
      %v2120 = vadd.f32 %v1871, %v2119
      %v2121 = vpop.f32.mrf.mxu0
      %v2122 = vadd.f32 %v1871, %v2121
      %2123 = vdwg.mxu0
      %2124 = vmatpush.bf16.msra.mxu0 %v1938
      %2125 = vmatpush.bf16.msra.mxu0 %v1936
      %2126 = vmatpush.bf16.msra.mxu0 %v1934
      %2127 = vmatpush.bf16.msra.mxu0 %v1932
      %2128 = vmatpush.bf16.msra.mxu0 %v1930
      %2129 = vmatpush.bf16.msra.mxu0 %v1928
      %2130 = vmatpush.bf16.msra.mxu0 %v1926
      %2131 = vmatpush.bf16.msra.mxu0 %v1924
      %2132 = vmatmul.bf16.gmra.mxu0 %v1821
      %v2133 = vpop.f32.mrf.mxu0
      %v2134 = vadd.f32 %v1872, %v2133
      %v2135 = vpop.f32.mrf.mxu0
      %v2136 = vadd.f32 %v1872, %v2135
      %2137 = vmatmul.bf16.gmra.mxu0 %v1822
      %v2138 = vpop.f32.mrf.mxu0
      %v2139 = vadd.f32 %v1872, %v2138
      %v2140 = vpop.f32.mrf.mxu0
      %v2141 = vadd.f32 %v1872, %v2140
      %2142 = vmatmul.bf16.gmra.mxu0 %v1823
      %v2143 = vpop.f32.mrf.mxu0
      %v2144 = vadd.f32 %v1872, %v2143
      %v2145 = vpop.f32.mrf.mxu0
      %v2146 = vadd.f32 %v1872, %v2145
      %2147 = vmatmul.bf16.gmra.mxu0 %v1824
      %v2148 = vpop.f32.mrf.mxu0
      %v2149 = vadd.f32 %v1872, %v2148
      %v2150 = vpop.f32.mrf.mxu0
      %v2151 = vadd.f32 %v1872, %v2150
      %2152 = vmatmul.bf16.gmra.mxu0 %v1825
      %v2153 = vpop.f32.mrf.mxu0
      %v2154 = vadd.f32 %v1872, %v2153
      %v2155 = vpop.f32.mrf.mxu0
      %v2156 = vadd.f32 %v1872, %v2155
      %2157 = vmatmul.bf16.gmra.mxu0 %v1826
      %v2158 = vpop.f32.mrf.mxu0
      %v2159 = vadd.f32 %v1872, %v2158
      %v2160 = vpop.f32.mrf.mxu0
      %v2161 = vadd.f32 %v1872, %v2160
      %2162 = vmatmul.bf16.gmra.mxu0 %v1827
      %v2163 = vpop.f32.mrf.mxu0
      %v2164 = vadd.f32 %v1872, %v2163
      %v2165 = vpop.f32.mrf.mxu0
      %v2166 = vadd.f32 %v1872, %v2165
      %2167 = vmatmul.bf16.gmra.mxu0 %v1828
      %v2168 = vpop.f32.mrf.mxu0
      %v2169 = vadd.f32 %v1872, %v2168
      %v2170 = vpop.f32.mrf.mxu0
      %v2171 = vadd.f32 %v1872, %v2170
      %2172 = vmatmul.bf16.gmra.mxu0 %v1829
      %v2173 = vpop.f32.mrf.mxu0
      %v2174 = vadd.f32 %v1872, %v2173
      %v2175 = vpop.f32.mrf.mxu0
      %v2176 = vadd.f32 %v1872, %v2175
      %2177 = vmatmul.bf16.gmra.mxu0 %v1830
      %v2178 = vpop.f32.mrf.mxu0
      %v2179 = vadd.f32 %v1872, %v2178
      %v2180 = vpop.f32.mrf.mxu0
      %v2181 = vadd.f32 %v1872, %v2180
      %2182 = vmatmul.bf16.gmra.mxu0 %v1831
      %v2183 = vpop.f32.mrf.mxu0
      %v2184 = vadd.f32 %v1872, %v2183
      %v2185 = vpop.f32.mrf.mxu0
      %v2186 = vadd.f32 %v1872, %v2185
      %2187 = vmatmul.bf16.gmra.mxu0 %v1832
      %v2188 = vpop.f32.mrf.mxu0
      %v2189 = vadd.f32 %v1872, %v2188
      %v2190 = vpop.f32.mrf.mxu0
      %v2191 = vadd.f32 %v1872, %v2190
      %2192 = vmatmul.bf16.gmra.mxu0 %v1833
      %v2193 = vpop.f32.mrf.mxu0
      %v2194 = vadd.f32 %v1872, %v2193
      %v2195 = vpop.f32.mrf.mxu0
      %v2196 = vadd.f32 %v1872, %v2195
      %2197 = vmatmul.bf16.gmra.mxu0 %v1834
      %v2198 = vpop.f32.mrf.mxu0
      %v2199 = vadd.f32 %v1872, %v2198
      %v2200 = vpop.f32.mrf.mxu0
      %v2201 = vadd.f32 %v1872, %v2200
      %2202 = vmatmul.bf16.gmra.mxu0 %v1835
      %v2203 = vpop.f32.mrf.mxu0
      %v2204 = vadd.f32 %v1872, %v2203
      %v2205 = vpop.f32.mrf.mxu0
      %v2206 = vadd.f32 %v1872, %v2205
      %2207 = vmatmul.bf16.gmra.mxu0 %v1836
      %v2208 = vpop.f32.mrf.mxu0
      %v2209 = vadd.f32 %v1872, %v2208
      %v2210 = vpop.f32.mrf.mxu0
      %v2211 = vadd.f32 %v1872, %v2210
      %2212 = vmatmul.bf16.gmra.mxu0 %v1837
      %v2213 = vpop.f32.mrf.mxu0
      %v2214 = vadd.f32 %v1872, %v2213
      %v2215 = vpop.f32.mrf.mxu0
      %v2216 = vadd.f32 %v1872, %v2215
      %2217 = vmatmul.bf16.gmra.mxu0 %v1838
      %v2218 = vpop.f32.mrf.mxu0
      %v2219 = vadd.f32 %v1872, %v2218
      %v2220 = vpop.f32.mrf.mxu0
      %v2221 = vadd.f32 %v1872, %v2220
      %2222 = vmatmul.bf16.gmra.mxu0 %v1839
      %v2223 = vpop.f32.mrf.mxu0
      %v2224 = vadd.f32 %v1872, %v2223
      %v2225 = vpop.f32.mrf.mxu0
      %v2226 = vadd.f32 %v1872, %v2225
      %2227 = vmatmul.bf16.gmra.mxu0 %v1840
      %v2228 = vpop.f32.mrf.mxu0
      %v2229 = vadd.f32 %v1872, %v2228
      %v2230 = vpop.f32.mrf.mxu0
      %v2231 = vadd.f32 %v1872, %v2230
      %2232 = vmatmul.bf16.gmra.mxu0 %v1841
      %v2233 = vpop.f32.mrf.mxu0
      %v2234 = vadd.f32 %v1872, %v2233
      %v2235 = vpop.f32.mrf.mxu0
      %v2236 = vadd.f32 %v1872, %v2235
      %2237 = vmatmul.bf16.gmra.mxu0 %v1842
      %v2238 = vpop.f32.mrf.mxu0
      %v2239 = vadd.f32 %v1872, %v2238
      %v2240 = vpop.f32.mrf.mxu0
      %v2241 = vadd.f32 %v1872, %v2240
      %2242 = vmatmul.bf16.gmra.mxu0 %v1843
      %v2243 = vpop.f32.mrf.mxu0
      %v2244 = vadd.f32 %v1872, %v2243
      %v2245 = vpop.f32.mrf.mxu0
      %v2246 = vadd.f32 %v1872, %v2245
      %2247 = vmatmul.bf16.gmra.mxu0 %v1844
      %v2248 = vpop.f32.mrf.mxu0
      %v2249 = vadd.f32 %v1872, %v2248
      %v2250 = vpop.f32.mrf.mxu0
      %v2251 = vadd.f32 %v1872, %v2250
      %2252 = vmatmul.bf16.gmra.mxu0 %v1845
      %v2253 = vpop.f32.mrf.mxu0
      %v2254 = vadd.f32 %v1872, %v2253
      %v2255 = vpop.f32.mrf.mxu0
      %v2256 = vadd.f32 %v1872, %v2255
      %2257 = vmatmul.bf16.gmra.mxu0 %v1846
      %v2258 = vpop.f32.mrf.mxu0
      %v2259 = vadd.f32 %v1872, %v2258
      %v2260 = vpop.f32.mrf.mxu0
      %v2261 = vadd.f32 %v1872, %v2260
      %2262 = vmatmul.bf16.gmra.mxu0 %v1847
      %v2263 = vpop.f32.mrf.mxu0
      %v2264 = vadd.f32 %v1872, %v2263
      %v2265 = vpop.f32.mrf.mxu0
      %v2266 = vadd.f32 %v1872, %v2265
      %2267 = vmatmul.bf16.gmra.mxu0 %v1848
      %v2268 = vpop.f32.mrf.mxu0
      %v2269 = vadd.f32 %v1872, %v2268
      %v2270 = vpop.f32.mrf.mxu0
      %v2271 = vadd.f32 %v1872, %v2270
      %2272 = vmatmul.bf16.gmra.mxu0 %v1849
      %v2273 = vpop.f32.mrf.mxu0
      %v2274 = vadd.f32 %v1872, %v2273
      %v2275 = vpop.f32.mrf.mxu0
      %v2276 = vadd.f32 %v1872, %v2275
      %2277 = vmatmul.bf16.gmra.mxu0 %v1850
      %v2278 = vpop.f32.mrf.mxu0
      %v2279 = vadd.f32 %v1872, %v2278
      %v2280 = vpop.f32.mrf.mxu0
      %v2281 = vadd.f32 %v1872, %v2280
      %2282 = vmatmul.bf16.gmra.mxu0 %v1851
      %v2283 = vpop.f32.mrf.mxu0
      %v2284 = vadd.f32 %v1872, %v2283
      %v2285 = vpop.f32.mrf.mxu0
      %v2286 = vadd.f32 %v1872, %v2285
      %2287 = vmatmul.bf16.gmra.mxu0 %v1852
      %v2288 = vpop.f32.mrf.mxu0
      %v2289 = vadd.f32 %v1872, %v2288
      %v2290 = vpop.f32.mrf.mxu0
      %v2291 = vadd.f32 %v1872, %v2290
      %2292 = vdwg.mxu0
      %v2293 = vtanh.pop %v1965
      %v2294 = vtanh.pop %v1967
      %v2295 = vtanh.pop %v1970
      %v2296 = vtanh.pop %v1972
      %v2297 = vtanh.pop %v1975
      %v2298 = vtanh.pop %v1977
      %v2299 = vtanh.pop %v1980
      %v2300 = vtanh.pop %v1982
      %v2301 = vtanh.pop %v1985
      %v2302 = vtanh.pop %v1987
      %v2303 = vtanh.pop %v1990
      %v2304 = vtanh.pop %v1992
      %v2305 = vtanh.pop %v1995
      %v2306 = vtanh.pop %v1997
      %v2307 = vtanh.pop %v2000
      %v2308 = vtanh.pop %v2002
      %v2309 = vtanh.pop %v2005
      %v2310 = vtanh.pop %v2007
      %v2311 = vtanh.pop %v2010
      %v2312 = vtanh.pop %v2012
      %v2313 = vtanh.pop %v2015
      %v2314 = vtanh.pop %v2017
      %v2315 = vtanh.pop %v2020
      %v2316 = vtanh.pop %v2022
      %v2317 = vtanh.pop %v2025
      %v2318 = vtanh.pop %v2027
      %v2319 = vtanh.pop %v2030
      %v2320 = vtanh.pop %v2032
      %v2321 = vtanh.pop %v2035
      %v2322 = vtanh.pop %v2037
      %v2323 = vtanh.pop %v2040
      %v2324 = vtanh.pop %v2042
      %v2325 = vtanh.pop %v2045
      %v2326 = vtanh.pop %v2047
      %v2327 = vtanh.pop %v2050
      %v2328 = vtanh.pop %v2052
      %v2329 = vtanh.pop %v2055
      %v2330 = vtanh.pop %v2057
      %v2331 = vtanh.pop %v2060
      %v2332 = vtanh.pop %v2062
      %v2333 = vtanh.pop %v2065
      %v2334 = vtanh.pop %v2067
      %v2335 = vtanh.pop %v2070
      %v2336 = vtanh.pop %v2072
      %v2337 = vtanh.pop %v2075
      %v2338 = vtanh.pop %v2077
      %v2339 = vtanh.pop %v2080
      %v2340 = vtanh.pop %v2082
      %v2341 = vtanh.pop %v2085
      %v2342 = vtanh.pop %v2087
      %v2343 = vtanh.pop %v2090
      %v2344 = vtanh.pop %v2092
      %v2345 = vtanh.pop %v2095
      %v2346 = vtanh.pop %v2097
      %v2347 = vtanh.pop %v2100
      %v2348 = vtanh.pop %v2102
      %v2349 = vtanh.pop %v2105
      %v2350 = vtanh.pop %v2107
      %v2351 = vtanh.pop %v2110
      %v2352 = vtanh.pop %v2112
      %v2353 = vtanh.pop %v2115
      %v2354 = vtanh.pop %v2117
      %v2355 = vtanh.pop %v2120
      %v2356 = vtanh.pop %v2122
      %v2357 = vxor.u32 %v2134, 2147483648
      %v2358 = vxor.u32 %v2136, 2147483648
      %v2359 = vxor.u32 %v2139, 2147483648
      %v2360 = vxor.u32 %v2141, 2147483648
      %v2361 = vxor.u32 %v2144, 2147483648
      %v2362 = vxor.u32 %v2146, 2147483648
      %v2363 = vxor.u32 %v2149, 2147483648
      %v2364 = vxor.u32 %v2151, 2147483648
      %v2365 = vxor.u32 %v2154, 2147483648
      %v2366 = vxor.u32 %v2156, 2147483648
      %v2367 = vxor.u32 %v2159, 2147483648
      %v2368 = vxor.u32 %v2161, 2147483648
      %v2369 = vxor.u32 %v2164, 2147483648
      %v2370 = vxor.u32 %v2166, 2147483648
      %v2371 = vxor.u32 %v2169, 2147483648
      %v2372 = vxor.u32 %v2171, 2147483648
      %v2373 = vxor.u32 %v2174, 2147483648
      %v2374 = vxor.u32 %v2176, 2147483648
      %v2375 = vxor.u32 %v2179, 2147483648
      %v2376 = vxor.u32 %v2181, 2147483648
      %v2377 = vxor.u32 %v2184, 2147483648
      %v2378 = vxor.u32 %v2186, 2147483648
      %v2379 = vxor.u32 %v2189, 2147483648
      %v2380 = vxor.u32 %v2191, 2147483648
      %v2381 = vxor.u32 %v2194, 2147483648
      %v2382 = vxor.u32 %v2196, 2147483648
      %v2383 = vxor.u32 %v2199, 2147483648
      %v2384 = vxor.u32 %v2201, 2147483648
      %v2385 = vxor.u32 %v2204, 2147483648
      %v2386 = vxor.u32 %v2206, 2147483648
      %v2387 = vxor.u32 %v2209, 2147483648
      %v2388 = vxor.u32 %v2211, 2147483648
      %v2389 = vxor.u32 %v2214, 2147483648
      %v2390 = vxor.u32 %v2216, 2147483648
      %v2391 = vxor.u32 %v2219, 2147483648
      %v2392 = vxor.u32 %v2221, 2147483648
      %v2393 = vxor.u32 %v2224, 2147483648
      %v2394 = vxor.u32 %v2226, 2147483648
      %v2395 = vxor.u32 %v2229, 2147483648
      %v2396 = vxor.u32 %v2231, 2147483648
      %v2397 = vxor.u32 %v2234, 2147483648
      %v2398 = vxor.u32 %v2236, 2147483648
      %v2399 = vxor.u32 %v2239, 2147483648
      %v2400 = vxor.u32 %v2241, 2147483648
      %v2401 = vxor.u32 %v2244, 2147483648
      %v2402 = vxor.u32 %v2246, 2147483648
      %v2403 = vxor.u32 %v2249, 2147483648
      %v2404 = vxor.u32 %v2251, 2147483648
      %v2405 = vxor.u32 %v2254, 2147483648
      %v2406 = vxor.u32 %v2256, 2147483648
      %v2407 = vxor.u32 %v2259, 2147483648
      %v2408 = vxor.u32 %v2261, 2147483648
      %v2409 = vxor.u32 %v2264, 2147483648
      %v2410 = vxor.u32 %v2266, 2147483648
      %v2411 = vxor.u32 %v2269, 2147483648
      %v2412 = vxor.u32 %v2271, 2147483648
      %v2413 = vxor.u32 %v2274, 2147483648
      %v2414 = vxor.u32 %v2276, 2147483648
      %v2415 = vxor.u32 %v2279, 2147483648
      %v2416 = vxor.u32 %v2281, 2147483648
      %v2417 = vxor.u32 %v2284, 2147483648
      %v2418 = vxor.u32 %v2286, 2147483648
      %v2419 = vxor.u32 %v2289, 2147483648
      %v2420 = vxor.u32 %v2291, 2147483648
      %v2421 = vmul.f32 %v2357, 1.442695
      %v2422 = vpow.pop %v2421
      %v2423 = vmul.f32 %v2358, 1.442695
      %v2424 = vpow.pop %v2423
      %v2425 = vmul.f32 %v2359, 1.442695
      %v2426 = vpow.pop %v2425
      %v2427 = vmul.f32 %v2360, 1.442695
      %v2428 = vpow.pop %v2427
      %v2429 = vmul.f32 %v2361, 1.442695
      %v2430 = vpow.pop %v2429
      %v2431 = vmul.f32 %v2362, 1.442695
      %v2432 = vpow.pop %v2431
      %v2433 = vmul.f32 %v2363, 1.442695
      %v2434 = vpow.pop %v2433
      %v2435 = vmul.f32 %v2364, 1.442695
      %v2436 = vpow.pop %v2435
      %v2437 = vmul.f32 %v2365, 1.442695
      %v2438 = vpow.pop %v2437
      %v2439 = vmul.f32 %v2366, 1.442695
      %v2440 = vpow.pop %v2439
      %v2441 = vmul.f32 %v2367, 1.442695
      %v2442 = vpow.pop %v2441
      %v2443 = vmul.f32 %v2368, 1.442695
      %v2444 = vpow.pop %v2443
      %v2445 = vmul.f32 %v2369, 1.442695
      %v2446 = vpow.pop %v2445
      %v2447 = vmul.f32 %v2370, 1.442695
      %v2448 = vpow.pop %v2447
      %v2449 = vmul.f32 %v2371, 1.442695
      %v2450 = vpow.pop %v2449
      %v2451 = vmul.f32 %v2372, 1.442695
      %v2452 = vpow.pop %v2451
      %v2453 = vmul.f32 %v2373, 1.442695
      %v2454 = vpow.pop %v2453
      %v2455 = vmul.f32 %v2374, 1.442695
      %v2456 = vpow.pop %v2455
      %v2457 = vmul.f32 %v2375, 1.442695
      %v2458 = vpow.pop %v2457
      %v2459 = vmul.f32 %v2376, 1.442695
      %v2460 = vpow.pop %v2459
      %v2461 = vmul.f32 %v2377, 1.442695
      %v2462 = vpow.pop %v2461
      %v2463 = vmul.f32 %v2378, 1.442695
      %v2464 = vpow.pop %v2463
      %v2465 = vmul.f32 %v2379, 1.442695
      %v2466 = vpow.pop %v2465
      %v2467 = vmul.f32 %v2380, 1.442695
      %v2468 = vpow.pop %v2467
      %v2469 = vmul.f32 %v2381, 1.442695
      %v2470 = vpow.pop %v2469
      %v2471 = vmul.f32 %v2382, 1.442695
      %v2472 = vpow.pop %v2471
      %v2473 = vmul.f32 %v2383, 1.442695
      %v2474 = vpow.pop %v2473
      %v2475 = vmul.f32 %v2384, 1.442695
      %v2476 = vpow.pop %v2475
      %v2477 = vmul.f32 %v2385, 1.442695
      %v2478 = vpow.pop %v2477
      %v2479 = vmul.f32 %v2386, 1.442695
      %v2480 = vpow.pop %v2479
      %v2481 = vmul.f32 %v2387, 1.442695
      %v2482 = vpow.pop %v2481
      %v2483 = vmul.f32 %v2388, 1.442695
      %v2484 = vpow.pop %v2483
      %v2485 = vmul.f32 %v2389, 1.442695
      %v2486 = vpow.pop %v2485
      %v2487 = vmul.f32 %v2390, 1.442695
      %v2488 = vpow.pop %v2487
      %v2489 = vmul.f32 %v2391, 1.442695
      %v2490 = vpow.pop %v2489
      %v2491 = vmul.f32 %v2392, 1.442695
      %v2492 = vpow.pop %v2491
      %v2493 = vmul.f32 %v2393, 1.442695
      %v2494 = vpow.pop %v2493
      %v2495 = vmul.f32 %v2394, 1.442695
      %v2496 = vpow.pop %v2495
      %v2497 = vmul.f32 %v2395, 1.442695
      %v2498 = vpow.pop %v2497
      %v2499 = vmul.f32 %v2396, 1.442695
      %v2500 = vpow.pop %v2499
      %v2501 = vmul.f32 %v2397, 1.442695
      %v2502 = vpow.pop %v2501
      %v2503 = vmul.f32 %v2398, 1.442695
      %v2504 = vpow.pop %v2503
      %v2505 = vmul.f32 %v2399, 1.442695
      %v2506 = vpow.pop %v2505
      %v2507 = vmul.f32 %v2400, 1.442695
      %v2508 = vpow.pop %v2507
      %v2509 = vmul.f32 %v2401, 1.442695
      %v2510 = vpow.pop %v2509
      %v2511 = vmul.f32 %v2402, 1.442695
      %v2512 = vpow.pop %v2511
      %v2513 = vmul.f32 %v2403, 1.442695
      %v2514 = vpow.pop %v2513
      %v2515 = vmul.f32 %v2404, 1.442695
      %v2516 = vpow.pop %v2515
      %v2517 = vmul.f32 %v2405, 1.442695
      %v2518 = vpow.pop %v2517
      %v2519 = vmul.f32 %v2406, 1.442695
      %v2520 = vpow.pop %v2519
      %v2521 = vmul.f32 %v2407, 1.442695
      %v2522 = vpow.pop %v2521
      %v2523 = vmul.f32 %v2408, 1.442695
      %v2524 = vpow.pop %v2523
      %v2525 = vmul.f32 %v2409, 1.442695
      %v2526 = vpow.pop %v2525
      %v2527 = vmul.f32 %v2410, 1.442695
      %v2528 = vpow.pop %v2527
      %v2529 = vmul.f32 %v2411, 1.442695
      %v2530 = vpow.pop %v2529
      %v2531 = vmul.f32 %v2412, 1.442695
      %v2532 = vpow.pop %v2531
      %v2533 = vmul.f32 %v2413, 1.442695
      %v2534 = vpow.pop %v2533
      %v2535 = vmul.f32 %v2414, 1.442695
      %v2536 = vpow.pop %v2535
      %v2537 = vmul.f32 %v2415, 1.442695
      %v2538 = vpow.pop %v2537
      %v2539 = vmul.f32 %v2416, 1.442695
      %v2540 = vpow.pop %v2539
      %v2541 = vmul.f32 %v2417, 1.442695
      %v2542 = vpow.pop %v2541
      %v2543 = vmul.f32 %v2418, 1.442695
      %v2544 = vpow.pop %v2543
      %v2545 = vmul.f32 %v2419, 1.442695
      %v2546 = vpow.pop %v2545
      %v2547 = vmul.f32 %v2420, 1.442695
      %v2548 = vpow.pop %v2547
      %v2549 = vadd.f32 %v2422, 1.0
      %v2550 = vadd.f32 %v2424, 1.0
      %v2551 = vadd.f32 %v2426, 1.0
      %v2552 = vadd.f32 %v2428, 1.0
      %v2553 = vadd.f32 %v2430, 1.0
      %v2554 = vadd.f32 %v2432, 1.0
      %v2555 = vadd.f32 %v2434, 1.0
      %v2556 = vadd.f32 %v2436, 1.0
      %v2557 = vadd.f32 %v2438, 1.0
      %v2558 = vadd.f32 %v2440, 1.0
      %v2559 = vadd.f32 %v2442, 1.0
      %v2560 = vadd.f32 %v2444, 1.0
      %v2561 = vadd.f32 %v2446, 1.0
      %v2562 = vadd.f32 %v2448, 1.0
      %v2563 = vadd.f32 %v2450, 1.0
      %v2564 = vadd.f32 %v2452, 1.0
      %v2565 = vadd.f32 %v2454, 1.0
      %v2566 = vadd.f32 %v2456, 1.0
      %v2567 = vadd.f32 %v2458, 1.0
      %v2568 = vadd.f32 %v2460, 1.0
      %v2569 = vadd.f32 %v2462, 1.0
      %v2570 = vadd.f32 %v2464, 1.0
      %v2571 = vadd.f32 %v2466, 1.0
      %v2572 = vadd.f32 %v2468, 1.0
      %v2573 = vadd.f32 %v2470, 1.0
      %v2574 = vadd.f32 %v2472, 1.0
      %v2575 = vadd.f32 %v2474, 1.0
      %v2576 = vadd.f32 %v2476, 1.0
      %v2577 = vadd.f32 %v2478, 1.0
      %v2578 = vadd.f32 %v2480, 1.0
      %v2579 = vadd.f32 %v2482, 1.0
      %v2580 = vadd.f32 %v2484, 1.0
      %v2581 = vadd.f32 %v2486, 1.0
      %v2582 = vadd.f32 %v2488, 1.0
      %v2583 = vadd.f32 %v2490, 1.0
      %v2584 = vadd.f32 %v2492, 1.0
      %v2585 = vadd.f32 %v2494, 1.0
      %v2586 = vadd.f32 %v2496, 1.0
      %v2587 = vadd.f32 %v2498, 1.0
      %v2588 = vadd.f32 %v2500, 1.0
      %v2589 = vadd.f32 %v2502, 1.0
      %v2590 = vadd.f32 %v2504, 1.0
      %v2591 = vadd.f32 %v2506, 1.0
      %v2592 = vadd.f32 %v2508, 1.0
      %v2593 = vadd.f32 %v2510, 1.0
      %v2594 = vadd.f32 %v2512, 1.0
      %v2595 = vadd.f32 %v2514, 1.0
      %v2596 = vadd.f32 %v2516, 1.0
      %v2597 = vadd.f32 %v2518, 1.0
      %v2598 = vadd.f32 %v2520, 1.0
      %v2599 = vadd.f32 %v2522, 1.0
      %v2600 = vadd.f32 %v2524, 1.0
      %v2601 = vadd.f32 %v2526, 1.0
      %v2602 = vadd.f32 %v2528, 1.0
      %v2603 = vadd.f32 %v2530, 1.0
      %v2604 = vadd.f32 %v2532, 1.0
      %v2605 = vadd.f32 %v2534, 1.0
      %v2606 = vadd.f32 %v2536, 1.0
      %v2607 = vadd.f32 %v2538, 1.0
      %v2608 = vadd.f32 %v2540, 1.0
      %v2609 = vadd.f32 %v2542, 1.0
      %v2610 = vadd.f32 %v2544, 1.0
      %v2611 = vadd.f32 %v2546, 1.0
      %v2612 = vadd.f32 %v2548, 1.0
      %v2613 = vrcp.pop %v2549
      %v2614 = vmul.f32 %v2549, %v2613
      %v2615 = vsub.f32 1.0, %v2614
      %v2616 = vmul.f32 %v2613, %v2615
      %v2617 = vadd.f32 %v2613, %v2616
      %vm2618 = vweird.f32 %v2549
      %vm2619 = vweird.f32 %v2613
      %vm2620 = vmor %vm2618, %vm2619
      %v2621 = vsel %vm2620, %v2613, %v2617
      %v2622 = vand.u32 2147483647, %v2549
      %vm2623 = vcmp.eq.f32.partialorder %v2622, 8.507059e+37
      %v2624 = vand.u32 %v2549, 2147483648
      %v2625 = vor.u32 1.1754944e-38, %v2624
      %v2626 = vsel %vm2623, %v2625, %v2621
      %v2627 = vmul.f32 1.0, %v2626
      %v2628 = vrcp.pop %v2550
      %v2629 = vmul.f32 %v2550, %v2628
      %v2630 = vsub.f32 1.0, %v2629
      %v2631 = vmul.f32 %v2628, %v2630
      %v2632 = vadd.f32 %v2628, %v2631
      %vm2633 = vweird.f32 %v2550
      %vm2634 = vweird.f32 %v2628
      %vm2635 = vmor %vm2633, %vm2634
      %v2636 = vsel %vm2635, %v2628, %v2632
      %v2637 = vand.u32 2147483647, %v2550
      %vm2638 = vcmp.eq.f32.partialorder %v2637, 8.507059e+37
      %v2639 = vand.u32 %v2550, 2147483648
      %v2640 = vor.u32 1.1754944e-38, %v2639
      %v2641 = vsel %vm2638, %v2640, %v2636
      %v2642 = vmul.f32 1.0, %v2641
      %v2643 = vrcp.pop %v2551
      %v2644 = vmul.f32 %v2551, %v2643
      %v2645 = vsub.f32 1.0, %v2644
      %v2646 = vmul.f32 %v2643, %v2645
      %v2647 = vadd.f32 %v2643, %v2646
      %vm2648 = vweird.f32 %v2551
      %vm2649 = vweird.f32 %v2643
      %vm2650 = vmor %vm2648, %vm2649
      %v2651 = vsel %vm2650, %v2643, %v2647
      %v2652 = vand.u32 2147483647, %v2551
      %vm2653 = vcmp.eq.f32.partialorder %v2652, 8.507059e+37
      %v2654 = vand.u32 %v2551, 2147483648
      %v2655 = vor.u32 1.1754944e-38, %v2654
      %v2656 = vsel %vm2653, %v2655, %v2651
      %v2657 = vmul.f32 1.0, %v2656
      %v2658 = vrcp.pop %v2552
      %v2659 = vmul.f32 %v2552, %v2658
      %v2660 = vsub.f32 1.0, %v2659
      %v2661 = vmul.f32 %v2658, %v2660
      %v2662 = vadd.f32 %v2658, %v2661
      %vm2663 = vweird.f32 %v2552
      %vm2664 = vweird.f32 %v2658
      %vm2665 = vmor %vm2663, %vm2664
      %v2666 = vsel %vm2665, %v2658, %v2662
      %v2667 = vand.u32 2147483647, %v2552
      %vm2668 = vcmp.eq.f32.partialorder %v2667, 8.507059e+37
      %v2669 = vand.u32 %v2552, 2147483648
      %v2670 = vor.u32 1.1754944e-38, %v2669
      %v2671 = vsel %vm2668, %v2670, %v2666
      %v2672 = vmul.f32 1.0, %v2671
      %v2673 = vrcp.pop %v2553
      %v2674 = vmul.f32 %v2553, %v2673
      %v2675 = vsub.f32 1.0, %v2674
      %v2676 = vmul.f32 %v2673, %v2675
      %v2677 = vadd.f32 %v2673, %v2676
      %vm2678 = vweird.f32 %v2553
      %vm2679 = vweird.f32 %v2673
      %vm2680 = vmor %vm2678, %vm2679
      %v2681 = vsel %vm2680, %v2673, %v2677
      %v2682 = vand.u32 2147483647, %v2553
      %vm2683 = vcmp.eq.f32.partialorder %v2682, 8.507059e+37
      %v2684 = vand.u32 %v2553, 2147483648
      %v2685 = vor.u32 1.1754944e-38, %v2684
      %v2686 = vsel %vm2683, %v2685, %v2681
      %v2687 = vmul.f32 1.0, %v2686
      %v2688 = vrcp.pop %v2554
      %v2689 = vmul.f32 %v2554, %v2688
      %v2690 = vsub.f32 1.0, %v2689
      %v2691 = vmul.f32 %v2688, %v2690
      %v2692 = vadd.f32 %v2688, %v2691
      %vm2693 = vweird.f32 %v2554
      %vm2694 = vweird.f32 %v2688
      %vm2695 = vmor %vm2693, %vm2694
      %v2696 = vsel %vm2695, %v2688, %v2692
      %v2697 = vand.u32 2147483647, %v2554
      %vm2698 = vcmp.eq.f32.partialorder %v2697, 8.507059e+37
      %v2699 = vand.u32 %v2554, 2147483648
      %v2700 = vor.u32 1.1754944e-38, %v2699
      %v2701 = vsel %vm2698, %v2700, %v2696
      %v2702 = vmul.f32 1.0, %v2701
      %v2703 = vrcp.pop %v2555
      %v2704 = vmul.f32 %v2555, %v2703
      %v2705 = vsub.f32 1.0, %v2704
      %v2706 = vmul.f32 %v2703, %v2705
      %v2707 = vadd.f32 %v2703, %v2706
      %vm2708 = vweird.f32 %v2555
      %vm2709 = vweird.f32 %v2703
      %vm2710 = vmor %vm2708, %vm2709
      %v2711 = vsel %vm2710, %v2703, %v2707
      %v2712 = vand.u32 2147483647, %v2555
      %vm2713 = vcmp.eq.f32.partialorder %v2712, 8.507059e+37
      %v2714 = vand.u32 %v2555, 2147483648
      %v2715 = vor.u32 1.1754944e-38, %v2714
      %v2716 = vsel %vm2713, %v2715, %v2711
      %v2717 = vmul.f32 1.0, %v2716
      %v2718 = vrcp.pop %v2556
      %v2719 = vmul.f32 %v2556, %v2718
      %v2720 = vsub.f32 1.0, %v2719
      %v2721 = vmul.f32 %v2718, %v2720
      %v2722 = vadd.f32 %v2718, %v2721
      %vm2723 = vweird.f32 %v2556
      %vm2724 = vweird.f32 %v2718
      %vm2725 = vmor %vm2723, %vm2724
      %v2726 = vsel %vm2725, %v2718, %v2722
      %v2727 = vand.u32 2147483647, %v2556
      %vm2728 = vcmp.eq.f32.partialorder %v2727, 8.507059e+37
      %v2729 = vand.u32 %v2556, 2147483648
      %v2730 = vor.u32 1.1754944e-38, %v2729
      %v2731 = vsel %vm2728, %v2730, %v2726
      %v2732 = vmul.f32 1.0, %v2731
      %v2733 = vrcp.pop %v2557
      %v2734 = vmul.f32 %v2557, %v2733
      %v2735 = vsub.f32 1.0, %v2734
      %v2736 = vmul.f32 %v2733, %v2735
      %v2737 = vadd.f32 %v2733, %v2736
      %vm2738 = vweird.f32 %v2557
      %vm2739 = vweird.f32 %v2733
      %vm2740 = vmor %vm2738, %vm2739
      %v2741 = vsel %vm2740, %v2733, %v2737
      %v2742 = vand.u32 2147483647, %v2557
      %vm2743 = vcmp.eq.f32.partialorder %v2742, 8.507059e+37
      %v2744 = vand.u32 %v2557, 2147483648
      %v2745 = vor.u32 1.1754944e-38, %v2744
      %v2746 = vsel %vm2743, %v2745, %v2741
      %v2747 = vmul.f32 1.0, %v2746
      %v2748 = vrcp.pop %v2558
      %v2749 = vmul.f32 %v2558, %v2748
      %v2750 = vsub.f32 1.0, %v2749
      %v2751 = vmul.f32 %v2748, %v2750
      %v2752 = vadd.f32 %v2748, %v2751
      %vm2753 = vweird.f32 %v2558
      %vm2754 = vweird.f32 %v2748
      %vm2755 = vmor %vm2753, %vm2754
      %v2756 = vsel %vm2755, %v2748, %v2752
      %v2757 = vand.u32 2147483647, %v2558
      %vm2758 = vcmp.eq.f32.partialorder %v2757, 8.507059e+37
      %v2759 = vand.u32 %v2558, 2147483648
      %v2760 = vor.u32 1.1754944e-38, %v2759
      %v2761 = vsel %vm2758, %v2760, %v2756
      %v2762 = vmul.f32 1.0, %v2761
      %v2763 = vrcp.pop %v2559
      %v2764 = vmul.f32 %v2559, %v2763
      %v2765 = vsub.f32 1.0, %v2764
      %v2766 = vmul.f32 %v2763, %v2765
      %v2767 = vadd.f32 %v2763, %v2766
      %vm2768 = vweird.f32 %v2559
      %vm2769 = vweird.f32 %v2763
      %vm2770 = vmor %vm2768, %vm2769
      %v2771 = vsel %vm2770, %v2763, %v2767
      %v2772 = vand.u32 2147483647, %v2559
      %vm2773 = vcmp.eq.f32.partialorder %v2772, 8.507059e+37
      %v2774 = vand.u32 %v2559, 2147483648
      %v2775 = vor.u32 1.1754944e-38, %v2774
      %v2776 = vsel %vm2773, %v2775, %v2771
      %v2777 = vmul.f32 1.0, %v2776
      %v2778 = vrcp.pop %v2560
      %v2779 = vmul.f32 %v2560, %v2778
      %v2780 = vsub.f32 1.0, %v2779
      %v2781 = vmul.f32 %v2778, %v2780
      %v2782 = vadd.f32 %v2778, %v2781
      %vm2783 = vweird.f32 %v2560
      %vm2784 = vweird.f32 %v2778
      %vm2785 = vmor %vm2783, %vm2784
      %v2786 = vsel %vm2785, %v2778, %v2782
      %v2787 = vand.u32 2147483647, %v2560
      %vm2788 = vcmp.eq.f32.partialorder %v2787, 8.507059e+37
      %v2789 = vand.u32 %v2560, 2147483648
      %v2790 = vor.u32 1.1754944e-38, %v2789
      %v2791 = vsel %vm2788, %v2790, %v2786
      %v2792 = vmul.f32 1.0, %v2791
      %v2793 = vrcp.pop %v2561
      %v2794 = vmul.f32 %v2561, %v2793
      %v2795 = vsub.f32 1.0, %v2794
      %v2796 = vmul.f32 %v2793, %v2795
      %v2797 = vadd.f32 %v2793, %v2796
      %vm2798 = vweird.f32 %v2561
      %vm2799 = vweird.f32 %v2793
      %vm2800 = vmor %vm2798, %vm2799
      %v2801 = vsel %vm2800, %v2793, %v2797
      %v2802 = vand.u32 2147483647, %v2561
      %vm2803 = vcmp.eq.f32.partialorder %v2802, 8.507059e+37
      %v2804 = vand.u32 %v2561, 2147483648
      %v2805 = vor.u32 1.1754944e-38, %v2804
      %v2806 = vsel %vm2803, %v2805, %v2801
      %v2807 = vmul.f32 1.0, %v2806
      %v2808 = vrcp.pop %v2562
      %v2809 = vmul.f32 %v2562, %v2808
      %v2810 = vsub.f32 1.0, %v2809
      %v2811 = vmul.f32 %v2808, %v2810
      %v2812 = vadd.f32 %v2808, %v2811
      %vm2813 = vweird.f32 %v2562
      %vm2814 = vweird.f32 %v2808
      %vm2815 = vmor %vm2813, %vm2814
      %v2816 = vsel %vm2815, %v2808, %v2812
      %v2817 = vand.u32 2147483647, %v2562
      %vm2818 = vcmp.eq.f32.partialorder %v2817, 8.507059e+37
      %v2819 = vand.u32 %v2562, 2147483648
      %v2820 = vor.u32 1.1754944e-38, %v2819
      %v2821 = vsel %vm2818, %v2820, %v2816
      %v2822 = vmul.f32 1.0, %v2821
      %v2823 = vrcp.pop %v2563
      %v2824 = vmul.f32 %v2563, %v2823
      %v2825 = vsub.f32 1.0, %v2824
      %v2826 = vmul.f32 %v2823, %v2825
      %v2827 = vadd.f32 %v2823, %v2826
      %vm2828 = vweird.f32 %v2563
      %vm2829 = vweird.f32 %v2823
      %vm2830 = vmor %vm2828, %vm2829
      %v2831 = vsel %vm2830, %v2823, %v2827
      %v2832 = vand.u32 2147483647, %v2563
      %vm2833 = vcmp.eq.f32.partialorder %v2832, 8.507059e+37
      %v2834 = vand.u32 %v2563, 2147483648
      %v2835 = vor.u32 1.1754944e-38, %v2834
      %v2836 = vsel %vm2833, %v2835, %v2831
      %v2837 = vmul.f32 1.0, %v2836
      %v2838 = vrcp.pop %v2564
      %v2839 = vmul.f32 %v2564, %v2838
      %v2840 = vsub.f32 1.0, %v2839
      %v2841 = vmul.f32 %v2838, %v2840
      %v2842 = vadd.f32 %v2838, %v2841
      %vm2843 = vweird.f32 %v2564
      %vm2844 = vweird.f32 %v2838
      %vm2845 = vmor %vm2843, %vm2844
      %v2846 = vsel %vm2845, %v2838, %v2842
      %v2847 = vand.u32 2147483647, %v2564
      %vm2848 = vcmp.eq.f32.partialorder %v2847, 8.507059e+37
      %v2849 = vand.u32 %v2564, 2147483648
      %v2850 = vor.u32 1.1754944e-38, %v2849
      %v2851 = vsel %vm2848, %v2850, %v2846
      %v2852 = vmul.f32 1.0, %v2851
      %v2853 = vrcp.pop %v2565
      %v2854 = vmul.f32 %v2565, %v2853
      %v2855 = vsub.f32 1.0, %v2854
      %v2856 = vmul.f32 %v2853, %v2855
      %v2857 = vadd.f32 %v2853, %v2856
      %vm2858 = vweird.f32 %v2565
      %vm2859 = vweird.f32 %v2853
      %vm2860 = vmor %vm2858, %vm2859
      %v2861 = vsel %vm2860, %v2853, %v2857
      %v2862 = vand.u32 2147483647, %v2565
      %vm2863 = vcmp.eq.f32.partialorder %v2862, 8.507059e+37
      %v2864 = vand.u32 %v2565, 2147483648
      %v2865 = vor.u32 1.1754944e-38, %v2864
      %v2866 = vsel %vm2863, %v2865, %v2861
      %v2867 = vmul.f32 1.0, %v2866
      %v2868 = vrcp.pop %v2566
      %v2869 = vmul.f32 %v2566, %v2868
      %v2870 = vsub.f32 1.0, %v2869
      %v2871 = vmul.f32 %v2868, %v2870
      %v2872 = vadd.f32 %v2868, %v2871
      %vm2873 = vweird.f32 %v2566
      %vm2874 = vweird.f32 %v2868
      %vm2875 = vmor %vm2873, %vm2874
      %v2876 = vsel %vm2875, %v2868, %v2872
      %v2877 = vand.u32 2147483647, %v2566
      %vm2878 = vcmp.eq.f32.partialorder %v2877, 8.507059e+37
      %v2879 = vand.u32 %v2566, 2147483648
      %v2880 = vor.u32 1.1754944e-38, %v2879
      %v2881 = vsel %vm2878, %v2880, %v2876
      %v2882 = vmul.f32 1.0, %v2881
      %v2883 = vrcp.pop %v2567
      %v2884 = vmul.f32 %v2567, %v2883
      %v2885 = vsub.f32 1.0, %v2884
      %v2886 = vmul.f32 %v2883, %v2885
      %v2887 = vadd.f32 %v2883, %v2886
      %vm2888 = vweird.f32 %v2567
      %vm2889 = vweird.f32 %v2883
      %vm2890 = vmor %vm2888, %vm2889
      %v2891 = vsel %vm2890, %v2883, %v2887
      %v2892 = vand.u32 2147483647, %v2567
      %vm2893 = vcmp.eq.f32.partialorder %v2892, 8.507059e+37
      %v2894 = vand.u32 %v2567, 2147483648
      %v2895 = vor.u32 1.1754944e-38, %v2894
      %v2896 = vsel %vm2893, %v2895, %v2891
      %v2897 = vmul.f32 1.0, %v2896
      %v2898 = vrcp.pop %v2568
      %v2899 = vmul.f32 %v2568, %v2898
      %v2900 = vsub.f32 1.0, %v2899
      %v2901 = vmul.f32 %v2898, %v2900
      %v2902 = vadd.f32 %v2898, %v2901
      %vm2903 = vweird.f32 %v2568
      %vm2904 = vweird.f32 %v2898
      %vm2905 = vmor %vm2903, %vm2904
      %v2906 = vsel %vm2905, %v2898, %v2902
      %v2907 = vand.u32 2147483647, %v2568
      %vm2908 = vcmp.eq.f32.partialorder %v2907, 8.507059e+37
      %v2909 = vand.u32 %v2568, 2147483648
      %v2910 = vor.u32 1.1754944e-38, %v2909
      %v2911 = vsel %vm2908, %v2910, %v2906
      %v2912 = vmul.f32 1.0, %v2911
      %v2913 = vrcp.pop %v2569
      %v2914 = vmul.f32 %v2569, %v2913
      %v2915 = vsub.f32 1.0, %v2914
      %v2916 = vmul.f32 %v2913, %v2915
      %v2917 = vadd.f32 %v2913, %v2916
      %vm2918 = vweird.f32 %v2569
      %vm2919 = vweird.f32 %v2913
      %vm2920 = vmor %vm2918, %vm2919
      %v2921 = vsel %vm2920, %v2913, %v2917
      %v2922 = vand.u32 2147483647, %v2569
      %vm2923 = vcmp.eq.f32.partialorder %v2922, 8.507059e+37
      %v2924 = vand.u32 %v2569, 2147483648
      %v2925 = vor.u32 1.1754944e-38, %v2924
      %v2926 = vsel %vm2923, %v2925, %v2921
      %v2927 = vmul.f32 1.0, %v2926
      %v2928 = vrcp.pop %v2570
      %v2929 = vmul.f32 %v2570, %v2928
      %v2930 = vsub.f32 1.0, %v2929
      %v2931 = vmul.f32 %v2928, %v2930
      %v2932 = vadd.f32 %v2928, %v2931
      %vm2933 = vweird.f32 %v2570
      %vm2934 = vweird.f32 %v2928
      %vm2935 = vmor %vm2933, %vm2934
      %v2936 = vsel %vm2935, %v2928, %v2932
      %v2937 = vand.u32 2147483647, %v2570
      %vm2938 = vcmp.eq.f32.partialorder %v2937, 8.507059e+37
      %v2939 = vand.u32 %v2570, 2147483648
      %v2940 = vor.u32 1.1754944e-38, %v2939
      %v2941 = vsel %vm2938, %v2940, %v2936
      %v2942 = vmul.f32 1.0, %v2941
      %v2943 = vrcp.pop %v2571
      %v2944 = vmul.f32 %v2571, %v2943
      %v2945 = vsub.f32 1.0, %v2944
      %v2946 = vmul.f32 %v2943, %v2945
      %v2947 = vadd.f32 %v2943, %v2946
      %vm2948 = vweird.f32 %v2571
      %vm2949 = vweird.f32 %v2943
      %vm2950 = vmor %vm2948, %vm2949
      %v2951 = vsel %vm2950, %v2943, %v2947
      %v2952 = vand.u32 2147483647, %v2571
      %vm2953 = vcmp.eq.f32.partialorder %v2952, 8.507059e+37
      %v2954 = vand.u32 %v2571, 2147483648
      %v2955 = vor.u32 1.1754944e-38, %v2954
      %v2956 = vsel %vm2953, %v2955, %v2951
      %v2957 = vmul.f32 1.0, %v2956
      %v2958 = vrcp.pop %v2572
      %v2959 = vmul.f32 %v2572, %v2958
      %v2960 = vsub.f32 1.0, %v2959
      %v2961 = vmul.f32 %v2958, %v2960
      %v2962 = vadd.f32 %v2958, %v2961
      %vm2963 = vweird.f32 %v2572
      %vm2964 = vweird.f32 %v2958
      %vm2965 = vmor %vm2963, %vm2964
      %v2966 = vsel %vm2965, %v2958, %v2962
      %v2967 = vand.u32 2147483647, %v2572
      %vm2968 = vcmp.eq.f32.partialorder %v2967, 8.507059e+37
      %v2969 = vand.u32 %v2572, 2147483648
      %v2970 = vor.u32 1.1754944e-38, %v2969
      %v2971 = vsel %vm2968, %v2970, %v2966
      %v2972 = vmul.f32 1.0, %v2971
      %v2973 = vrcp.pop %v2573
      %v2974 = vmul.f32 %v2573, %v2973
      %v2975 = vsub.f32 1.0, %v2974
      %v2976 = vmul.f32 %v2973, %v2975
      %v2977 = vadd.f32 %v2973, %v2976
      %vm2978 = vweird.f32 %v2573
      %vm2979 = vweird.f32 %v2973
      %vm2980 = vmor %vm2978, %vm2979
      %v2981 = vsel %vm2980, %v2973, %v2977
      %v2982 = vand.u32 2147483647, %v2573
      %vm2983 = vcmp.eq.f32.partialorder %v2982, 8.507059e+37
      %v2984 = vand.u32 %v2573, 2147483648
      %v2985 = vor.u32 1.1754944e-38, %v2984
      %v2986 = vsel %vm2983, %v2985, %v2981
      %v2987 = vmul.f32 1.0, %v2986
      %v2988 = vrcp.pop %v2574
      %v2989 = vmul.f32 %v2574, %v2988
      %v2990 = vsub.f32 1.0, %v2989
      %v2991 = vmul.f32 %v2988, %v2990
      %v2992 = vadd.f32 %v2988, %v2991
      %vm2993 = vweird.f32 %v2574
      %vm2994 = vweird.f32 %v2988
      %vm2995 = vmor %vm2993, %vm2994
      %v2996 = vsel %vm2995, %v2988, %v2992
      %v2997 = vand.u32 2147483647, %v2574
      %vm2998 = vcmp.eq.f32.partialorder %v2997, 8.507059e+37
      %v2999 = vand.u32 %v2574, 2147483648
      %v3000 = vor.u32 1.1754944e-38, %v2999
      %v3001 = vsel %vm2998, %v3000, %v2996
      %v3002 = vmul.f32 1.0, %v3001
      %v3003 = vrcp.pop %v2575
      %v3004 = vmul.f32 %v2575, %v3003
      %v3005 = vsub.f32 1.0, %v3004
      %v3006 = vmul.f32 %v3003, %v3005
      %v3007 = vadd.f32 %v3003, %v3006
      %vm3008 = vweird.f32 %v2575
      %vm3009 = vweird.f32 %v3003
      %vm3010 = vmor %vm3008, %vm3009
      %v3011 = vsel %vm3010, %v3003, %v3007
      %v3012 = vand.u32 2147483647, %v2575
      %vm3013 = vcmp.eq.f32.partialorder %v3012, 8.507059e+37
      %v3014 = vand.u32 %v2575, 2147483648
      %v3015 = vor.u32 1.1754944e-38, %v3014
      %v3016 = vsel %vm3013, %v3015, %v3011
      %v3017 = vmul.f32 1.0, %v3016
      %v3018 = vrcp.pop %v2576
      %v3019 = vmul.f32 %v2576, %v3018
      %v3020 = vsub.f32 1.0, %v3019
      %v3021 = vmul.f32 %v3018, %v3020
      %v3022 = vadd.f32 %v3018, %v3021
      %vm3023 = vweird.f32 %v2576
      %vm3024 = vweird.f32 %v3018
      %vm3025 = vmor %vm3023, %vm3024
      %v3026 = vsel %vm3025, %v3018, %v3022
      %v3027 = vand.u32 2147483647, %v2576
      %vm3028 = vcmp.eq.f32.partialorder %v3027, 8.507059e+37
      %v3029 = vand.u32 %v2576, 2147483648
      %v3030 = vor.u32 1.1754944e-38, %v3029
      %v3031 = vsel %vm3028, %v3030, %v3026
      %v3032 = vmul.f32 1.0, %v3031
      %v3033 = vrcp.pop %v2577
      %v3034 = vmul.f32 %v2577, %v3033
      %v3035 = vsub.f32 1.0, %v3034
      %v3036 = vmul.f32 %v3033, %v3035
      %v3037 = vadd.f32 %v3033, %v3036
      %vm3038 = vweird.f32 %v2577
      %vm3039 = vweird.f32 %v3033
      %vm3040 = vmor %vm3038, %vm3039
      %v3041 = vsel %vm3040, %v3033, %v3037
      %v3042 = vand.u32 2147483647, %v2577
      %vm3043 = vcmp.eq.f32.partialorder %v3042, 8.507059e+37
      %v3044 = vand.u32 %v2577, 2147483648
      %v3045 = vor.u32 1.1754944e-38, %v3044
      %v3046 = vsel %vm3043, %v3045, %v3041
      %v3047 = vmul.f32 1.0, %v3046
      %v3048 = vrcp.pop %v2578
      %v3049 = vmul.f32 %v2578, %v3048
      %v3050 = vsub.f32 1.0, %v3049
      %v3051 = vmul.f32 %v3048, %v3050
      %v3052 = vadd.f32 %v3048, %v3051
      %vm3053 = vweird.f32 %v2578
      %vm3054 = vweird.f32 %v3048
      %vm3055 = vmor %vm3053, %vm3054
      %v3056 = vsel %vm3055, %v3048, %v3052
      %v3057 = vand.u32 2147483647, %v2578
      %vm3058 = vcmp.eq.f32.partialorder %v3057, 8.507059e+37
      %v3059 = vand.u32 %v2578, 2147483648
      %v3060 = vor.u32 1.1754944e-38, %v3059
      %v3061 = vsel %vm3058, %v3060, %v3056
      %v3062 = vmul.f32 1.0, %v3061
      %v3063 = vrcp.pop %v2579
      %v3064 = vmul.f32 %v2579, %v3063
      %v3065 = vsub.f32 1.0, %v3064
      %v3066 = vmul.f32 %v3063, %v3065
      %v3067 = vadd.f32 %v3063, %v3066
      %vm3068 = vweird.f32 %v2579
      %vm3069 = vweird.f32 %v3063
      %vm3070 = vmor %vm3068, %vm3069
      %v3071 = vsel %vm3070, %v3063, %v3067
      %v3072 = vand.u32 2147483647, %v2579
      %vm3073 = vcmp.eq.f32.partialorder %v3072, 8.507059e+37
      %v3074 = vand.u32 %v2579, 2147483648
      %v3075 = vor.u32 1.1754944e-38, %v3074
      %v3076 = vsel %vm3073, %v3075, %v3071
      %v3077 = vmul.f32 1.0, %v3076
      %v3078 = vrcp.pop %v2580
      %v3079 = vmul.f32 %v2580, %v3078
      %v3080 = vsub.f32 1.0, %v3079
      %v3081 = vmul.f32 %v3078, %v3080
      %v3082 = vadd.f32 %v3078, %v3081
      %vm3083 = vweird.f32 %v2580
      %vm3084 = vweird.f32 %v3078
      %vm3085 = vmor %vm3083, %vm3084
      %v3086 = vsel %vm3085, %v3078, %v3082
      %v3087 = vand.u32 2147483647, %v2580
      %vm3088 = vcmp.eq.f32.partialorder %v3087, 8.507059e+37
      %v3089 = vand.u32 %v2580, 2147483648
      %v3090 = vor.u32 1.1754944e-38, %v3089
      %v3091 = vsel %vm3088, %v3090, %v3086
      %v3092 = vmul.f32 1.0, %v3091
      %v3093 = vrcp.pop %v2581
      %v3094 = vmul.f32 %v2581, %v3093
      %v3095 = vsub.f32 1.0, %v3094
      %v3096 = vmul.f32 %v3093, %v3095
      %v3097 = vadd.f32 %v3093, %v3096
      %vm3098 = vweird.f32 %v2581
      %vm3099 = vweird.f32 %v3093
      %vm3100 = vmor %vm3098, %vm3099
      %v3101 = vsel %vm3100, %v3093, %v3097
      %v3102 = vand.u32 2147483647, %v2581
      %vm3103 = vcmp.eq.f32.partialorder %v3102, 8.507059e+37
      %v3104 = vand.u32 %v2581, 2147483648
      %v3105 = vor.u32 1.1754944e-38, %v3104
      %v3106 = vsel %vm3103, %v3105, %v3101
      %v3107 = vmul.f32 1.0, %v3106
      %v3108 = vrcp.pop %v2582
      %v3109 = vmul.f32 %v2582, %v3108
      %v3110 = vsub.f32 1.0, %v3109
      %v3111 = vmul.f32 %v3108, %v3110
      %v3112 = vadd.f32 %v3108, %v3111
      %vm3113 = vweird.f32 %v2582
      %vm3114 = vweird.f32 %v3108
      %vm3115 = vmor %vm3113, %vm3114
      %v3116 = vsel %vm3115, %v3108, %v3112
      %v3117 = vand.u32 2147483647, %v2582
      %vm3118 = vcmp.eq.f32.partialorder %v3117, 8.507059e+37
      %v3119 = vand.u32 %v2582, 2147483648
      %v3120 = vor.u32 1.1754944e-38, %v3119
      %v3121 = vsel %vm3118, %v3120, %v3116
      %v3122 = vmul.f32 1.0, %v3121
      %v3123 = vrcp.pop %v2583
      %v3124 = vmul.f32 %v2583, %v3123
      %v3125 = vsub.f32 1.0, %v3124
      %v3126 = vmul.f32 %v3123, %v3125
      %v3127 = vadd.f32 %v3123, %v3126
      %vm3128 = vweird.f32 %v2583
      %vm3129 = vweird.f32 %v3123
      %vm3130 = vmor %vm3128, %vm3129
      %v3131 = vsel %vm3130, %v3123, %v3127
      %v3132 = vand.u32 2147483647, %v2583
      %vm3133 = vcmp.eq.f32.partialorder %v3132, 8.507059e+37
      %v3134 = vand.u32 %v2583, 2147483648
      %v3135 = vor.u32 1.1754944e-38, %v3134
      %v3136 = vsel %vm3133, %v3135, %v3131
      %v3137 = vmul.f32 1.0, %v3136
      %v3138 = vrcp.pop %v2584
      %v3139 = vmul.f32 %v2584, %v3138
      %v3140 = vsub.f32 1.0, %v3139
      %v3141 = vmul.f32 %v3138, %v3140
      %v3142 = vadd.f32 %v3138, %v3141
      %vm3143 = vweird.f32 %v2584
      %vm3144 = vweird.f32 %v3138
      %vm3145 = vmor %vm3143, %vm3144
      %v3146 = vsel %vm3145, %v3138, %v3142
      %v3147 = vand.u32 2147483647, %v2584
      %vm3148 = vcmp.eq.f32.partialorder %v3147, 8.507059e+37
      %v3149 = vand.u32 %v2584, 2147483648
      %v3150 = vor.u32 1.1754944e-38, %v3149
      %v3151 = vsel %vm3148, %v3150, %v3146
      %v3152 = vmul.f32 1.0, %v3151
      %v3153 = vrcp.pop %v2585
      %v3154 = vmul.f32 %v2585, %v3153
      %v3155 = vsub.f32 1.0, %v3154
      %v3156 = vmul.f32 %v3153, %v3155
      %v3157 = vadd.f32 %v3153, %v3156
      %vm3158 = vweird.f32 %v2585
      %vm3159 = vweird.f32 %v3153
      %vm3160 = vmor %vm3158, %vm3159
      %v3161 = vsel %vm3160, %v3153, %v3157
      %v3162 = vand.u32 2147483647, %v2585
      %vm3163 = vcmp.eq.f32.partialorder %v3162, 8.507059e+37
      %v3164 = vand.u32 %v2585, 2147483648
      %v3165 = vor.u32 1.1754944e-38, %v3164
      %v3166 = vsel %vm3163, %v3165, %v3161
      %v3167 = vmul.f32 1.0, %v3166
      %v3168 = vrcp.pop %v2586
      %v3169 = vmul.f32 %v2586, %v3168
      %v3170 = vsub.f32 1.0, %v3169
      %v3171 = vmul.f32 %v3168, %v3170
      %v3172 = vadd.f32 %v3168, %v3171
      %vm3173 = vweird.f32 %v2586
      %vm3174 = vweird.f32 %v3168
      %vm3175 = vmor %vm3173, %vm3174
      %v3176 = vsel %vm3175, %v3168, %v3172
      %v3177 = vand.u32 2147483647, %v2586
      %vm3178 = vcmp.eq.f32.partialorder %v3177, 8.507059e+37
      %v3179 = vand.u32 %v2586, 2147483648
      %v3180 = vor.u32 1.1754944e-38, %v3179
      %v3181 = vsel %vm3178, %v3180, %v3176
      %v3182 = vmul.f32 1.0, %v3181
      %v3183 = vrcp.pop %v2587
      %v3184 = vmul.f32 %v2587, %v3183
      %v3185 = vsub.f32 1.0, %v3184
      %v3186 = vmul.f32 %v3183, %v3185
      %v3187 = vadd.f32 %v3183, %v3186
      %vm3188 = vweird.f32 %v2587
      %vm3189 = vweird.f32 %v3183
      %vm3190 = vmor %vm3188, %vm3189
      %v3191 = vsel %vm3190, %v3183, %v3187
      %v3192 = vand.u32 2147483647, %v2587
      %vm3193 = vcmp.eq.f32.partialorder %v3192, 8.507059e+37
      %v3194 = vand.u32 %v2587, 2147483648
      %v3195 = vor.u32 1.1754944e-38, %v3194
      %v3196 = vsel %vm3193, %v3195, %v3191
      %v3197 = vmul.f32 1.0, %v3196
      %v3198 = vrcp.pop %v2588
      %v3199 = vmul.f32 %v2588, %v3198
      %v3200 = vsub.f32 1.0, %v3199
      %v3201 = vmul.f32 %v3198, %v3200
      %v3202 = vadd.f32 %v3198, %v3201
      %vm3203 = vweird.f32 %v2588
      %vm3204 = vweird.f32 %v3198
      %vm3205 = vmor %vm3203, %vm3204
      %v3206 = vsel %vm3205, %v3198, %v3202
      %v3207 = vand.u32 2147483647, %v2588
      %vm3208 = vcmp.eq.f32.partialorder %v3207, 8.507059e+37
      %v3209 = vand.u32 %v2588, 2147483648
      %v3210 = vor.u32 1.1754944e-38, %v3209
      %v3211 = vsel %vm3208, %v3210, %v3206
      %v3212 = vmul.f32 1.0, %v3211
      %v3213 = vrcp.pop %v2589
      %v3214 = vmul.f32 %v2589, %v3213
      %v3215 = vsub.f32 1.0, %v3214
      %v3216 = vmul.f32 %v3213, %v3215
      %v3217 = vadd.f32 %v3213, %v3216
      %vm3218 = vweird.f32 %v2589
      %vm3219 = vweird.f32 %v3213
      %vm3220 = vmor %vm3218, %vm3219
      %v3221 = vsel %vm3220, %v3213, %v3217
      %v3222 = vand.u32 2147483647, %v2589
      %vm3223 = vcmp.eq.f32.partialorder %v3222, 8.507059e+37
      %v3224 = vand.u32 %v2589, 2147483648
      %v3225 = vor.u32 1.1754944e-38, %v3224
      %v3226 = vsel %vm3223, %v3225, %v3221
      %v3227 = vmul.f32 1.0, %v3226
      %v3228 = vrcp.pop %v2590
      %v3229 = vmul.f32 %v2590, %v3228
      %v3230 = vsub.f32 1.0, %v3229
      %v3231 = vmul.f32 %v3228, %v3230
      %v3232 = vadd.f32 %v3228, %v3231
      %vm3233 = vweird.f32 %v2590
      %vm3234 = vweird.f32 %v3228
      %vm3235 = vmor %vm3233, %vm3234
      %v3236 = vsel %vm3235, %v3228, %v3232
      %v3237 = vand.u32 2147483647, %v2590
      %vm3238 = vcmp.eq.f32.partialorder %v3237, 8.507059e+37
      %v3239 = vand.u32 %v2590, 2147483648
      %v3240 = vor.u32 1.1754944e-38, %v3239
      %v3241 = vsel %vm3238, %v3240, %v3236
      %v3242 = vmul.f32 1.0, %v3241
      %v3243 = vrcp.pop %v2591
      %v3244 = vmul.f32 %v2591, %v3243
      %v3245 = vsub.f32 1.0, %v3244
      %v3246 = vmul.f32 %v3243, %v3245
      %v3247 = vadd.f32 %v3243, %v3246
      %vm3248 = vweird.f32 %v2591
      %vm3249 = vweird.f32 %v3243
      %vm3250 = vmor %vm3248, %vm3249
      %v3251 = vsel %vm3250, %v3243, %v3247
      %v3252 = vand.u32 2147483647, %v2591
      %vm3253 = vcmp.eq.f32.partialorder %v3252, 8.507059e+37
      %v3254 = vand.u32 %v2591, 2147483648
      %v3255 = vor.u32 1.1754944e-38, %v3254
      %v3256 = vsel %vm3253, %v3255, %v3251
      %v3257 = vmul.f32 1.0, %v3256
      %v3258 = vrcp.pop %v2592
      %v3259 = vmul.f32 %v2592, %v3258
      %v3260 = vsub.f32 1.0, %v3259
      %v3261 = vmul.f32 %v3258, %v3260
      %v3262 = vadd.f32 %v3258, %v3261
      %vm3263 = vweird.f32 %v2592
      %vm3264 = vweird.f32 %v3258
      %vm3265 = vmor %vm3263, %vm3264
      %v3266 = vsel %vm3265, %v3258, %v3262
      %v3267 = vand.u32 2147483647, %v2592
      %vm3268 = vcmp.eq.f32.partialorder %v3267, 8.507059e+37
      %v3269 = vand.u32 %v2592, 2147483648
      %v3270 = vor.u32 1.1754944e-38, %v3269
      %v3271 = vsel %vm3268, %v3270, %v3266
      %v3272 = vmul.f32 1.0, %v3271
      %v3273 = vrcp.pop %v2593
      %v3274 = vmul.f32 %v2593, %v3273
      %v3275 = vsub.f32 1.0, %v3274
      %v3276 = vmul.f32 %v3273, %v3275
      %v3277 = vadd.f32 %v3273, %v3276
      %vm3278 = vweird.f32 %v2593
      %vm3279 = vweird.f32 %v3273
      %vm3280 = vmor %vm3278, %vm3279
      %v3281 = vsel %vm3280, %v3273, %v3277
      %v3282 = vand.u32 2147483647, %v2593
      %vm3283 = vcmp.eq.f32.partialorder %v3282, 8.507059e+37
      %v3284 = vand.u32 %v2593, 2147483648
      %v3285 = vor.u32 1.1754944e-38, %v3284
      %v3286 = vsel %vm3283, %v3285, %v3281
      %v3287 = vmul.f32 1.0, %v3286
      %v3288 = vrcp.pop %v2594
      %v3289 = vmul.f32 %v2594, %v3288
      %v3290 = vsub.f32 1.0, %v3289
      %v3291 = vmul.f32 %v3288, %v3290
      %v3292 = vadd.f32 %v3288, %v3291
      %vm3293 = vweird.f32 %v2594
      %vm3294 = vweird.f32 %v3288
      %vm3295 = vmor %vm3293, %vm3294
      %v3296 = vsel %vm3295, %v3288, %v3292
      %v3297 = vand.u32 2147483647, %v2594
      %vm3298 = vcmp.eq.f32.partialorder %v3297, 8.507059e+37
      %v3299 = vand.u32 %v2594, 2147483648
      %v3300 = vor.u32 1.1754944e-38, %v3299
      %v3301 = vsel %vm3298, %v3300, %v3296
      %v3302 = vmul.f32 1.0, %v3301
      %v3303 = vrcp.pop %v2595
      %v3304 = vmul.f32 %v2595, %v3303
      %v3305 = vsub.f32 1.0, %v3304
      %v3306 = vmul.f32 %v3303, %v3305
      %v3307 = vadd.f32 %v3303, %v3306
      %vm3308 = vweird.f32 %v2595
      %vm3309 = vweird.f32 %v3303
      %vm3310 = vmor %vm3308, %vm3309
      %v3311 = vsel %vm3310, %v3303, %v3307
      %v3312 = vand.u32 2147483647, %v2595
      %vm3313 = vcmp.eq.f32.partialorder %v3312, 8.507059e+37
      %v3314 = vand.u32 %v2595, 2147483648
      %v3315 = vor.u32 1.1754944e-38, %v3314
      %v3316 = vsel %vm3313, %v3315, %v3311
      %v3317 = vmul.f32 1.0, %v3316
      %v3318 = vrcp.pop %v2596
      %v3319 = vmul.f32 %v2596, %v3318
      %v3320 = vsub.f32 1.0, %v3319
      %v3321 = vmul.f32 %v3318, %v3320
      %v3322 = vadd.f32 %v3318, %v3321
      %vm3323 = vweird.f32 %v2596
      %vm3324 = vweird.f32 %v3318
      %vm3325 = vmor %vm3323, %vm3324
      %v3326 = vsel %vm3325, %v3318, %v3322
      %v3327 = vand.u32 2147483647, %v2596
      %vm3328 = vcmp.eq.f32.partialorder %v3327, 8.507059e+37
      %v3329 = vand.u32 %v2596, 2147483648
      %v3330 = vor.u32 1.1754944e-38, %v3329
      %v3331 = vsel %vm3328, %v3330, %v3326
      %v3332 = vmul.f32 1.0, %v3331
      %v3333 = vrcp.pop %v2597
      %v3334 = vmul.f32 %v2597, %v3333
      %v3335 = vsub.f32 1.0, %v3334
      %v3336 = vmul.f32 %v3333, %v3335
      %v3337 = vadd.f32 %v3333, %v3336
      %vm3338 = vweird.f32 %v2597
      %vm3339 = vweird.f32 %v3333
      %vm3340 = vmor %vm3338, %vm3339
      %v3341 = vsel %vm3340, %v3333, %v3337
      %v3342 = vand.u32 2147483647, %v2597
      %vm3343 = vcmp.eq.f32.partialorder %v3342, 8.507059e+37
      %v3344 = vand.u32 %v2597, 2147483648
      %v3345 = vor.u32 1.1754944e-38, %v3344
      %v3346 = vsel %vm3343, %v3345, %v3341
      %v3347 = vmul.f32 1.0, %v3346
      %v3348 = vrcp.pop %v2598
      %v3349 = vmul.f32 %v2598, %v3348
      %v3350 = vsub.f32 1.0, %v3349
      %v3351 = vmul.f32 %v3348, %v3350
      %v3352 = vadd.f32 %v3348, %v3351
      %vm3353 = vweird.f32 %v2598
      %vm3354 = vweird.f32 %v3348
      %vm3355 = vmor %vm3353, %vm3354
      %v3356 = vsel %vm3355, %v3348, %v3352
      %v3357 = vand.u32 2147483647, %v2598
      %vm3358 = vcmp.eq.f32.partialorder %v3357, 8.507059e+37
      %v3359 = vand.u32 %v2598, 2147483648
      %v3360 = vor.u32 1.1754944e-38, %v3359
      %v3361 = vsel %vm3358, %v3360, %v3356
      %v3362 = vmul.f32 1.0, %v3361
      %v3363 = vrcp.pop %v2599
      %v3364 = vmul.f32 %v2599, %v3363
      %v3365 = vsub.f32 1.0, %v3364
      %v3366 = vmul.f32 %v3363, %v3365
      %v3367 = vadd.f32 %v3363, %v3366
      %vm3368 = vweird.f32 %v2599
      %vm3369 = vweird.f32 %v3363
      %vm3370 = vmor %vm3368, %vm3369
      %v3371 = vsel %vm3370, %v3363, %v3367
      %v3372 = vand.u32 2147483647, %v2599
      %vm3373 = vcmp.eq.f32.partialorder %v3372, 8.507059e+37
      %v3374 = vand.u32 %v2599, 2147483648
      %v3375 = vor.u32 1.1754944e-38, %v3374
      %v3376 = vsel %vm3373, %v3375, %v3371
      %v3377 = vmul.f32 1.0, %v3376
      %v3378 = vrcp.pop %v2600
      %v3379 = vmul.f32 %v2600, %v3378
      %v3380 = vsub.f32 1.0, %v3379
      %v3381 = vmul.f32 %v3378, %v3380
      %v3382 = vadd.f32 %v3378, %v3381
      %vm3383 = vweird.f32 %v2600
      %vm3384 = vweird.f32 %v3378
      %vm3385 = vmor %vm3383, %vm3384
      %v3386 = vsel %vm3385, %v3378, %v3382
      %v3387 = vand.u32 2147483647, %v2600
      %vm3388 = vcmp.eq.f32.partialorder %v3387, 8.507059e+37
      %v3389 = vand.u32 %v2600, 2147483648
      %v3390 = vor.u32 1.1754944e-38, %v3389
      %v3391 = vsel %vm3388, %v3390, %v3386
      %v3392 = vmul.f32 1.0, %v3391
      %v3393 = vrcp.pop %v2601
      %v3394 = vmul.f32 %v2601, %v3393
      %v3395 = vsub.f32 1.0, %v3394
      %v3396 = vmul.f32 %v3393, %v3395
      %v3397 = vadd.f32 %v3393, %v3396
      %vm3398 = vweird.f32 %v2601
      %vm3399 = vweird.f32 %v3393
      %vm3400 = vmor %vm3398, %vm3399
      %v3401 = vsel %vm3400, %v3393, %v3397
      %v3402 = vand.u32 2147483647, %v2601
      %vm3403 = vcmp.eq.f32.partialorder %v3402, 8.507059e+37
      %v3404 = vand.u32 %v2601, 2147483648
      %v3405 = vor.u32 1.1754944e-38, %v3404
      %v3406 = vsel %vm3403, %v3405, %v3401
      %v3407 = vmul.f32 1.0, %v3406
      %v3408 = vrcp.pop %v2602
      %v3409 = vmul.f32 %v2602, %v3408
      %v3410 = vsub.f32 1.0, %v3409
      %v3411 = vmul.f32 %v3408, %v3410
      %v3412 = vadd.f32 %v3408, %v3411
      %vm3413 = vweird.f32 %v2602
      %vm3414 = vweird.f32 %v3408
      %vm3415 = vmor %vm3413, %vm3414
      %v3416 = vsel %vm3415, %v3408, %v3412
      %v3417 = vand.u32 2147483647, %v2602
      %vm3418 = vcmp.eq.f32.partialorder %v3417, 8.507059e+37
      %v3419 = vand.u32 %v2602, 2147483648
      %v3420 = vor.u32 1.1754944e-38, %v3419
      %v3421 = vsel %vm3418, %v3420, %v3416
      %v3422 = vmul.f32 1.0, %v3421
      %v3423 = vrcp.pop %v2603
      %v3424 = vmul.f32 %v2603, %v3423
      %v3425 = vsub.f32 1.0, %v3424
      %v3426 = vmul.f32 %v3423, %v3425
      %v3427 = vadd.f32 %v3423, %v3426
      %vm3428 = vweird.f32 %v2603
      %vm3429 = vweird.f32 %v3423
      %vm3430 = vmor %vm3428, %vm3429
      %v3431 = vsel %vm3430, %v3423, %v3427
      %v3432 = vand.u32 2147483647, %v2603
      %vm3433 = vcmp.eq.f32.partialorder %v3432, 8.507059e+37
      %v3434 = vand.u32 %v2603, 2147483648
      %v3435 = vor.u32 1.1754944e-38, %v3434
      %v3436 = vsel %vm3433, %v3435, %v3431
      %v3437 = vmul.f32 1.0, %v3436
      %v3438 = vrcp.pop %v2604
      %v3439 = vmul.f32 %v2604, %v3438
      %v3440 = vsub.f32 1.0, %v3439
      %v3441 = vmul.f32 %v3438, %v3440
      %v3442 = vadd.f32 %v3438, %v3441
      %vm3443 = vweird.f32 %v2604
      %vm3444 = vweird.f32 %v3438
      %vm3445 = vmor %vm3443, %vm3444
      %v3446 = vsel %vm3445, %v3438, %v3442
      %v3447 = vand.u32 2147483647, %v2604
      %vm3448 = vcmp.eq.f32.partialorder %v3447, 8.507059e+37
      %v3449 = vand.u32 %v2604, 2147483648
      %v3450 = vor.u32 1.1754944e-38, %v3449
      %v3451 = vsel %vm3448, %v3450, %v3446
      %v3452 = vmul.f32 1.0, %v3451
      %v3453 = vrcp.pop %v2605
      %v3454 = vmul.f32 %v2605, %v3453
      %v3455 = vsub.f32 1.0, %v3454
      %v3456 = vmul.f32 %v3453, %v3455
      %v3457 = vadd.f32 %v3453, %v3456
      %vm3458 = vweird.f32 %v2605
      %vm3459 = vweird.f32 %v3453
      %vm3460 = vmor %vm3458, %vm3459
      %v3461 = vsel %vm3460, %v3453, %v3457
      %v3462 = vand.u32 2147483647, %v2605
      %vm3463 = vcmp.eq.f32.partialorder %v3462, 8.507059e+37
      %v3464 = vand.u32 %v2605, 2147483648
      %v3465 = vor.u32 1.1754944e-38, %v3464
      %v3466 = vsel %vm3463, %v3465, %v3461
      %v3467 = vmul.f32 1.0, %v3466
      %v3468 = vrcp.pop %v2606
      %v3469 = vmul.f32 %v2606, %v3468
      %v3470 = vsub.f32 1.0, %v3469
      %v3471 = vmul.f32 %v3468, %v3470
      %v3472 = vadd.f32 %v3468, %v3471
      %vm3473 = vweird.f32 %v2606
      %vm3474 = vweird.f32 %v3468
      %vm3475 = vmor %vm3473, %vm3474
      %v3476 = vsel %vm3475, %v3468, %v3472
      %v3477 = vand.u32 2147483647, %v2606
      %vm3478 = vcmp.eq.f32.partialorder %v3477, 8.507059e+37
      %v3479 = vand.u32 %v2606, 2147483648
      %v3480 = vor.u32 1.1754944e-38, %v3479
      %v3481 = vsel %vm3478, %v3480, %v3476
      %v3482 = vmul.f32 1.0, %v3481
      %v3483 = vrcp.pop %v2607
      %v3484 = vmul.f32 %v2607, %v3483
      %v3485 = vsub.f32 1.0, %v3484
      %v3486 = vmul.f32 %v3483, %v3485
      %v3487 = vadd.f32 %v3483, %v3486
      %vm3488 = vweird.f32 %v2607
      %vm3489 = vweird.f32 %v3483
      %vm3490 = vmor %vm3488, %vm3489
      %v3491 = vsel %vm3490, %v3483, %v3487
      %v3492 = vand.u32 2147483647, %v2607
      %vm3493 = vcmp.eq.f32.partialorder %v3492, 8.507059e+37
      %v3494 = vand.u32 %v2607, 2147483648
      %v3495 = vor.u32 1.1754944e-38, %v3494
      %v3496 = vsel %vm3493, %v3495, %v3491
      %v3497 = vmul.f32 1.0, %v3496
      %v3498 = vrcp.pop %v2608
      %v3499 = vmul.f32 %v2608, %v3498
      %v3500 = vsub.f32 1.0, %v3499
      %v3501 = vmul.f32 %v3498, %v3500
      %v3502 = vadd.f32 %v3498, %v3501
      %vm3503 = vweird.f32 %v2608
      %vm3504 = vweird.f32 %v3498
      %vm3505 = vmor %vm3503, %vm3504
      %v3506 = vsel %vm3505, %v3498, %v3502
      %v3507 = vand.u32 2147483647, %v2608
      %vm3508 = vcmp.eq.f32.partialorder %v3507, 8.507059e+37
      %v3509 = vand.u32 %v2608, 2147483648
      %v3510 = vor.u32 1.1754944e-38, %v3509
      %v3511 = vsel %vm3508, %v3510, %v3506
      %v3512 = vmul.f32 1.0, %v3511
      %v3513 = vrcp.pop %v2609
      %v3514 = vmul.f32 %v2609, %v3513
      %v3515 = vsub.f32 1.0, %v3514
      %v3516 = vmul.f32 %v3513, %v3515
      %v3517 = vadd.f32 %v3513, %v3516
      %vm3518 = vweird.f32 %v2609
      %vm3519 = vweird.f32 %v3513
      %vm3520 = vmor %vm3518, %vm3519
      %v3521 = vsel %vm3520, %v3513, %v3517
      %v3522 = vand.u32 2147483647, %v2609
      %vm3523 = vcmp.eq.f32.partialorder %v3522, 8.507059e+37
      %v3524 = vand.u32 %v2609, 2147483648
      %v3525 = vor.u32 1.1754944e-38, %v3524
      %v3526 = vsel %vm3523, %v3525, %v3521
      %v3527 = vmul.f32 1.0, %v3526
      %v3528 = vrcp.pop %v2610
      %v3529 = vmul.f32 %v2610, %v3528
      %v3530 = vsub.f32 1.0, %v3529
      %v3531 = vmul.f32 %v3528, %v3530
      %v3532 = vadd.f32 %v3528, %v3531
      %vm3533 = vweird.f32 %v2610
      %vm3534 = vweird.f32 %v3528
      %vm3535 = vmor %vm3533, %vm3534
      %v3536 = vsel %vm3535, %v3528, %v3532
      %v3537 = vand.u32 2147483647, %v2610
      %vm3538 = vcmp.eq.f32.partialorder %v3537, 8.507059e+37
      %v3539 = vand.u32 %v2610, 2147483648
      %v3540 = vor.u32 1.1754944e-38, %v3539
      %v3541 = vsel %vm3538, %v3540, %v3536
      %v3542 = vmul.f32 1.0, %v3541
      %v3543 = vrcp.pop %v2611
      %v3544 = vmul.f32 %v2611, %v3543
      %v3545 = vsub.f32 1.0, %v3544
      %v3546 = vmul.f32 %v3543, %v3545
      %v3547 = vadd.f32 %v3543, %v3546
      %vm3548 = vweird.f32 %v2611
      %vm3549 = vweird.f32 %v3543
      %vm3550 = vmor %vm3548, %vm3549
      %v3551 = vsel %vm3550, %v3543, %v3547
      %v3552 = vand.u32 2147483647, %v2611
      %vm3553 = vcmp.eq.f32.partialorder %v3552, 8.507059e+37
      %v3554 = vand.u32 %v2611, 2147483648
      %v3555 = vor.u32 1.1754944e-38, %v3554
      %v3556 = vsel %vm3553, %v3555, %v3551
      %v3557 = vmul.f32 1.0, %v3556
      %v3558 = vrcp.pop %v2612
      %v3559 = vmul.f32 %v2612, %v3558
      %v3560 = vsub.f32 1.0, %v3559
      %v3561 = vmul.f32 %v3558, %v3560
      %v3562 = vadd.f32 %v3558, %v3561
      %vm3563 = vweird.f32 %v2612
      %vm3564 = vweird.f32 %v3558
      %vm3565 = vmor %vm3563, %vm3564
      %v3566 = vsel %vm3565, %v3558, %v3562
      %v3567 = vand.u32 2147483647, %v2612
      %vm3568 = vcmp.eq.f32.partialorder %v3567, 8.507059e+37
      %v3569 = vand.u32 %v2612, 2147483648
      %v3570 = vor.u32 1.1754944e-38, %v3569
      %v3571 = vsel %vm3568, %v3570, %v3566
      %v3572 = vmul.f32 1.0, %v3571
      %v3573 = vmul.f32 %v2293, %v2627
      %v3574 = vmul.f32 %v2294, %v2642
      %v3575 = vmul.f32 %v2295, %v2657
      %v3576 = vmul.f32 %v2296, %v2672
      %v3577 = vmul.f32 %v2297, %v2687
      %v3578 = vmul.f32 %v2298, %v2702
      %v3579 = vmul.f32 %v2299, %v2717
      %v3580 = vmul.f32 %v2300, %v2732
      %v3581 = vmul.f32 %v2301, %v2747
      %v3582 = vmul.f32 %v2302, %v2762
      %v3583 = vmul.f32 %v2303, %v2777
      %v3584 = vmul.f32 %v2304, %v2792
      %v3585 = vmul.f32 %v2305, %v2807
      %v3586 = vmul.f32 %v2306, %v2822
      %v3587 = vmul.f32 %v2307, %v2837
      %v3588 = vmul.f32 %v2308, %v2852
      %v3589 = vmul.f32 %v2309, %v2867
      %v3590 = vmul.f32 %v2310, %v2882
      %v3591 = vmul.f32 %v2311, %v2897
      %v3592 = vmul.f32 %v2312, %v2912
      %v3593 = vmul.f32 %v2313, %v2927
      %v3594 = vmul.f32 %v2314, %v2942
      %v3595 = vmul.f32 %v2315, %v2957
      %v3596 = vmul.f32 %v2316, %v2972
      %v3597 = vmul.f32 %v2317, %v2987
      %v3598 = vmul.f32 %v2318, %v3002
      %v3599 = vmul.f32 %v2319, %v3017
      %v3600 = vmul.f32 %v2320, %v3032
      %v3601 = vmul.f32 %v2321, %v3047
      %v3602 = vmul.f32 %v2322, %v3062
      %v3603 = vmul.f32 %v2323, %v3077
      %v3604 = vmul.f32 %v2324, %v3092
      %v3605 = vmul.f32 %v2325, %v3107
      %v3606 = vmul.f32 %v2326, %v3122
      %v3607 = vmul.f32 %v2327, %v3137
      %v3608 = vmul.f32 %v2328, %v3152
      %v3609 = vmul.f32 %v2329, %v3167
      %v3610 = vmul.f32 %v2330, %v3182
      %v3611 = vmul.f32 %v2331, %v3197
      %v3612 = vmul.f32 %v2332, %v3212
      %v3613 = vmul.f32 %v2333, %v3227
      %v3614 = vmul.f32 %v2334, %v3242
      %v3615 = vmul.f32 %v2335, %v3257
      %v3616 = vmul.f32 %v2336, %v3272
      %v3617 = vmul.f32 %v2337, %v3287
      %v3618 = vmul.f32 %v2338, %v3302
      %v3619 = vmul.f32 %v2339, %v3317
      %v3620 = vmul.f32 %v2340, %v3332
      %v3621 = vmul.f32 %v2341, %v3347
      %v3622 = vmul.f32 %v2342, %v3362
      %v3623 = vmul.f32 %v2343, %v3377
      %v3624 = vmul.f32 %v2344, %v3392
      %v3625 = vmul.f32 %v2345, %v3407
      %v3626 = vmul.f32 %v2346, %v3422
      %v3627 = vmul.f32 %v2347, %v3437
      %v3628 = vmul.f32 %v2348, %v3452
      %v3629 = vmul.f32 %v2349, %v3467
      %v3630 = vmul.f32 %v2350, %v3482
      %v3631 = vmul.f32 %v2351, %v3497
      %v3632 = vmul.f32 %v2352, %v3512
      %v3633 = vmul.f32 %v2353, %v3527
      %v3634 = vmul.f32 %v2354, %v3542
      %v3635 = vmul.f32 %v2355, %v3557
      %v3636 = vmul.f32 %v2356, %v3572
      %v3637 = vld [vmem:[%s5] sm:$0x3]
      %v3638 = vld [vmem:[%s6] sm:$0x3]
      %3640 = vset.pattern.permute.xlu0 0
      %3641 = vperm.xlu0 %3640, %v3638
      %v3642 = vpop.permute.xlu0 %3641
      %3644 = vmatpush.xpose.msra.mxu0 %v3588
      %3645 = vmatpush.xpose.msra.mxu0 %v3587
      %3646 = vmatpush.xpose.msra.mxu0 %v3586
      %3647 = vmatpush.xpose.msra.mxu0 %v3585
      %3648 = vmatpush.xpose.msra.mxu0 %v3584
      %3649 = vmatpush.xpose.msra.mxu0 %v3583
      %3650 = vmatpush.xpose.msra.mxu0 %v3582
      %3651 = vmatpush.xpose.msra.mxu0 %v3581
      %3652 = vmatpush.xpose.msra.mxu0 %v3580
      %3653 = vmatpush.xpose.msra.mxu0 %v3579
      %3654 = vmatpush.xpose.msra.mxu0 %v3578
      %3655 = vmatpush.xpose.msra.mxu0 %v3577
      %3656 = vmatpush.xpose.msra.mxu0 %v3576
      %3657 = vmatpush.xpose.msra.mxu0 %v3575
      %3658 = vmatpush.xpose.msra.mxu0 %v3574
      %3659 = vmatpush.xpose.msra.mxu0 %v3573
      %3660 = vmatmul.f32.gmra.mxu0 %v3637
      %v3661 = vpop.f32.mrf.mxu0
      %v3662 = vadd.f32 %v3642, %v3661
      %3663 = vdwg.mxu0
      %3664 = vmatpush.xpose.msra.mxu0 %v3604
      %3665 = vmatpush.xpose.msra.mxu0 %v3603
      %3666 = vmatpush.xpose.msra.mxu0 %v3602
      %3667 = vmatpush.xpose.msra.mxu0 %v3601
      %3668 = vmatpush.xpose.msra.mxu0 %v3600
      %3669 = vmatpush.xpose.msra.mxu0 %v3599
      %3670 = vmatpush.xpose.msra.mxu0 %v3598
      %3671 = vmatpush.xpose.msra.mxu0 %v3597
      %3672 = vmatpush.xpose.msra.mxu0 %v3596
      %3673 = vmatpush.xpose.msra.mxu0 %v3595
      %3674 = vmatpush.xpose.msra.mxu0 %v3594
      %3675 = vmatpush.xpose.msra.mxu0 %v3593
      %3676 = vmatpush.xpose.msra.mxu0 %v3592
      %3677 = vmatpush.xpose.msra.mxu0 %v3591
      %3678 = vmatpush.xpose.msra.mxu0 %v3590
      %3679 = vmatpush.xpose.msra.mxu0 %v3589
      %3680 = vmatmul.f32.gmra.mxu0 %v3637
      %v3681 = vpop.f32.mrf.mxu0
      %v3682 = vadd.f32 %v3642, %v3681
      %3683 = vdwg.mxu0
      %3684 = vmatpush.xpose.msra.mxu0 %v3620
      %3685 = vmatpush.xpose.msra.mxu0 %v3619
      %3686 = vmatpush.xpose.msra.mxu0 %v3618
      %3687 = vmatpush.xpose.msra.mxu0 %v3617
      %3688 = vmatpush.xpose.msra.mxu0 %v3616
      %3689 = vmatpush.xpose.msra.mxu0 %v3615
      %3690 = vmatpush.xpose.msra.mxu0 %v3614
      %3691 = vmatpush.xpose.msra.mxu0 %v3613
      %3692 = vmatpush.xpose.msra.mxu0 %v3612
      %3693 = vmatpush.xpose.msra.mxu0 %v3611
      %3694 = vmatpush.xpose.msra.mxu0 %v3610
      %3695 = vmatpush.xpose.msra.mxu0 %v3609
      %3696 = vmatpush.xpose.msra.mxu0 %v3608
      %3697 = vmatpush.xpose.msra.mxu0 %v3607
      %3698 = vmatpush.xpose.msra.mxu0 %v3606
      %3699 = vmatpush.xpose.msra.mxu0 %v3605
      %3700 = vmatmul.f32.gmra.mxu0 %v3637
      %v3701 = vpop.f32.mrf.mxu0
      %v3702 = vadd.f32 %v3642, %v3701
      %3703 = vdwg.mxu0
      %3704 = vmatpush.xpose.msra.mxu0 %v3636
      %3705 = vmatpush.xpose.msra.mxu0 %v3635
      %3706 = vmatpush.xpose.msra.mxu0 %v3634
      %3707 = vmatpush.xpose.msra.mxu0 %v3633
      %3708 = vmatpush.xpose.msra.mxu0 %v3632
      %3709 = vmatpush.xpose.msra.mxu0 %v3631
      %3710 = vmatpush.xpose.msra.mxu0 %v3630
      %3711 = vmatpush.xpose.msra.mxu0 %v3629
      %3712 = vmatpush.xpose.msra.mxu0 %v3628
      %3713 = vmatpush.xpose.msra.mxu0 %v3627
      %3714 = vmatpush.xpose.msra.mxu0 %v3626
      %3715 = vmatpush.xpose.msra.mxu0 %v3625
      %3716 = vmatpush.xpose.msra.mxu0 %v3624
      %3717 = vmatpush.xpose.msra.mxu0 %v3623
      %3718 = vmatpush.xpose.msra.mxu0 %v3622
      %3719 = vmatpush.xpose.msra.mxu0 %v3621
      %3720 = vmatmul.f32.gmra.mxu0 %v3637
      %v3721 = vpop.f32.mrf.mxu0
      %v3722 = vadd.f32 %v3642, %v3721
      %3723 = vdwg.mxu0
      %v3728 = vrot.slane %v3682, 6
      %v3729 = vrot.slane %v3702, 4
      %v3730 = vrot.slane %v3722, 2
      %vm3731 = vcmask 1041408
      %v3732 = vsel %vm3731, %v3662, %v3728
      %vm3733 = vcmask 1045508
      %v3734 = vsel %vm3733, %v3729, %v3730
      %vm3735 = vcmask 1043456
      %v3736 = vsel %vm3735, %v3732, %v3734
      %3738 = vst [vmem:[%s456] sm:$0xff] %v3736
      %v3739 = vlaneseq
      %v3740 = vand.u32 %v3739, 127
      %v3741 = vadd.s32 %v3740, 128
      %v3742 = vadd.s32 %v3740, 256
      %v3743 = vadd.s32 %v3740, 384
      %v3744 = vadd.s32 %v1500, %v3740
      %v3745 = vadd.s32 %v1500, %v3741
      %v3746 = vadd.s32 %v1500, %v3742
      %v3747 = vadd.s32 %v1500, %v3743
      %vm3748 = vcmp.lt.s32.totalorder %v3744, 2500
      %vm3749 = vcmp.lt.s32.totalorder %v3745, 2500
      %vm3750 = vcmp.lt.s32.totalorder %v3746, 2500
      %vm3751 = vcmp.lt.s32.totalorder %v3747, 2500
      %v3752 = vsel %vm3748, 1, 0
      %v3753 = vsel %vm3749, 1, 0
      %v3754 = vsel %vm3750, 1, 0
      %v3755 = vsel %vm3751, 1, 0
      %vm3756 = vcmp.eq.s32.totalorder %v3752, 1
      %vm3757 = vcmp.eq.s32.totalorder %v3753, 1
      %vm3758 = vcmp.eq.s32.totalorder %v3754, 1
      %vm3759 = vcmp.eq.s32.totalorder %v3755, 1
      %v3760 = vsel %vm3756, %v3662, -inf
      %v3761 = vsel %vm3757, %v3682, -inf
      %v3762 = vsel %vm3758, %v3702, -inf
      %v3763 = vsel %vm3759, %v3722, -inf
      %v3764 = vld [vmem:[%s463] sm:$0x3]
      %v3765 = vsel %vm3731, %v3760, -inf
      %v3766 = vsel %vm3731, %v3761, -inf
      %v3767 = vsel %vm3731, %v3762, -inf
      %v3768 = vsel %vm3731, %v3763, -inf
      %v3769 = vmax.f32 %v3765, %v3766
      %v3770 = vmax.f32 %v3767, %v3768
      %v3771 = vmax.f32 %v3769, %v3770
      %3772 = vmax.xlane.f32.xlu0 %v3771
      %v3773 = vpop.xlane.xlu0 %3772
      %v3774 = vmax.f32 %v3764, %v3773
      %vm3775 = vcmp.eq.f32.partialorder %v3774, -inf
      %v3776 = vsel %vm3775, 0.0, %v3774
      %v3777 = vsub.f32 %v3764, %v3776
      %v3778 = vmul.f32 %v3777, 1.442695
      %v3779 = vpow.pop %v3778
      %3781 = vset.pattern.permute.xlu0 0
      %3782 = vperm.xlu0 %3781, %v3776
      %v3783 = vpop.permute.xlu0 %3782
      %v3785 = vsub.f32 %v3760, %v3783
      %v3786 = vsub.f32 %v3761, %v3783
      %v3787 = vsub.f32 %v3762, %v3783
      %v3788 = vsub.f32 %v3763, %v3783
      %v3789 = vmul.f32 %v3785, 1.442695
      %v3790 = vpow.pop %v3789
      %v3791 = vmul.f32 %v3786, 1.442695
      %v3792 = vpow.pop %v3791
      %v3793 = vmul.f32 %v3787, 1.442695
      %v3794 = vpow.pop %v3793
      %v3795 = vmul.f32 %v3788, 1.442695
      %v3796 = vpow.pop %v3795
      %v3797 = vld [vmem:[%s467] sm:$0x3]
      %v3798 = vmul.f32 %v3779, %v3797
      %v3799 = vsel %vm3731, %v3790, 0.0
      %v3800 = vsel %vm3731, %v3792, 0.0
      %v3801 = vadd.f32 %v3799, %v3800
      %v3802 = vsel %vm3731, %v3794, 0.0
      %v3803 = vadd.f32 %v3801, %v3802
      %v3804 = vsel %vm3731, %v3796, 0.0
      %v3805 = vadd.f32 %v3803, %v3804
      %3806 = vadd.xlane.f32.xlu0 %v3805
      %v3807 = vpop.xlane.xlu0 %3806
      %v3808 = vadd.f32 %v3798, %v3807
      %vm3809 = vcmask 1024
      %3810 = vst.msk [vmem:[%s467] sm:$0x3] %vm3809, %v3808
      %v3811 = vld [vmem:[%s471] sm:$0x3]
      %3813 = vset.pattern.permute.xlu0 0
      %3814 = vperm.xlu0 %3813, %v3779
      %v3815 = vpop.permute.xlu0 %3814
      %v3817 = vmul.f32 %v3815, %v3811
      %3818 = vmatpush.msra.mxu0 %v1772
      %3819 = vmatpush.msra.mxu0 %v1771
      %3820 = vmatpush.msra.mxu0 %v1770
      %3821 = vmatpush.msra.mxu0 %v1769
      %3822 = vmatpush.msra.mxu0 %v1768
      %3823 = vmatpush.msra.mxu0 %v1767
      %3824 = vmatpush.msra.mxu0 %v1766
      %3825 = vmatpush.msra.mxu0 %v1765
      %3826 = vmatpush.msra.mxu0 %v1764
      %3827 = vmatpush.msra.mxu0 %v1763
      %3828 = vmatpush.msra.mxu0 %v1762
      %3829 = vmatpush.msra.mxu0 %v1761
      %3830 = vmatpush.msra.mxu0 %v1760
      %3831 = vmatpush.msra.mxu0 %v1759
      %3832 = vmatpush.msra.mxu0 %v1758
      %3833 = vmatpush.msra.mxu0 %v1757
      %3834 = vmatmul.f32.gmra.mxu0 %v3790
      %v3835 = vpop.f32.mrf.mxu0
      %v3836 = vadd.f32 0.0, %v3835
      %3837 = vdwg.mxu0
      %3838 = vmatpush.msra.mxu0 %v1788
      %3839 = vmatpush.msra.mxu0 %v1787
      %3840 = vmatpush.msra.mxu0 %v1786
      %3841 = vmatpush.msra.mxu0 %v1785
      %3842 = vmatpush.msra.mxu0 %v1784
      %3843 = vmatpush.msra.mxu0 %v1783
      %3844 = vmatpush.msra.mxu0 %v1782
      %3845 = vmatpush.msra.mxu0 %v1781
      %3846 = vmatpush.msra.mxu0 %v1780
      %3847 = vmatpush.msra.mxu0 %v1779
      %3848 = vmatpush.msra.mxu0 %v1778
      %3849 = vmatpush.msra.mxu0 %v1777
      %3850 = vmatpush.msra.mxu0 %v1776
      %3851 = vmatpush.msra.mxu0 %v1775
      %3852 = vmatpush.msra.mxu0 %v1774
      %3853 = vmatpush.msra.mxu0 %v1773
      %3854 = vmatmul.f32.gmra.mxu0 %v3792
      %v3855 = vpop.f32.mrf.mxu0
      %v3856 = vadd.f32 %v3836, %v3855
      %3857 = vdwg.mxu0
      %3858 = vmatpush.msra.mxu0 %v1804
      %3859 = vmatpush.msra.mxu0 %v1803
      %3860 = vmatpush.msra.mxu0 %v1802
      %3861 = vmatpush.msra.mxu0 %v1801
      %3862 = vmatpush.msra.mxu0 %v1800
      %3863 = vmatpush.msra.mxu0 %v1799
      %3864 = vmatpush.msra.mxu0 %v1798
      %3865 = vmatpush.msra.mxu0 %v1797
      %3866 = vmatpush.msra.mxu0 %v1796
      %3867 = vmatpush.msra.mxu0 %v1795
      %3868 = vmatpush.msra.mxu0 %v1794
      %3869 = vmatpush.msra.mxu0 %v1793
      %3870 = vmatpush.msra.mxu0 %v1792
      %3871 = vmatpush.msra.mxu0 %v1791
      %3872 = vmatpush.msra.mxu0 %v1790
      %3873 = vmatpush.msra.mxu0 %v1789
      %3874 = vmatmul.f32.gmra.mxu0 %v3794
      %v3875 = vpop.f32.mrf.mxu0
      %v3876 = vadd.f32 %v3856, %v3875
      %3877 = vdwg.mxu0
      %3878 = vmatpush.msra.mxu0 %v1820
      %3879 = vmatpush.msra.mxu0 %v1819
      %3880 = vmatpush.msra.mxu0 %v1818
      %3881 = vmatpush.msra.mxu0 %v1817
      %3882 = vmatpush.msra.mxu0 %v1816
      %3883 = vmatpush.msra.mxu0 %v1815
      %3884 = vmatpush.msra.mxu0 %v1814
      %3885 = vmatpush.msra.mxu0 %v1813
      %3886 = vmatpush.msra.mxu0 %v1812
      %3887 = vmatpush.msra.mxu0 %v1811
      %3888 = vmatpush.msra.mxu0 %v1810
      %3889 = vmatpush.msra.mxu0 %v1809
      %3890 = vmatpush.msra.mxu0 %v1808
      %3891 = vmatpush.msra.mxu0 %v1807
      %3892 = vmatpush.msra.mxu0 %v1806
      %3893 = vmatpush.msra.mxu0 %v1805
      %3894 = vmatmul.f32.gmra.mxu0 %v3796
      %v3895 = vpop.f32.mrf.mxu0
      %v3896 = vadd.f32 %v3876, %v3895
      %3897 = vdwg.mxu0
      %v3898 = vadd.f32 %v3817, %v3896
      %3899 = vst [vmem:[%s471] sm:$0x3] %v3898
      %3900 = vst.msk [vmem:[%s463] sm:$0x3] %vm3809, %v3774
      %s3901 = smul.u32 %s26, 3
      %s3902 = sadd.s32 %s3901, %s27
      %s3903 = smul.u32 4, %s3902
      %p3904 = scmp.lt.s32.totalorder %s3903, 23
      %s3905 = scalar_select %p3904, %s3903, 23
      %s3906 = smul.addr %s3905, 2
      %s3907 = scalar_lea.vmem %s7, %s3906
      %p3908 = scmp.lt.s32.totalorder %s26, 1
      %s3909 = scalar_select %p3908, %s26, 1
      %s3910 = smul.addr %s3909, 2
      %s3911 = scalar_lea.vmem %s8, %s3910
      %p3912 = scmp.lt.s32.totalorder %s26, 1
      %s3913 = scalar_select %p3912, %s26, 1
      %s3914 = smul.addr %s3913, 2
      %s3915 = scalar_lea.vmem %s9, %s3914
      %p3916 = scmp.lt.s32.totalorder %s26, 1
      %s3917 = scalar_select %p3916, %s26, 1
      %s3918 = smul.addr %s3917, 2
      %s3919 = scalar_lea.vmem %s10, %s3918
      // Predicated region
      $region53: #{clam_mb_forward.1} parent=47 // pred_check
        %p3920 = pneg %p216
      $region54: #{clam_mb_forward.1} parent=47 // pred_check_branch
        %3922 = sbr.rel (%p3920) target = $region56
      $region55: #{clam_mb_forward.1} parent=47 // pred_region
        %s3923 = smul.u32 %s26, 3
        %s3924 = sadd.s32 %s3923, %s27
        %s3925 = smul.u32 4, %s3924
      $region56: #{clam_mb_forward.1} parent=47 // pred_fallthru
        _
      // Predicated region
      $region57: #{clam_mb_forward.1} parent=47 // pred_check
        %p3926 = pneg %p242
      $region58: #{clam_mb_forward.1} parent=47 // pred_check_branch
        %3928 = sbr.rel (%p3926) target = $region60
      $region59: #{clam_mb_forward.1} parent=47 // pred_region
        _
      $region60: #{clam_mb_forward.1} parent=47 // pred_fallthru
        _
      // Predicated region
      $region61: #{clam_mb_forward.1} parent=47 // pred_check
        %p3929 = pneg %p268
      $region62: #{clam_mb_forward.1} parent=47 // pred_check_branch
        %3931 = sbr.rel (%p3929) target = $region64
      $region63: #{clam_mb_forward.1} parent=47 // pred_region
        _
      $region64: #{clam_mb_forward.1} parent=47 // pred_fallthru
        _
      // Predicated region
      $region65: #{clam_mb_forward.1} parent=47 // pred_check
        %p3932 = pneg %p294
      $region66: #{clam_mb_forward.1} parent=47 // pred_check_branch
        %3934 = sbr.rel (%p3932) target = $region68
      $region67: #{clam_mb_forward.1} parent=47 // pred_region
        _
      $region68: #{clam_mb_forward.1} parent=47 // pred_fallthru
        _
    $region48: #{clam_mb_forward.1} parent=5 // pred_fallthru
      _
    %p3935 = scmp.le.s32.totalorder 2, %s17
    // Predicated region
    $region69: #{clam_mb_forward.1} parent=5 // pred_check
      %p3936 = pneg %p3935
    $region70: #{clam_mb_forward.1} parent=5 // pred_check_branch
      %3938 = sbr.rel (%p3936) target = $region72
    $region71: #{clam_mb_forward.1} parent=5 // pred_region
      %s3939 = ssub.s32 %s17, 2
      // Predicated region
      $region73: #{clam_mb_forward.1} parent=71 // pred_check
        %p3940 = pneg %p222
      $region74: #{clam_mb_forward.1} parent=71 // pred_check_branch
        %3942 = sbr.rel (%p3940) target = $region76
      $region75: #{clam_mb_forward.1} parent=71 // pred_region
        %s3943 = smul.u32 %s28, 3
        %s3944 = sadd.s32 %s3943, %s29
        %s3945 = smul.u32 4, %s3944
        %p3946 = scmp.lt.s32.totalorder %s3945, 23
        %s3947 = scalar_select %p3946, %s3945, 23
        %s3948 = smul.addr %s3947, 2
        %s3949 = scalar_lea.vmem %s7, %s3948
      $region76: #{clam_mb_forward.1} parent=71 // pred_fallthru
        _
      // Predicated region
      $region77: #{clam_mb_forward.1} parent=71 // pred_check
        %p3950 = pneg %p248
      $region78: #{clam_mb_forward.1} parent=71 // pred_check_branch
        %3952 = sbr.rel (%p3950) target = $region80
      $region79: #{clam_mb_forward.1} parent=71 // pred_region
        %p3953 = scmp.lt.s32.totalorder %s28, 1
        %s3954 = scalar_select %p3953, %s28, 1
        %s3955 = smul.addr %s3954, 2
        %s3956 = scalar_lea.vmem %s8, %s3955
      $region80: #{clam_mb_forward.1} parent=71 // pred_fallthru
        _
      // Predicated region
      $region81: #{clam_mb_forward.1} parent=71 // pred_check
        %p3957 = pneg %p274
      $region82: #{clam_mb_forward.1} parent=71 // pred_check_branch
        %3959 = sbr.rel (%p3957) target = $region84
      $region83: #{clam_mb_forward.1} parent=71 // pred_region
        %p3960 = scmp.lt.s32.totalorder %s28, 1
        %s3961 = scalar_select %p3960, %s28, 1
        %s3962 = smul.addr %s3961, 2
        %s3963 = scalar_lea.vmem %s9, %s3962
      $region84: #{clam_mb_forward.1} parent=71 // pred_fallthru
        _
      // Predicated region
      $region85: #{clam_mb_forward.1} parent=71 // pred_check
        %p3964 = pneg %p300
      $region86: #{clam_mb_forward.1} parent=71 // pred_check_branch
        %3966 = sbr.rel (%p3964) target = $region88
      $region87: #{clam_mb_forward.1} parent=71 // pred_region
        %p3967 = scmp.lt.s32.totalorder %s28, 1
        %s3968 = scalar_select %p3967, %s28, 1
        %s3969 = smul.addr %s3968, 2
        %s3970 = scalar_lea.vmem %s10, %s3969
      $region88: #{clam_mb_forward.1} parent=71 // pred_fallthru
        _
    $region72: #{clam_mb_forward.1} parent=5 // pred_fallthru
      _
  $region6: #{clam_mb_forward.1} parent=0 // loop_footer
    %s21 = sadd.s32 1, %s17
  $region7: #{clam_mb_forward.1} parent=0 // loop_footer_branch
    %16 = sbr.rel target = $region3
  $region8: #{clam_mb_forward.1} parent=0 // loop_exit
    _

</llo_original>
